<compile_context>
chip_gen: v7x
topology: tpu7x:2x2x1
jax: 0.10.0
libtpu: 0.0.40
codegen_flags: <defaults>
</compile_context>

<pallas_src>
import math
import functools

import jax
import jax.numpy as jnp
from jax.experimental import pallas as pl
from jax.experimental.pallas import tpu as pltpu

BN_EPS = 1e-5
LANE = 128


def _gelu_exact(v):
    # torch.nn.GELU(approximate='none')
    return 0.5 * v * (1.0 + jax.lax.erf(v * (1.0 / math.sqrt(2.0))))


def _channel_moments(v, count):
    """Per-channel (last axis) mean / biased variance over all leading axes.

    Sequential single-axis sums on the native layout (major axes first, then
    one cross-sublane reduce) — avoids any (N*H*W, C) reshape/relayout.
    """
    s = v
    while s.ndim > 2:
        s = jnp.sum(s, axis=0)
    s = jnp.sum(s, axis=0, keepdims=True)            # (1, C)
    mean = s * (1.0 / count)
    diff = v - mean
    sq = diff * diff
    while sq.ndim > 2:
        sq = jnp.sum(sq, axis=0)
    sq = jnp.sum(sq, axis=0, keepdims=True)          # (1, C)
    var = sq * (1.0 / count)
    return mean, var


def _convmixer_step_kernel(ksize,
                           x_ref, dww_ref, dwb_ref, g1_ref, b1_ref,
                           pww_ref, pwb_ref, g2_ref, b2_ref,
                           o_ref, pad_ref):
    d = pl.program_id(0)
    n_steps = pl.num_programs(0)
    N, H, W, C = x_ref.shape
    p = ksize // 2
    Hp, Wp = H + 2 * p, W + 2 * p
    count = float(N * H * W)

    # One-time init: zero only the halo border and seed the carry (= scratch
    # interior) with the input activation.  Scratch persists across the grid.
    @pl.when(d == 0)
    def _init():
        if p > 0:
            zrow = jnp.zeros((N, p, Wp, C), jnp.float32)
            pad_ref[:, 0:p, :, :] = zrow
            pad_ref[:, p + H:Hp, :, :] = zrow
            zcol = jnp.zeros((N, Hp, p, C), jnp.float32)
            pad_ref[:, :, 0:p, :] = zcol
            pad_ref[:, :, p + W:Wp, :] = zcol
        pad_ref[:, p:p + H, p:p + W, :] = x_ref[...]

    # Per-depth parameters (tiny, streamed in by the BlockSpecs).
    dww = dww_ref[...][0]          # (k, k, C)
    dwb = dwb_ref[...][0, 0]       # (C,)
    g1 = g1_ref[...][0, 0]
    b1 = b1_ref[...][0, 0]
    pww = pww_ref[...][0]          # (C, C)   (bf16 for the MXU path)
    pwb = pwb_ref[...][0, 0]
    g2 = g2_ref[...][0, 0]
    b2 = b2_ref[...][0, 0]

    # ---- depthwise conv (groups=dim, pad=k//2): taps straight from the ref ----
    acc = None
    x_center = None
    for dy in range(ksize):
        for dx in range(ksize):
            tap = pad_ref[:, dy:dy + H, dx:dx + W, :]        # (N, H, W, C)
            if dy == p and dx == p:
                x_center = tap                               # current activation
            term = tap * dww[dy, dx]
            acc = term if acc is None else acc + term
    acc = acc + dwb
    y = _gelu_exact(acc)

    # ---- BatchNorm2d (batch statistics) on native NHWC + residual ----
    mu1, var1 = _channel_moments(y, count)
    y = (y - mu1) * jax.lax.rsqrt(var1 + BN_EPS) * g1 + b1
    r = y + x_center

    # ---- pointwise 1x1 conv == channel matmul (MXU, bf16 in / f32 acc) ----
    r2 = r.reshape(N * H * W, C).astype(pww.dtype)
    z = jnp.dot(r2, pww, preferred_element_type=jnp.float32) + pwb
    z = _gelu_exact(z)

    # ---- BatchNorm2d (batch statistics) ----
    mu2, var2 = _channel_moments(z, count)
    z = (z - mu2) * jax.lax.rsqrt(var2 + BN_EPS) * g2 + b2
    z = z.reshape(N, H, W, C)

    @pl.when(d < n_steps - 1)
    def _carry():
        pad_ref[:, p:p + H, p:p + W, :] = z     # carry activation to next step

    @pl.when(d == n_steps - 1)
    def _emit():
        o_ref[...] = z

    # TODO(synk): v7x megacore variant (spatial "parallel" split across the 2
    # TensorCores with a two-phase cross-core BN reduction via CMEM) is not
    # implemented; this kernel runs on a single TensorCore.


@functools.partial(jax.jit, static_argnames=("kernel_size", "depth", "matmul_dtype"))
def convmixer_block(x_nchw, params, *, kernel_size, depth,
                    matmul_dtype=jnp.bfloat16):
    """x_nchw: (N, C, H, W) float32 -> (N, C, H, W) float32."""
    N, C, H, W = x_nchw.shape
    p = kernel_size // 2
    C_pad = max(LANE, ((C + LANE - 1) // LANE) * LANE)   # lane-dense channels
    dC = C_pad - C

    def padc(a, const=0.0):                              # pad channel (last) axis
        if dC == 0:
            return a
        cfg = [(0, 0)] * (a.ndim - 1) + [(0, dC)]
        return jnp.pad(a, cfg, constant_values=const)

    # NCHW -> NHWC (channel = lane / minor dim) with zero-padded channels.
    x = padc(jnp.transpose(x_nchw, (0, 2, 3, 1)).astype(jnp.float32))

    dw_w = padc(params['dw_w'])                          # (depth, k, k, Cp)
    dw_b = padc(params['dw_b'])[:, None, :]              # (depth, 1, Cp)
    bn1_g = padc(params['bn1_g'], 1.0)[:, None, :]
    bn1_b = padc(params['bn1_b'])[:, None, :]
    pw_w = params['pw_w']                                # (depth, C_in, C_out)
    if dC:
        pw_w = jnp.pad(pw_w, ((0, 0), (0, dC), (0, dC)))
    pw_w = pw_w.astype(matmul_dtype)                     # bf16 operands for the MXU
    pw_b = padc(params['pw_b'])[:, None, :]
    bn2_g = padc(params['bn2_g'], 1.0)[:, None, :]
    bn2_b = padc(params['bn2_b'])[:, None, :]

    vec_spec = pl.BlockSpec((1, 1, C_pad), lambda d: (d, 0, 0))
    act_spec = pl.BlockSpec((N, H, W, C_pad), lambda d: (0, 0, 0, 0))

    grid_spec = pltpu.PrefetchScalarGridSpec(
        num_scalar_prefetch=0,
        grid=(depth,),
        in_specs=[
            act_spec,                                                     # x
            pl.BlockSpec((1, kernel_size, kernel_size, C_pad),
                         lambda d: (d, 0, 0, 0)),                         # dw_w
            vec_spec, vec_spec, vec_spec,                                 # dw_b, bn1_g, bn1_b
            pl.BlockSpec((1, C_pad, C_pad), lambda d: (d, 0, 0)),         # pw_w
            vec_spec, vec_spec, vec_spec,                                 # pw_b, bn2_g, bn2_b
        ],
        out_specs=act_spec,
        scratch_shapes=[
            pltpu.VMEM((N, H + 2 * p, W + 2 * p, C_pad), jnp.float32),    # padded carry
        ],
    )

    inputs = (x, dw_w, dw_b, bn1_g, bn1_b, pw_w, pw_b, bn2_g, bn2_b)
    nhwc = N * H * W * C_pad
    cost = pl.CostEstimate(
        flops=depth * (2 * nhwc * C_pad                                   # 1x1 conv
                       + 2 * nhwc * kernel_size * kernel_size             # depthwise
                       + 30 * nhwc),                                      # GELU/BN/residual
        transcendentals=depth * 2 * nhwc,
        bytes_accessed=int(sum(a.size * a.dtype.itemsize for a in inputs)
                           + x.size * x.dtype.itemsize),
    )

    kern = functools.partial(_convmixer_step_kernel, kernel_size)
    out = pl.pallas_call(
        kern,
        out_shape=jax.ShapeDtypeStruct((N, H, W, C_pad), jnp.float32),
        grid_spec=grid_spec,
        compiler_params=pltpu.CompilerParams(
            dimension_semantics=("arbitrary",),        # depth carries the activation
            vmem_limit_bytes=64 * 1024 * 1024),
        input_output_aliases={0: 0},                   # activation in/out share HBM
        cost_estimate=cost,
    )(*inputs)

    out = out[..., :C] if dC else out
    return jnp.transpose(out, (0, 3, 1, 2))            # back to NCHW


def convmixer_block_ref(x_nchw, params, kernel_size, depth):
    """Pure-JAX (XLA) f32 reference mirroring the PyTorch module."""
    p = kernel_size // 2
    x = x_nchw.astype(jnp.float32)
    N, C, H, W = x.shape
    hp = jax.lax.Precision.HIGHEST
    for d in range(depth):
        w = jnp.transpose(params['dw_w'][d], (2, 0, 1))[:, None, :, :]   # (C,1,k,k)
        y = jax.lax.conv_general_dilated(
            x, w, window_strides=(1, 1), padding=((p, p), (p, p)),
            dimension_numbers=('NCHW', 'OIHW', 'NCHW'),
            feature_group_count=C, precision=hp)
        y = y + params['dw_b'][d][None, :, None, None]
        y = _gelu_exact(y)
        mu = jnp.mean(y, axis=(0, 2, 3), keepdims=True)
        var = jnp.mean((y - mu) ** 2, axis=(0, 2, 3), keepdims=True)
        y = ((y - mu) * jax.lax.rsqrt(var + BN_EPS)
             * params['bn1_g'][d][None, :, None, None]
             + params['bn1_b'][d][None, :, None, None])
        r = y + x
        z = jnp.einsum('nihw,io->nohw', r, params['pw_w'][d], precision=hp)
        z = z + params['pw_b'][d][None, :, None, None]
        z = _gelu_exact(z)
        mu2 = jnp.mean(z, axis=(0, 2, 3), keepdims=True)
        var2 = jnp.mean((z - mu2) ** 2, axis=(0, 2, 3), keepdims=True)
        z = ((z - mu2) * jax.lax.rsqrt(var2 + BN_EPS)
             * params['bn2_g'][d][None, :, None, None]
             + params['bn2_b'][d][None, :, None, None])
        x = z
    return x


def init_params(key, dim, kernel_size, depth):
    """Deterministic synthetic parameters with PyTorch-like initialization."""
    ks = jax.random.split(key, 8)
    # depthwise conv: torch weight (dim, 1, k, k), fan_in = k*k (groups=dim)
    bnd_dw = 1.0 / math.sqrt(kernel_size * kernel_size)
    dw_w = jax.random.uniform(ks[0], (depth, dim, kernel_size, kernel_size),
                              jnp.float32, -bnd_dw, bnd_dw)
    dw_b = jax.random.uniform(ks[1], (depth, dim), jnp.float32, -bnd_dw, bnd_dw)
    # pointwise conv: torch weight (dim, dim, 1, 1), fan_in = dim
    bnd_pw = 1.0 / math.sqrt(dim)
    pw_w = jax.random.uniform(ks[2], (depth, dim, dim), jnp.float32,
                              -bnd_pw, bnd_pw)          # (depth, out, in)
    pw_b = jax.random.uniform(ks[3], (depth, dim), jnp.float32, -bnd_pw, bnd_pw)
    # BatchNorm affine params (perturbed so the op is non-trivial)
    bn1_g = 1.0 + 0.1 * jax.random.normal(ks[4], (depth, dim), jnp.float32)
    bn1_b = 0.1 * jax.random.normal(ks[5], (depth, dim), jnp.float32)
    bn2_g = 1.0 + 0.1 * jax.random.normal(ks[6], (depth, dim), jnp.float32)
    bn2_b = 0.1 * jax.random.normal(ks[7], (depth, dim), jnp.float32)
    return {
        # kernel-friendly layouts (channel last / matmul-ready)
        'dw_w': jnp.transpose(dw_w, (0, 2, 3, 1)),   # (depth, k, k, C)
        'dw_b': dw_b,                                # (depth, C)
        'pw_w': jnp.transpose(pw_w, (0, 2, 1)),      # (depth, C_in, C_out)
        'pw_b': pw_b,                                # (depth, C)
        'bn1_g': bn1_g, 'bn1_b': bn1_b,
        'bn2_g': bn2_g, 'bn2_b': bn2_b,
    }


if __name__ == "__main__":
    key = jax.random.PRNGKey(0)
    kx, kp = jax.random.split(key)

    N, C, H, W = 2, 4, 16, 16          # batch=2, dim=4, spatial=16
    kernel_size, depth = 3, 2

    x = jax.random.normal(kx, (N, C, H, W), jnp.float32)
    params = init_params(kp, C, kernel_size, depth)

    out = jax.block_until_ready(
        convmixer_block(x, params, kernel_size=kernel_size, depth=depth))
    assert out.shape == (N, C, H, W), out.shape
    assert bool(jnp.all(jnp.isfinite(out)))

    # Pure-JAX f32 reference check.  The kernel uses bf16 MXU operands with
    # f32 accumulation, which introduces a small bounded drift vs exact f32.
    ref = convmixer_block_ref(x, params, kernel_size, depth)
    rel = float(jnp.linalg.norm(out - ref) / (jnp.linalg.norm(ref) + 1e-12))
    assert rel < 5e-2, f"relative L2 error too large: {rel}"

    # TODO(synk): BatchNorm running-stat (running_mean/var) updates — a
    # training-mode side effect — are not modeled; they do not affect the
    # forward output.
    print("KERNEL_OK")
</pallas_src>

<mosaic_0001>
module attributes {stable_mosaic.version = 11 : i64} {
  func.func @_convmixer_step_kernel(%arg0: i32, %arg1: memref<2x16x16x128xf32, #tpu.memory_space<vmem>>, %arg2: memref<1x3x3x128xf32, #tpu.memory_space<vmem>>, %arg3: memref<1x1x128xf32, #tpu.memory_space<vmem>>, %arg4: memref<1x1x128xf32, #tpu.memory_space<vmem>>, %arg5: memref<1x1x128xf32, #tpu.memory_space<vmem>>, %arg6: memref<1x128x128xbf16, #tpu.memory_space<vmem>>, %arg7: memref<1x1x128xf32, #tpu.memory_space<vmem>>, %arg8: memref<1x1x128xf32, #tpu.memory_space<vmem>>, %arg9: memref<1x1x128xf32, #tpu.memory_space<vmem>>, %arg10: memref<2x16x16x128xf32, #tpu.memory_space<vmem>>, %arg11: memref<2x18x18x128xf32, #tpu.memory_space<vmem>>) attributes {dimension_semantics = [#tpu.dimension_semantics<arbitrary>], iteration_bounds = array<i64: 2>, scalar_prefetch = 0 : i64, scratch_operands = 1 : i64, tpu.core_type = #tpu.core_type<tc>, window_params = [{pipeline_mode = #tpu.pipeline_mode<synchronous>, transform_indices = @transform_0, window_bounds = array<i64: 2, 16, 16, 128>}, {transform_indices = @transform_1, window_bounds = array<i64: 1, 3, 3, 128>}, {transform_indices = @transform_2, window_bounds = array<i64: 1, 1, 128>}, {transform_indices = @transform_3, window_bounds = array<i64: 1, 1, 128>}, {transform_indices = @transform_4, window_bounds = array<i64: 1, 1, 128>}, {transform_indices = @transform_5, window_bounds = array<i64: 1, 128, 128>}, {transform_indices = @transform_6, window_bounds = array<i64: 1, 1, 128>}, {transform_indices = @transform_7, window_bounds = array<i64: 1, 1, 128>}, {transform_indices = @transform_8, window_bounds = array<i64: 1, 1, 128>}, {pipeline_mode = #tpu.pipeline_mode<synchronous>, transform_indices = @transform_9, window_bounds = array<i64: 2, 16, 16, 128>}]} {
    %c0_i32 = arith.constant 0 : i32
    %0 = arith.cmpi eq, %arg0, %c0_i32 : i32
    %1 = arith.extui %0 : i1 to i32
    %c0_i32_0 = arith.constant 0 : i32
    %2 = arith.cmpi ne, %1, %c0_i32_0 : i32
    scf.if %2 {
      %cst_82 = arith.constant 0.000000e+00 : f32
      %169 = vector.broadcast %cst_82 : f32 to vector<2x1x18x128xf32>
      %c0_83 = arith.constant 0 : index
      %c0_84 = arith.constant 0 : index
      %c0_85 = arith.constant 0 : index
      %c0_86 = arith.constant 0 : index
      %170 = vector.load %arg11[%c0_83, %c0_84, %c0_85, %c0_86] : memref<2x18x18x128xf32, #tpu.memory_space<vmem>>, vector<2x1x18x128xf32>
      tpu.vector_store %arg11[%c0_83, %c0_84, %c0_85, %c0_86], %169 {strides = array<i32>} : memref<2x18x18x128xf32, #tpu.memory_space<vmem>>, vector<2x1x18x128xf32>,
      %c0_87 = arith.constant 0 : index
      %c17 = arith.constant 17 : index
      %c0_88 = arith.constant 0 : index
      %c0_89 = arith.constant 0 : index
      %171 = vector.load %arg11[%c0_87, %c17, %c0_88, %c0_89] : memref<2x18x18x128xf32, #tpu.memory_space<vmem>>, vector<2x1x18x128xf32>
      tpu.vector_store %arg11[%c0_87, %c17, %c0_88, %c0_89], %169 {strides = array<i32>} : memref<2x18x18x128xf32, #tpu.memory_space<vmem>>, vector<2x1x18x128xf32>,
      %cst_90 = arith.constant 0.000000e+00 : f32
      %172 = vector.broadcast %cst_90 : f32 to vector<2x18x1x128xf32>
      %c0_91 = arith.constant 0 : index
      %c0_92 = arith.constant 0 : index
      %c0_93 = arith.constant 0 : index
      %c0_94 = arith.constant 0 : index
      %173 = vector.load %arg11[%c0_91, %c0_92, %c0_93, %c0_94] : memref<2x18x18x128xf32, #tpu.memory_space<vmem>>, vector<2x18x1x128xf32>
      tpu.vector_store %arg11[%c0_91, %c0_92, %c0_93, %c0_94], %172 {strides = array<i32>} : memref<2x18x18x128xf32, #tpu.memory_space<vmem>>, vector<2x18x1x128xf32>,
      %c0_95 = arith.constant 0 : index
      %c0_96 = arith.constant 0 : index
      %c17_97 = arith.constant 17 : index
      %c0_98 = arith.constant 0 : index
      %174 = vector.load %arg11[%c0_95, %c0_96, %c17_97, %c0_98] : memref<2x18x18x128xf32, #tpu.memory_space<vmem>>, vector<2x18x1x128xf32>
      tpu.vector_store %arg11[%c0_95, %c0_96, %c17_97, %c0_98], %172 {strides = array<i32>} : memref<2x18x18x128xf32, #tpu.memory_space<vmem>>, vector<2x18x1x128xf32>,
      %c0_99 = arith.constant 0 : index
      %c0_100 = arith.constant 0 : index
      %c0_101 = arith.constant 0 : index
      %c0_102 = arith.constant 0 : index
      %175 = vector.load %arg1[%c0_99, %c0_100, %c0_101, %c0_102] : memref<2x16x16x128xf32, #tpu.memory_space<vmem>>, vector<2x16x16x128xf32>
      %c0_103 = arith.constant 0 : index
      %c1_104 = arith.constant 1 : index
      %c1_105 = arith.constant 1 : index
      %c0_106 = arith.constant 0 : index
      %176 = vector.load %arg11[%c0_103, %c1_104, %c1_105, %c0_106] : memref<2x18x18x128xf32, #tpu.memory_space<vmem>>, vector<2x16x16x128xf32>
      tpu.vector_store %arg11[%c0_103, %c1_104, %c1_105, %c0_106], %175 {strides = array<i32>} : memref<2x18x18x128xf32, #tpu.memory_space<vmem>>, vector<2x16x16x128xf32>,
    } else {
    }
    %c0 = arith.constant 0 : index
    %c0_1 = arith.constant 0 : index
    %c0_2 = arith.constant 0 : index
    %c0_3 = arith.constant 0 : index
    %3 = vector.load %arg2[%c0, %c0_1, %c0_2, %c0_3] : memref<1x3x3x128xf32, #tpu.memory_space<vmem>>, vector<1x3x3x128xf32>
    %4 = vector.shape_cast %3 : vector<1x3x3x128xf32> to vector<3x3x128xf32>
    %c0_4 = arith.constant 0 : index
    %c0_5 = arith.constant 0 : index
    %c0_6 = arith.constant 0 : index
    %5 = vector.load %arg3[%c0_4, %c0_5, %c0_6] : memref<1x1x128xf32, #tpu.memory_space<vmem>>, vector<1x1x128xf32>
    %6 = vector.shape_cast %5 : vector<1x1x128xf32> to vector<128xf32>
    %c0_7 = arith.constant 0 : index
    %c0_8 = arith.constant 0 : index
    %c0_9 = arith.constant 0 : index
    %7 = vector.load %arg4[%c0_7, %c0_8, %c0_9] : memref<1x1x128xf32, #tpu.memory_space<vmem>>, vector<1x1x128xf32>
    %8 = vector.shape_cast %7 : vector<1x1x128xf32> to vector<128xf32>
    %c0_10 = arith.constant 0 : index
    %c0_11 = arith.constant 0 : index
    %c0_12 = arith.constant 0 : index
    %9 = vector.load %arg5[%c0_10, %c0_11, %c0_12] : memref<1x1x128xf32, #tpu.memory_space<vmem>>, vector<1x1x128xf32>
    %10 = vector.shape_cast %9 : vector<1x1x128xf32> to vector<128xf32>
    %c0_13 = arith.constant 0 : index
    %c0_14 = arith.constant 0 : index
    %c0_15 = arith.constant 0 : index
    %11 = vector.load %arg6[%c0_13, %c0_14, %c0_15] : memref<1x128x128xbf16, #tpu.memory_space<vmem>>, vector<1x128x128xbf16>
    %12 = vector.shape_cast %11 : vector<1x128x128xbf16> to vector<128x128xbf16>
    %c0_16 = arith.constant 0 : index
    %c0_17 = arith.constant 0 : index
    %c0_18 = arith.constant 0 : index
    %13 = vector.load %arg7[%c0_16, %c0_17, %c0_18] : memref<1x1x128xf32, #tpu.memory_space<vmem>>, vector<1x1x128xf32>
    %14 = vector.shape_cast %13 : vector<1x1x128xf32> to vector<128xf32>
    %c0_19 = arith.constant 0 : index
    %c0_20 = arith.constant 0 : index
    %c0_21 = arith.constant 0 : index
    %15 = vector.load %arg8[%c0_19, %c0_20, %c0_21] : memref<1x1x128xf32, #tpu.memory_space<vmem>>, vector<1x1x128xf32>
    %16 = vector.shape_cast %15 : vector<1x1x128xf32> to vector<128xf32>
    %c0_22 = arith.constant 0 : index
    %c0_23 = arith.constant 0 : index
    %c0_24 = arith.constant 0 : index
    %17 = vector.load %arg9[%c0_22, %c0_23, %c0_24] : memref<1x1x128xf32, #tpu.memory_space<vmem>>, vector<1x1x128xf32>
    %18 = vector.shape_cast %17 : vector<1x1x128xf32> to vector<128xf32>
    %c0_25 = arith.constant 0 : index
    %c0_26 = arith.constant 0 : index
    %c0_27 = arith.constant 0 : index
    %c0_28 = arith.constant 0 : index
    %19 = vector.load %arg11[%c0_25, %c0_26, %c0_27, %c0_28] : memref<2x18x18x128xf32, #tpu.memory_space<vmem>>, vector<2x16x16x128xf32>
    %20 = vector.extract_strided_slice %4 {offsets = [0, 0, 0], sizes = [1, 1, 128], strides = [1, 1, 1]} : vector<3x3x128xf32> to vector<1x1x128xf32>
    %21 = vector.shape_cast %20 : vector<1x1x128xf32> to vector<128xf32>
    %22 = vector.shape_cast %21 : vector<128xf32> to vector<1x1x1x128xf32>
    %23 = vector.broadcast %22 : vector<1x1x1x128xf32> to vector<2x16x16x128xf32>
    %24 = arith.mulf %19, %23 : vector<2x16x16x128xf32>
    %c0_29 = arith.constant 0 : index
    %c0_30 = arith.constant 0 : index
    %c1 = arith.constant 1 : index
    %c0_31 = arith.constant 0 : index
    %25 = vector.load %arg11[%c0_29, %c0_30, %c1, %c0_31] : memref<2x18x18x128xf32, #tpu.memory_space<vmem>>, vector<2x16x16x128xf32>
    %26 = vector.extract_strided_slice %4 {offsets = [0, 1, 0], sizes = [1, 1, 128], strides = [1, 1, 1]} : vector<3x3x128xf32> to vector<1x1x128xf32>
    %27 = vector.shape_cast %26 : vector<1x1x128xf32> to vector<128xf32>
    %28 = vector.shape_cast %27 : vector<128xf32> to vector<1x1x1x128xf32>
    %29 = vector.broadcast %28 : vector<1x1x1x128xf32> to vector<2x16x16x128xf32>
    %30 = arith.mulf %25, %29 : vector<2x16x16x128xf32>
    %31 = arith.addf %24, %30 : vector<2x16x16x128xf32>
    %c0_32 = arith.constant 0 : index
    %c0_33 = arith.constant 0 : index
    %c2 = arith.constant 2 : index
    %c0_34 = arith.constant 0 : index
    %32 = vector.load %arg11[%c0_32, %c0_33, %c2, %c0_34] : memref<2x18x18x128xf32, #tpu.memory_space<vmem>>, vector<2x16x16x128xf32>
    %33 = vector.extract_strided_slice %4 {offsets = [0, 2, 0], sizes = [1, 1, 128], strides = [1, 1, 1]} : vector<3x3x128xf32> to vector<1x1x128xf32>
    %34 = vector.shape_cast %33 : vector<1x1x128xf32> to vector<128xf32>
    %35 = vector.shape_cast %34 : vector<128xf32> to vector<1x1x1x128xf32>
    %36 = vector.broadcast %35 : vector<1x1x1x128xf32> to vector<2x16x16x128xf32>
    %37 = arith.mulf %32, %36 : vector<2x16x16x128xf32>
    %38 = arith.addf %31, %37 : vector<2x16x16x128xf32>
    %c0_35 = arith.constant 0 : index
    %c1_36 = arith.constant 1 : index
    %c0_37 = arith.constant 0 : index
    %c0_38 = arith.constant 0 : index
    %39 = vector.load %arg11[%c0_35, %c1_36, %c0_37, %c0_38] : memref<2x18x18x128xf32, #tpu.memory_space<vmem>>, vector<2x16x16x128xf32>
    %40 = vector.extract_strided_slice %4 {offsets = [1, 0, 0], sizes = [1, 1, 128], strides = [1, 1, 1]} : vector<3x3x128xf32> to vector<1x1x128xf32>
    %41 = vector.shape_cast %40 : vector<1x1x128xf32> to vector<128xf32>
    %42 = vector.shape_cast %41 : vector<128xf32> to vector<1x1x1x128xf32>
    %43 = vector.broadcast %42 : vector<1x1x1x128xf32> to vector<2x16x16x128xf32>
    %44 = arith.mulf %39, %43 : vector<2x16x16x128xf32>
    %45 = arith.addf %38, %44 : vector<2x16x16x128xf32>
    %c0_39 = arith.constant 0 : index
    %c1_40 = arith.constant 1 : index
    %c1_41 = arith.constant 1 : index
    %c0_42 = arith.constant 0 : index
    %46 = vector.load %arg11[%c0_39, %c1_40, %c1_41, %c0_42] : memref<2x18x18x128xf32, #tpu.memory_space<vmem>>, vector<2x16x16x128xf32>
    %47 = vector.extract_strided_slice %4 {offsets = [1, 1, 0], sizes = [1, 1, 128], strides = [1, 1, 1]} : vector<3x3x128xf32> to vector<1x1x128xf32>
    %48 = vector.shape_cast %47 : vector<1x1x128xf32> to vector<128xf32>
    %49 = vector.shape_cast %48 : vector<128xf32> to vector<1x1x1x128xf32>
    %50 = vector.broadcast %49 : vector<1x1x1x128xf32> to vector<2x16x16x128xf32>
    %51 = arith.mulf %46, %50 : vector<2x16x16x128xf32>
    %52 = arith.addf %45, %51 : vector<2x16x16x128xf32>
    %c0_43 = arith.constant 0 : index
    %c1_44 = arith.constant 1 : index
    %c2_45 = arith.constant 2 : index
    %c0_46 = arith.constant 0 : index
    %53 = vector.load %arg11[%c0_43, %c1_44, %c2_45, %c0_46] : memref<2x18x18x128xf32, #tpu.memory_space<vmem>>, vector<2x16x16x128xf32>
    %54 = vector.extract_strided_slice %4 {offsets = [1, 2, 0], sizes = [1, 1, 128], strides = [1, 1, 1]} : vector<3x3x128xf32> to vector<1x1x128xf32>
    %55 = vector.shape_cast %54 : vector<1x1x128xf32> to vector<128xf32>
    %56 = vector.shape_cast %55 : vector<128xf32> to vector<1x1x1x128xf32>
    %57 = vector.broadcast %56 : vector<1x1x1x128xf32> to vector<2x16x16x128xf32>
    %58 = arith.mulf %53, %57 : vector<2x16x16x128xf32>
    %59 = arith.addf %52, %58 : vector<2x16x16x128xf32>
    %c0_47 = arith.constant 0 : index
    %c2_48 = arith.constant 2 : index
    %c0_49 = arith.constant 0 : index
    %c0_50 = arith.constant 0 : index
    %60 = vector.load %arg11[%c0_47, %c2_48, %c0_49, %c0_50] : memref<2x18x18x128xf32, #tpu.memory_space<vmem>>, vector<2x16x16x128xf32>
    %61 = vector.extract_strided_slice %4 {offsets = [2, 0, 0], sizes = [1, 1, 128], strides = [1, 1, 1]} : vector<3x3x128xf32> to vector<1x1x128xf32>
    %62 = vector.shape_cast %61 : vector<1x1x128xf32> to vector<128xf32>
    %63 = vector.shape_cast %62 : vector<128xf32> to vector<1x1x1x128xf32>
    %64 = vector.broadcast %63 : vector<1x1x1x128xf32> to vector<2x16x16x128xf32>
    %65 = arith.mulf %60, %64 : vector<2x16x16x128xf32>
    %66 = arith.addf %59, %65 : vector<2x16x16x128xf32>
    %c0_51 = arith.constant 0 : index
    %c2_52 = arith.constant 2 : index
    %c1_53 = arith.constant 1 : index
    %c0_54 = arith.constant 0 : index
    %67 = vector.load %arg11[%c0_51, %c2_52, %c1_53, %c0_54] : memref<2x18x18x128xf32, #tpu.memory_space<vmem>>, vector<2x16x16x128xf32>
    %68 = vector.extract_strided_slice %4 {offsets = [2, 1, 0], sizes = [1, 1, 128], strides = [1, 1, 1]} : vector<3x3x128xf32> to vector<1x1x128xf32>
    %69 = vector.shape_cast %68 : vector<1x1x128xf32> to vector<128xf32>
    %70 = vector.shape_cast %69 : vector<128xf32> to vector<1x1x1x128xf32>
    %71 = vector.broadcast %70 : vector<1x1x1x128xf32> to vector<2x16x16x128xf32>
    %72 = arith.mulf %67, %71 : vector<2x16x16x128xf32>
    %73 = arith.addf %66, %72 : vector<2x16x16x128xf32>
    %c0_55 = arith.constant 0 : index
    %c2_56 = arith.constant 2 : index
    %c2_57 = arith.constant 2 : index
    %c0_58 = arith.constant 0 : index
    %74 = vector.load %arg11[%c0_55, %c2_56, %c2_57, %c0_58] : memref<2x18x18x128xf32, #tpu.memory_space<vmem>>, vector<2x16x16x128xf32>
    %75 = vector.extract_strided_slice %4 {offsets = [2, 2, 0], sizes = [1, 1, 128], strides = [1, 1, 1]} : vector<3x3x128xf32> to vector<1x1x128xf32>
    %76 = vector.shape_cast %75 : vector<1x1x128xf32> to vector<128xf32>
    %77 = vector.shape_cast %76 : vector<128xf32> to vector<1x1x1x128xf32>
    %78 = vector.broadcast %77 : vector<1x1x1x128xf32> to vector<2x16x16x128xf32>
    %79 = arith.mulf %74, %78 : vector<2x16x16x128xf32>
    %80 = arith.addf %73, %79 : vector<2x16x16x128xf32>
    %81 = vector.shape_cast %6 : vector<128xf32> to vector<1x1x1x128xf32>
    %82 = vector.broadcast %81 : vector<1x1x1x128xf32> to vector<2x16x16x128xf32>
    %83 = arith.addf %80, %82 : vector<2x16x16x128xf32>
    %cst = arith.constant 5.000000e-01 : f32
    %84 = vector.broadcast %cst : f32 to vector<2x16x16x128xf32>
    %85 = arith.mulf %84, %83 : vector<2x16x16x128xf32>
    %cst_59 = arith.constant 0.707106769 : f32
    %86 = vector.broadcast %cst_59 : f32 to vector<2x16x16x128xf32>
    %87 = arith.mulf %83, %86 : vector<2x16x16x128xf32>
    %88 = math.erf %87 : vector<2x16x16x128xf32>
    %cst_60 = arith.constant 1.000000e+00 : f32
    %89 = vector.broadcast %cst_60 : f32 to vector<2x16x16x128xf32>
    %90 = arith.addf %89, %88 : vector<2x16x16x128xf32>
    %91 = arith.mulf %85, %90 : vector<2x16x16x128xf32>
    %cst_61 = arith.constant dense<0.000000e+00> : vector<16x16x128xf32>
    %92 = vector.multi_reduction <add>, %91, %cst_61 [0] : vector<2x16x16x128xf32> to vector<16x16x128xf32>
    %cst_62 = arith.constant dense<0.000000e+00> : vector<16x128xf32>
    %93 = vector.multi_reduction <add>, %92, %cst_62 [0] : vector<16x16x128xf32> to vector<16x128xf32>
    %cst_63 = arith.constant dense<0.000000e+00> : vector<128xf32>
    %94 = vector.multi_reduction <add>, %93, %cst_63 [0] : vector<16x128xf32> to vector<128xf32>
    %95 = vector.shape_cast %94 : vector<128xf32> to vector<1x128xf32>
    %cst_64 = arith.constant 0.001953125 : f32
    %96 = vector.broadcast %cst_64 : f32 to vector<1x128xf32>
    %97 = arith.mulf %95, %96 : vector<1x128xf32>
    %98 = vector.shape_cast %97 : vector<1x128xf32> to vector<1x1x1x128xf32>
    %99 = vector.broadcast %98 : vector<1x1x1x128xf32> to vector<2x16x16x128xf32>
    %100 = arith.subf %91, %99 : vector<2x16x16x128xf32>
    %101 = arith.mulf %100, %100 : vector<2x16x16x128xf32>
    %cst_65 = arith.constant dense<0.000000e+00> : vector<16x16x128xf32>
    %102 = vector.multi_reduction <add>, %101, %cst_65 [0] : vector<2x16x16x128xf32> to vector<16x16x128xf32>
    %cst_66 = arith.constant dense<0.000000e+00> : vector<16x128xf32>
    %103 = vector.multi_reduction <add>, %102, %cst_66 [0] : vector<16x16x128xf32> to vector<16x128xf32>
    %cst_67 = arith.constant dense<0.000000e+00> : vector<128xf32>
    %104 = vector.multi_reduction <add>, %103, %cst_67 [0] : vector<16x128xf32> to vector<128xf32>
    %105 = vector.shape_cast %104 : vector<128xf32> to vector<1x128xf32>
    %cst_68 = arith.constant 0.001953125 : f32
    %106 = vector.broadcast %cst_68 : f32 to vector<1x128xf32>
    %107 = arith.mulf %105, %106 : vector<1x128xf32>
    %108 = vector.shape_cast %97 : vector<1x128xf32> to vector<1x1x1x128xf32>
    %109 = vector.broadcast %108 : vector<1x1x1x128xf32> to vector<2x16x16x128xf32>
    %110 = arith.subf %91, %109 : vector<2x16x16x128xf32>
    %cst_69 = arith.constant 9.99999974E-6 : f32
    %111 = vector.broadcast %cst_69 : f32 to vector<1x128xf32>
    %112 = arith.addf %107, %111 : vector<1x128xf32>
    %113 = math.rsqrt %112 : vector<1x128xf32>
    %114 = vector.shape_cast %113 : vector<1x128xf32> to vector<1x1x1x128xf32>
    %115 = vector.broadcast %114 : vector<1x1x1x128xf32> to vector<2x16x16x128xf32>
    %116 = arith.mulf %110, %115 : vector<2x16x16x128xf32>
    %117 = vector.shape_cast %8 : vector<128xf32> to vector<1x1x1x128xf32>
    %118 = vector.broadcast %117 : vector<1x1x1x128xf32> to vector<2x16x16x128xf32>
    %119 = arith.mulf %116, %118 : vector<2x16x16x128xf32>
    %120 = vector.shape_cast %10 : vector<128xf32> to vector<1x1x1x128xf32>
    %121 = vector.broadcast %120 : vector<1x1x1x128xf32> to vector<2x16x16x128xf32>
    %122 = arith.addf %119, %121 : vector<2x16x16x128xf32>
    %123 = arith.addf %122, %46 : vector<2x16x16x128xf32>
    %124 = vector.shape_cast %123 : vector<2x16x16x128xf32> to vector<512x128xf32>
    %125 = arith.truncf %124 : vector<512x128xf32> to vector<512x128xbf16>
    %cst_70 = arith.constant dense<0.000000e+00> : vector<512x128xf32>
    %126 = tpu.matmul %125, %12, %cst_70 {dimension_numbers = #tpu.dot_dimension_numbers<[1], [0], [0], [1], [0, 0, 1, 1], [], []>} : vector<512x128xbf16>, vector<128x128xbf16>, vector<512x128xf32> -> vector<512x128xf32>
    %127 = vector.shape_cast %14 : vector<128xf32> to vector<1x128xf32>
    %128 = vector.broadcast %127 : vector<1x128xf32> to vector<512x128xf32>
    %129 = arith.addf %126, %128 : vector<512x128xf32>
    %cst_71 = arith.constant 5.000000e-01 : f32
    %130 = vector.broadcast %cst_71 : f32 to vector<512x128xf32>
    %131 = arith.mulf %130, %129 : vector<512x128xf32>
    %cst_72 = arith.constant 0.707106769 : f32
    %132 = vector.broadcast %cst_72 : f32 to vector<512x128xf32>
    %133 = arith.mulf %129, %132 : vector<512x128xf32>
    %134 = math.erf %133 : vector<512x128xf32>
    %cst_73 = arith.constant 1.000000e+00 : f32
    %135 = vector.broadcast %cst_73 : f32 to vector<512x128xf32>
    %136 = arith.addf %135, %134 : vector<512x128xf32>
    %137 = arith.mulf %131, %136 : vector<512x128xf32>
    %cst_74 = arith.constant dense<0.000000e+00> : vector<128xf32>
    %138 = vector.multi_reduction <add>, %137, %cst_74 [0] : vector<512x128xf32> to vector<128xf32>
    %139 = vector.shape_cast %138 : vector<128xf32> to vector<1x128xf32>
    %cst_75 = arith.constant 0.001953125 : f32
    %140 = vector.broadcast %cst_75 : f32 to vector<1x128xf32>
    %141 = arith.mulf %139, %140 : vector<1x128xf32>
    %142 = vector.broadcast %141 : vector<1x128xf32> to vector<512x128xf32>
    %143 = arith.subf %137, %142 : vector<512x128xf32>
    %144 = arith.mulf %143, %143 : vector<512x128xf32>
    %cst_76 = arith.constant dense<0.000000e+00> : vector<128xf32>
    %145 = vector.multi_reduction <add>, %144, %cst_76 [0] : vector<512x128xf32> to vector<128xf32>
    %146 = vector.shape_cast %145 : vector<128xf32> to vector<1x128xf32>
    %cst_77 = arith.constant 0.001953125 : f32
    %147 = vector.broadcast %cst_77 : f32 to vector<1x128xf32>
    %148 = arith.mulf %146, %147 : vector<1x128xf32>
    %149 = vector.broadcast %141 : vector<1x128xf32> to vector<512x128xf32>
    %150 = arith.subf %137, %149 : vector<512x128xf32>
    %cst_78 = arith.constant 9.99999974E-6 : f32
    %151 = vector.broadcast %cst_78 : f32 to vector<1x128xf32>
    %152 = arith.addf %148, %151 : vector<1x128xf32>
    %153 = math.rsqrt %152 : vector<1x128xf32>
    %154 = vector.broadcast %153 : vector<1x128xf32> to vector<512x128xf32>
    %155 = arith.mulf %150, %154 : vector<512x128xf32>
    %156 = vector.shape_cast %16 : vector<128xf32> to vector<1x128xf32>
    %157 = vector.broadcast %156 : vector<1x128xf32> to vector<512x128xf32>
    %158 = arith.mulf %155, %157 : vector<512x128xf32>
    %159 = vector.shape_cast %18 : vector<128xf32> to vector<1x128xf32>
    %160 = vector.broadcast %159 : vector<1x128xf32> to vector<512x128xf32>
    %161 = arith.addf %158, %160 : vector<512x128xf32>
    %162 = vector.shape_cast %161 : vector<512x128xf32> to vector<2x16x16x128xf32>
    %c1_i32 = arith.constant 1 : i32
    %163 = arith.cmpi slt, %arg0, %c1_i32 : i32
    %164 = arith.extui %163 : i1 to i32
    %c0_i32_79 = arith.constant 0 : i32
    %165 = arith.cmpi ne, %164, %c0_i32_79 : i32
    scf.if %165 {
      %c0_82 = arith.constant 0 : index
      %c1_83 = arith.constant 1 : index
      %c1_84 = arith.constant 1 : index
      %c0_85 = arith.constant 0 : index
      %169 = vector.load %arg11[%c0_82, %c1_83, %c1_84, %c0_85] : memref<2x18x18x128xf32, #tpu.memory_space<vmem>>, vector<2x16x16x128xf32>
      tpu.vector_store %arg11[%c0_82, %c1_83, %c1_84, %c0_85], %162 {strides = array<i32>} : memref<2x18x18x128xf32, #tpu.memory_space<vmem>>, vector<2x16x16x128xf32>,
    } else {
    }
    %c1_i32_80 = arith.constant 1 : i32
    %166 = arith.cmpi eq, %arg0, %c1_i32_80 : i32
    %167 = arith.extui %166 : i1 to i32
    %c0_i32_81 = arith.constant 0 : i32
    %168 = arith.cmpi ne, %167, %c0_i32_81 : i32
    scf.if %168 {
      %c0_82 = arith.constant 0 : index
      %c0_83 = arith.constant 0 : index
      %c0_84 = arith.constant 0 : index
      %c0_85 = arith.constant 0 : index
      %169 = vector.load %arg10[%c0_82, %c0_83, %c0_84, %c0_85] : memref<2x16x16x128xf32, #tpu.memory_space<vmem>>, vector<2x16x16x128xf32>
      tpu.vector_store %arg10[%c0_82, %c0_83, %c0_84, %c0_85], %162 {strides = array<i32>} : memref<2x16x16x128xf32, #tpu.memory_space<vmem>>, vector<2x16x16x128xf32>,
    } else {
    }
    return
  }
  func.func @transform_0(%arg0: i32) -> (i32, i32, i32, i32) {
    %c0_i32 = arith.constant 0 : i32
    %c0_i32_0 = arith.constant 0 : i32
    %c0_i32_1 = arith.constant 0 : i32
    %c0_i32_2 = arith.constant 0 : i32
    %c0_i32_3 = arith.constant 0 : i32
    return %c0_i32, %c0_i32_0, %c0_i32_1, %c0_i32_2 : i32, i32, i32, i32
  }
  func.func @transform_1(%arg0: i32) -> (i32, i32, i32, i32) {
    %c0_i32 = arith.constant 0 : i32
    %c0_i32_0 = arith.constant 0 : i32
    %c0_i32_1 = arith.constant 0 : i32
    %c0_i32_2 = arith.constant 0 : i32
    return %arg0, %c0_i32, %c0_i32_0, %c0_i32_1 : i32, i32, i32, i32
  }
  func.func @transform_2(%arg0: i32) -> (i32, i32, i32) {
    %c0_i32 = arith.constant 0 : i32
    %c0_i32_0 = arith.constant 0 : i32
    %c0_i32_1 = arith.constant 0 : i32
    return %arg0, %c0_i32, %c0_i32_0 : i32, i32, i32
  }
  func.func @transform_3(%arg0: i32) -> (i32, i32, i32) {
    %c0_i32 = arith.constant 0 : i32
    %c0_i32_0 = arith.constant 0 : i32
    %c0_i32_1 = arith.constant 0 : i32
    return %arg0, %c0_i32, %c0_i32_0 : i32, i32, i32
  }
  func.func @transform_4(%arg0: i32) -> (i32, i32, i32) {
    %c0_i32 = arith.constant 0 : i32
    %c0_i32_0 = arith.constant 0 : i32
    %c0_i32_1 = arith.constant 0 : i32
    return %arg0, %c0_i32, %c0_i32_0 : i32, i32, i32
  }
  func.func @transform_5(%arg0: i32) -> (i32, i32, i32) {
    %c0_i32 = arith.constant 0 : i32
    %c0_i32_0 = arith.constant 0 : i32
    %c0_i32_1 = arith.constant 0 : i32
    return %arg0, %c0_i32, %c0_i32_0 : i32, i32, i32
  }
  func.func @transform_6(%arg0: i32) -> (i32, i32, i32) {
    %c0_i32 = arith.constant 0 : i32
    %c0_i32_0 = arith.constant 0 : i32
    %c0_i32_1 = arith.constant 0 : i32
    return %arg0, %c0_i32, %c0_i32_0 : i32, i32, i32
  }
  func.func @transform_7(%arg0: i32) -> (i32, i32, i32) {
    %c0_i32 = arith.constant 0 : i32
    %c0_i32_0 = arith.constant 0 : i32
    %c0_i32_1 = arith.constant 0 : i32
    return %arg0, %c0_i32, %c0_i32_0 : i32, i32, i32
  }
  func.func @transform_8(%arg0: i32) -> (i32, i32, i32) {
    %c0_i32 = arith.constant 0 : i32
    %c0_i32_0 = arith.constant 0 : i32
    %c0_i32_1 = arith.constant 0 : i32
    return %arg0, %c0_i32, %c0_i32_0 : i32, i32, i32
  }
  func.func @transform_9(%arg0: i32) -> (i32, i32, i32, i32) {
    %c0_i32 = arith.constant 0 : i32
    %c0_i32_0 = arith.constant 0 : i32
    %c0_i32_1 = arith.constant 0 : i32
    %c0_i32_2 = arith.constant 0 : i32
    %c0_i32_3 = arith.constant 0 : i32
    return %c0_i32, %c0_i32_0, %c0_i32_1, %c0_i32_2 : i32, i32, i32, i32
  }
}

</mosaic_0001>

<llo_original>
// kernel: convmixer_block.1
$region0: #{convmixer_block.1}
  #allocation0 [shape = 'u32[]', space=smem, size = 0x4, offset = 0x4, fixed_abs, tag = 'smem constant byte address 0x4 - core index']
  #allocation1 [shape = 'u32[144,128]{1,0:T(1,128)}', space=vmem, size = 0x12000, scoped, tag = 'internal scratch']
  #allocation2 [shape = 'f32[2,18,18,128]{3,2,1,0:T(8,128)}', space=vmem, size = 0x6c000, scoped, tag = 'scratch operand']
  %s0 = inlined_call_operand.hbm [shape: f32[2,16,16,128], index: 0, kind: input, shape index: {}, may-alias: {0,9}]
  %s1 = inlined_call_operand.hbm [shape: f32[2,3,3,128], index: 1, kind: input, shape index: {}]
  %s2 = inlined_call_operand.hbm [shape: f32[2,1,128], index: 2, kind: input, shape index: {}]
  %s3 = inlined_call_operand.hbm [shape: f32[2,1,128], index: 3, kind: input, shape index: {}]
  %s4 = inlined_call_operand.hbm [shape: f32[2,1,128], index: 4, kind: input, shape index: {}]
  %s5 = inlined_call_operand.hbm [shape: bf16[2,128,128], index: 5, kind: input, shape index: {}]
  %s6 = inlined_call_operand.hbm [shape: f32[2,1,128], index: 6, kind: input, shape index: {}]
  %s7 = inlined_call_operand.hbm [shape: f32[2,1,128], index: 7, kind: input, shape index: {}]
  %s8 = inlined_call_operand.hbm [shape: f32[2,1,128], index: 8, kind: input, shape index: {}]
  %s9 = inlined_call_operand.hbm [shape: f32[2,16,16,128], index: 9, kind: output, shape index: {}, may-alias: {0,9}]
  %s10 = sld [smem:[#allocation0]]
  $region117: #{convmixer_block.1} parent=0
    _
  %s12 = ssub.s32 1, %s10
  %s13 = scalar_select 0, %s12, %s10
  $region1: #{convmixer_block.1} parent=0
    #allocation3 [shape = 'u8[262144]{0}', space=vmem, size = 0x40000, scoped, tag = 'input window, operand 0, single buffered']
    #allocation4 [shape = 's32[2]{0}', space=sflag, size = 0x8, scoped, tag = 'scoped memory for convmixer_block.1']
    #allocation5 [shape = 's32[2]{0}', space=sflag, size = 0x8, scoped, tag = 'scoped memory for convmixer_block.1']
    #allocation6 [shape = 'u8[12288]{0}', space=vmem, size = 0x3000, scoped, tag = 'input window, operand 1']
    #allocation7 [shape = 's32[2]{0}', space=sflag, size = 0x8, scoped, tag = 'scoped memory for convmixer_block.1']
    #allocation8 [shape = 'u8[1024]{0}', space=vmem, size = 0x400, scoped, tag = 'input window, operand 2']
    #allocation9 [shape = 'u8[1024]{0}', space=vmem, size = 0x400, scoped, tag = 'input window, operand 3']
    #allocation10 [shape = 's32[2]{0}', space=sflag, size = 0x8, scoped, tag = 'scoped memory for convmixer_block.1']
    #allocation11 [shape = 'u8[1024]{0}', space=vmem, size = 0x400, scoped, tag = 'input window, operand 4']
    #allocation12 [shape = 'u8[65536]{0}', space=vmem, size = 0x10000, scoped, tag = 'input window, operand 5']
    #allocation13 [shape = 's32[2]{0}', space=sflag, size = 0x8, scoped, tag = 'scoped memory for convmixer_block.1']
    #allocation14 [shape = 'u8[1024]{0}', space=vmem, size = 0x400, scoped, tag = 'input window, operand 6']
    #allocation15 [shape = 'u8[1024]{0}', space=vmem, size = 0x400, scoped, tag = 'input window, operand 7']
    #allocation16 [shape = 's32[2]{0}', space=sflag, size = 0x8, scoped, tag = 'scoped memory for convmixer_block.1']
    #allocation17 [shape = 'u8[1024]{0}', space=vmem, size = 0x400, scoped, tag = 'input window, operand 8']
    #allocation18 [shape = 'u8[262144]{0}', space=vmem, size = 0x40000, scoped, tag = 'output window, operand 0, single buffered']
    %14 = vsyncpa [#allocation4], 0
    %15 = vsyncpa [#allocation7], 0
    %s16 = scalar_lea.sflag [#allocation7], 1
    %17 = vsyncpa %s16, 0
    %18 = vsyncpa [#allocation10], 0
    %s19 = scalar_lea.sflag [#allocation10], 1
    %20 = vsyncpa %s19, 0
    %21 = vsyncpa [#allocation13], 0
    %s22 = scalar_lea.sflag [#allocation13], 1
    %23 = vsyncpa %s22, 0
    %24 = vsyncpa [#allocation16], 0
    %s25 = scalar_lea.sflag [#allocation16], 1
    %26 = vsyncpa %s25, 0
    %27 = vsyncpa [#allocation5], 0
    loop: start=0, step=1, limit=4
    $region2: #{convmixer_block.1} parent=1 // loop_pre_header
      _
    $region3: #{convmixer_block.1} parent=1 // loop_header
      %s29 = sphi 0, %s33
      %p30 = scmp.ge.s32.totalorder %s29, 4
      %s37 = sphi 0, %s37
      %s39 = sphi 0, %s37
      %s40 = sphi 0, %s39
      %s54 = sphi 0, %s40
      %s60 = sphi 0, %s62
      %s63 = sphi 0, %s60
      %s64 = sphi 0, %s63
      %s80 = sphi 0, %s64
      %s86 = sphi 0, %s88
      %s89 = sphi 0, %s86
      %s90 = sphi 0, %s89
      %s106 = sphi 0, %s90
      %s112 = sphi 0, %s114
      %s115 = sphi 0, %s112
      %s116 = sphi 0, %s115
      %s132 = sphi 0, %s116
      %s138 = sphi 0, %s140
      %s141 = sphi 0, %s138
      %s142 = sphi 0, %s141
      %s158 = sphi 0, %s142
      %s164 = sphi 0, %s166
      %s167 = sphi 0, %s164
      %s168 = sphi 0, %s167
      %s184 = sphi 0, %s168
      %s190 = sphi 0, %s192
      %s193 = sphi 0, %s190
      %s194 = sphi 0, %s193
      %s210 = sphi 0, %s194
      %s216 = sphi 0, %s218
      %s219 = sphi 0, %s216
      %s220 = sphi 0, %s219
      %s236 = sphi 0, %s220
      %s242 = sphi 0, %s244
      %s245 = sphi 0, %s242
      %s246 = sphi 0, %s245
      %s262 = sphi 0, %s246
      %s266 = sphi 0, %s266
      %s268 = sphi 0, %s266
      %s269 = sphi 0, %s268
      %s283 = sphi 0, %s269
    $region4: #{convmixer_block.1} parent=1 // loop_header_branch
      %32 = sbr.rel (%p30) target = $region8
    $region5: #{convmixer_block.1} parent=1 // loop_body
      %s34 = ssub.s32 %s29, 1
      %s35 = ssub.s32 %s29, 2
      %s36 = sadd.s32 %s29, 1
      %s38 = sadd.s32 %s37, 1
      %p41 = scmp.eq.s32.totalorder %s29, 1
      %p42 = scmp.ne.s32.totalorder %s37, %s39
      %p43 = scmp.eq.s32.totalorder %s29, 0
      %p44 = por %p42, %p43
      %p45 = scmp.ne.s32.totalorder %s37, %s39
      %p46 = scmp.eq.s32.totalorder %s34, 1
      %p47 = por %p45, %p46
      %p48 = scmp.ne.s32.totalorder %s39, %s40
      %p49 = scmp.eq.s32.totalorder %s34, 0
      %p50 = por %p48, %p49
      %p51 = scmp.ne.s32.totalorder %s39, %s40
      %p52 = scmp.eq.s32.totalorder %s35, 1
      %p53 = por %p51, %p52
      %p55 = scmp.ne.s32.totalorder %s40, %s54
      %p56 = scmp.eq.s32.totalorder %s35, 0
      %p57 = por %p55, %p56
      %s58 = ssub.s32 %s29, %s36
      %p59 = scmp.eq.s32.totalorder %s58, 0
      %s61 = sadd.s32 %s60, 1
      %s62 = scalar_select %p59, %s60, %s61
      %p65 = pneg %p59
      %p66 = scmp.eq.s32.totalorder %s29, 1
      %p67 = por %p65, %p66
      %p68 = scmp.ne.s32.totalorder %s60, %s63
      %p69 = scmp.eq.s32.totalorder %s29, 0
      %p70 = por %p68, %p69
      %p71 = scmp.ne.s32.totalorder %s60, %s63
      %p72 = scmp.eq.s32.totalorder %s34, 1
      %p73 = por %p71, %p72
      %p74 = scmp.ne.s32.totalorder %s63, %s64
      %p75 = scmp.eq.s32.totalorder %s34, 0
      %p76 = por %p74, %p75
      %p77 = scmp.ne.s32.totalorder %s63, %s64
      %p78 = scmp.eq.s32.totalorder %s35, 1
      %p79 = por %p77, %p78
      %p81 = scmp.ne.s32.totalorder %s64, %s80
      %p82 = scmp.eq.s32.totalorder %s35, 0
      %p83 = por %p81, %p82
      %s84 = ssub.s32 %s29, %s36
      %p85 = scmp.eq.s32.totalorder %s84, 0
      %s87 = sadd.s32 %s86, 1
      %s88 = scalar_select %p85, %s86, %s87
      %p91 = pneg %p85
      %p92 = scmp.eq.s32.totalorder %s29, 1
      %p93 = por %p91, %p92
      %p94 = scmp.ne.s32.totalorder %s86, %s89
      %p95 = scmp.eq.s32.totalorder %s29, 0
      %p96 = por %p94, %p95
      %p97 = scmp.ne.s32.totalorder %s86, %s89
      %p98 = scmp.eq.s32.totalorder %s34, 1
      %p99 = por %p97, %p98
      %p100 = scmp.ne.s32.totalorder %s89, %s90
      %p101 = scmp.eq.s32.totalorder %s34, 0
      %p102 = por %p100, %p101
      %p103 = scmp.ne.s32.totalorder %s89, %s90
      %p104 = scmp.eq.s32.totalorder %s35, 1
      %p105 = por %p103, %p104
      %p107 = scmp.ne.s32.totalorder %s90, %s106
      %p108 = scmp.eq.s32.totalorder %s35, 0
      %p109 = por %p107, %p108
      %s110 = ssub.s32 %s29, %s36
      %p111 = scmp.eq.s32.totalorder %s110, 0
      %s113 = sadd.s32 %s112, 1
      %s114 = scalar_select %p111, %s112, %s113
      %p117 = pneg %p111
      %p118 = scmp.eq.s32.totalorder %s29, 1
      %p119 = por %p117, %p118
      %p120 = scmp.ne.s32.totalorder %s112, %s115
      %p121 = scmp.eq.s32.totalorder %s29, 0
      %p122 = por %p120, %p121
      %p123 = scmp.ne.s32.totalorder %s112, %s115
      %p124 = scmp.eq.s32.totalorder %s34, 1
      %p125 = por %p123, %p124
      %p126 = scmp.ne.s32.totalorder %s115, %s116
      %p127 = scmp.eq.s32.totalorder %s34, 0
      %p128 = por %p126, %p127
      %p129 = scmp.ne.s32.totalorder %s115, %s116
      %p130 = scmp.eq.s32.totalorder %s35, 1
      %p131 = por %p129, %p130
      %p133 = scmp.ne.s32.totalorder %s116, %s132
      %p134 = scmp.eq.s32.totalorder %s35, 0
      %p135 = por %p133, %p134
      %s136 = ssub.s32 %s29, %s36
      %p137 = scmp.eq.s32.totalorder %s136, 0
      %s139 = sadd.s32 %s138, 1
      %s140 = scalar_select %p137, %s138, %s139
      %p143 = pneg %p137
      %p144 = scmp.eq.s32.totalorder %s29, 1
      %p145 = por %p143, %p144
      %p146 = scmp.ne.s32.totalorder %s138, %s141
      %p147 = scmp.eq.s32.totalorder %s29, 0
      %p148 = por %p146, %p147
      %p149 = scmp.ne.s32.totalorder %s138, %s141
      %p150 = scmp.eq.s32.totalorder %s34, 1
      %p151 = por %p149, %p150
      %p152 = scmp.ne.s32.totalorder %s141, %s142
      %p153 = scmp.eq.s32.totalorder %s34, 0
      %p154 = por %p152, %p153
      %p155 = scmp.ne.s32.totalorder %s141, %s142
      %p156 = scmp.eq.s32.totalorder %s35, 1
      %p157 = por %p155, %p156
      %p159 = scmp.ne.s32.totalorder %s142, %s158
      %p160 = scmp.eq.s32.totalorder %s35, 0
      %p161 = por %p159, %p160
      %s162 = ssub.s32 %s29, %s36
      %p163 = scmp.eq.s32.totalorder %s162, 0
      %s165 = sadd.s32 %s164, 1
      %s166 = scalar_select %p163, %s164, %s165
      %p169 = pneg %p163
      %p170 = scmp.eq.s32.totalorder %s29, 1
      %p171 = por %p169, %p170
      %p172 = scmp.ne.s32.totalorder %s164, %s167
      %p173 = scmp.eq.s32.totalorder %s29, 0
      %p174 = por %p172, %p173
      %p175 = scmp.ne.s32.totalorder %s164, %s167
      %p176 = scmp.eq.s32.totalorder %s34, 1
      %p177 = por %p175, %p176
      %p178 = scmp.ne.s32.totalorder %s167, %s168
      %p179 = scmp.eq.s32.totalorder %s34, 0
      %p180 = por %p178, %p179
      %p181 = scmp.ne.s32.totalorder %s167, %s168
      %p182 = scmp.eq.s32.totalorder %s35, 1
      %p183 = por %p181, %p182
      %p185 = scmp.ne.s32.totalorder %s168, %s184
      %p186 = scmp.eq.s32.totalorder %s35, 0
      %p187 = por %p185, %p186
      %s188 = ssub.s32 %s29, %s36
      %p189 = scmp.eq.s32.totalorder %s188, 0
      %s191 = sadd.s32 %s190, 1
      %s192 = scalar_select %p189, %s190, %s191
      %p195 = pneg %p189
      %p196 = scmp.eq.s32.totalorder %s29, 1
      %p197 = por %p195, %p196
      %p198 = scmp.ne.s32.totalorder %s190, %s193
      %p199 = scmp.eq.s32.totalorder %s29, 0
      %p200 = por %p198, %p199
      %p201 = scmp.ne.s32.totalorder %s190, %s193
      %p202 = scmp.eq.s32.totalorder %s34, 1
      %p203 = por %p201, %p202
      %p204 = scmp.ne.s32.totalorder %s193, %s194
      %p205 = scmp.eq.s32.totalorder %s34, 0
      %p206 = por %p204, %p205
      %p207 = scmp.ne.s32.totalorder %s193, %s194
      %p208 = scmp.eq.s32.totalorder %s35, 1
      %p209 = por %p207, %p208
      %p211 = scmp.ne.s32.totalorder %s194, %s210
      %p212 = scmp.eq.s32.totalorder %s35, 0
      %p213 = por %p211, %p212
      %s214 = ssub.s32 %s29, %s36
      %p215 = scmp.eq.s32.totalorder %s214, 0
      %s217 = sadd.s32 %s216, 1
      %s218 = scalar_select %p215, %s216, %s217
      %p221 = pneg %p215
      %p222 = scmp.eq.s32.totalorder %s29, 1
      %p223 = por %p221, %p222
      %p224 = scmp.ne.s32.totalorder %s216, %s219
      %p225 = scmp.eq.s32.totalorder %s29, 0
      %p226 = por %p224, %p225
      %p227 = scmp.ne.s32.totalorder %s216, %s219
      %p228 = scmp.eq.s32.totalorder %s34, 1
      %p229 = por %p227, %p228
      %p230 = scmp.ne.s32.totalorder %s219, %s220
      %p231 = scmp.eq.s32.totalorder %s34, 0
      %p232 = por %p230, %p231
      %p233 = scmp.ne.s32.totalorder %s219, %s220
      %p234 = scmp.eq.s32.totalorder %s35, 1
      %p235 = por %p233, %p234
      %p237 = scmp.ne.s32.totalorder %s220, %s236
      %p238 = scmp.eq.s32.totalorder %s35, 0
      %p239 = por %p237, %p238
      %s240 = ssub.s32 %s29, %s36
      %p241 = scmp.eq.s32.totalorder %s240, 0
      %s243 = sadd.s32 %s242, 1
      %s244 = scalar_select %p241, %s242, %s243
      %p247 = pneg %p241
      %p248 = scmp.eq.s32.totalorder %s29, 1
      %p249 = por %p247, %p248
      %p250 = scmp.ne.s32.totalorder %s242, %s245
      %p251 = scmp.eq.s32.totalorder %s29, 0
      %p252 = por %p250, %p251
      %p253 = scmp.ne.s32.totalorder %s242, %s245
      %p254 = scmp.eq.s32.totalorder %s34, 1
      %p255 = por %p253, %p254
      %p256 = scmp.ne.s32.totalorder %s245, %s246
      %p257 = scmp.eq.s32.totalorder %s34, 0
      %p258 = por %p256, %p257
      %p259 = scmp.ne.s32.totalorder %s245, %s246
      %p260 = scmp.eq.s32.totalorder %s35, 1
      %p261 = por %p259, %p260
      %p263 = scmp.ne.s32.totalorder %s246, %s262
      %p264 = scmp.eq.s32.totalorder %s35, 0
      %p265 = por %p263, %p264
      %s267 = sadd.s32 %s266, 1
      %p270 = scmp.eq.s32.totalorder %s29, 1
      %p271 = scmp.ne.s32.totalorder %s266, %s268
      %p272 = scmp.eq.s32.totalorder %s29, 0
      %p273 = por %p271, %p272
      %p274 = scmp.ne.s32.totalorder %s266, %s268
      %p275 = scmp.eq.s32.totalorder %s34, 1
      %p276 = por %p274, %p275
      %p277 = scmp.ne.s32.totalorder %s268, %s269
      %p278 = scmp.eq.s32.totalorder %s34, 0
      %p279 = por %p277, %p278
      %p280 = scmp.ne.s32.totalorder %s268, %s269
      %p281 = scmp.eq.s32.totalorder %s35, 1
      %p282 = por %p280, %p281
      %p284 = scmp.ne.s32.totalorder %s269, %s283
      %p285 = scmp.eq.s32.totalorder %s35, 0
      %p286 = por %p284, %p285
      %p287 = scmp.le.s32.totalorder 1, %s29
      %p288 = scmp.lt.s32.totalorder %s29, 3
      %p289 = pnand %p287, %p288
      %p290 = pneg %p289
      // Predicated region
      $region9: #{convmixer_block.1} parent=5 // pred_check
        _
      $region10: #{convmixer_block.1} parent=5 // pred_check_branch
        %292 = sbr.rel (%p289) target = $region12
      $region11: #{convmixer_block.1} parent=5 // pred_region
        %s293 = ssub.s32 %s29, 1
        // Predicated region
        $region13: #{convmixer_block.1} parent=11 // pred_check
          %p294 = pneg %p50
        $region14: #{convmixer_block.1} parent=11 // pred_check_branch
          %296 = sbr.rel (%p294) target = $region16
        $region15: #{convmixer_block.1} parent=11 // pred_region
          %s298 = ssub.s32 8192, 8192
          %299 = vsyncadd [#allocation4], %s298
          %s300 = sshll.u32 [#allocation3], 4
          %s301 = int_to_ptr.vmem [resolvable:$true] %s300
          %306 = dma.hbm_to_vmem [thread:$0]  %s0, 8192, %s301, [#allocation4], 128, 128, 8
        $region16: #{convmixer_block.1} parent=11 // pred_fallthru
          _
      $region12: #{convmixer_block.1} parent=5 // pred_fallthru
        _
      %p307 = scmp.lt.s32.totalorder %s29, 2
      // Predicated region
      $region17: #{convmixer_block.1} parent=5 // pred_check
        %p308 = pneg %p307
      $region18: #{convmixer_block.1} parent=5 // pred_check_branch
        %310 = sbr.rel (%p308) target = $region20
      $region19: #{convmixer_block.1} parent=5 // pred_region
        // Predicated region
        $region21: #{convmixer_block.1} parent=19 // pred_check
          %p311 = pneg %p70
        $region22: #{convmixer_block.1} parent=19 // pred_check_branch
          %313 = sbr.rel (%p311) target = $region24
        $region23: #{convmixer_block.1} parent=19 // pred_region
          %s314 = sand.u32 %s29, 1
          %s315 = scalar_lea.sflag [#allocation7], %s314
          %s316 = sand.u32 %s60, 1
          %s317 = smul.addr %s316, 12
          %s318 = scalar_lea.vmem [#allocation6], %s317
          %s320 = ssub.s32 192, 192
          %321 = vsyncadd %s315, %s320
          %s322 = smul.addr %s29, 3
          %s323 = smul.addr %s322, 64
          %s324 = scalar_lea.hbm %s1, %s323
          %s325 = sshll.u32 %s318, 4
          %s326 = int_to_ptr.vmem [resolvable:$true] %s325
          %331 = dma.hbm_to_vmem [thread:$0]  %s324, 192, %s326, %s315, 64, 64, 4
        $region24: #{convmixer_block.1} parent=19 // pred_fallthru
          _
        // Predicated region
        $region25: #{convmixer_block.1} parent=19 // pred_check
          %p332 = pneg %p96
        $region26: #{convmixer_block.1} parent=19 // pred_check_branch
          %334 = sbr.rel (%p332) target = $region28
        $region27: #{convmixer_block.1} parent=19 // pred_region
          %s335 = sand.u32 %s29, 1
          %s336 = scalar_lea.sflag [#allocation7], %s335
          %s337 = sand.u32 %s86, 1
          %s338 = scalar_lea.vmem [#allocation8], %s337
          %s340 = ssub.s32 16, 16
          %341 = vsyncadd %s336, %s340
          %s342 = smul.addr %s29, 16
          %s343 = scalar_lea.hbm %s2, %s342
          %s345 = sshll.u32 %s338, 4
          %s346 = int_to_ptr.vmem [resolvable:$true] %s345
          %348 = dma.hbm_to_vmem [thread:$0]  %s343, 16, %s346, %s336
        $region28: #{convmixer_block.1} parent=19 // pred_fallthru
          _
        // Predicated region
        $region29: #{convmixer_block.1} parent=19 // pred_check
          %p349 = pneg %p122
        $region30: #{convmixer_block.1} parent=19 // pred_check_branch
          %351 = sbr.rel (%p349) target = $region32
        $region31: #{convmixer_block.1} parent=19 // pred_region
          %s352 = sand.u32 %s29, 1
          %s353 = scalar_lea.sflag [#allocation10], %s352
          %s354 = sand.u32 %s112, 1
          %s355 = scalar_lea.vmem [#allocation9], %s354
          %s357 = ssub.s32 16, 16
          %358 = vsyncadd %s353, %s357
          %s359 = smul.addr %s29, 16
          %s360 = scalar_lea.hbm %s3, %s359
          %s362 = sshll.u32 %s355, 4
          %s363 = int_to_ptr.vmem [resolvable:$true] %s362
          %365 = dma.hbm_to_vmem [thread:$0]  %s360, 16, %s363, %s353
        $region32: #{convmixer_block.1} parent=19 // pred_fallthru
          _
        // Predicated region
        $region33: #{convmixer_block.1} parent=19 // pred_check
          %p366 = pneg %p148
        $region34: #{convmixer_block.1} parent=19 // pred_check_branch
          %368 = sbr.rel (%p366) target = $region36
        $region35: #{convmixer_block.1} parent=19 // pred_region
          %s369 = sand.u32 %s29, 1
          %s370 = scalar_lea.sflag [#allocation10], %s369
          %s371 = sand.u32 %s138, 1
          %s372 = scalar_lea.vmem [#allocation11], %s371
          %s374 = ssub.s32 16, 16
          %375 = vsyncadd %s370, %s374
          %s376 = smul.addr %s29, 16
          %s377 = scalar_lea.hbm %s4, %s376
          %s379 = sshll.u32 %s372, 4
          %s380 = int_to_ptr.vmem [resolvable:$true] %s379
          %382 = dma.hbm_to_vmem [thread:$0]  %s377, 16, %s380, %s370
        $region36: #{convmixer_block.1} parent=19 // pred_fallthru
          _
        // Predicated region
        $region37: #{convmixer_block.1} parent=19 // pred_check
          %p383 = pneg %p174
        $region38: #{convmixer_block.1} parent=19 // pred_check_branch
          %385 = sbr.rel (%p383) target = $region40
        $region39: #{convmixer_block.1} parent=19 // pred_region
          %s386 = sand.u32 %s29, 1
          %s387 = scalar_lea.sflag [#allocation13], %s386
          %s388 = sand.u32 %s164, 1
          %s389 = smul.addr %s388, 64
          %s390 = scalar_lea.vmem [#allocation12], %s389
          %s392 = ssub.s32 1024, 1024
          %393 = vsyncadd %s387, %s392
          %s394 = smul.addr %s29, 16
          %s395 = smul.addr %s394, 64
          %s396 = scalar_lea.hbm %s5, %s395
          %s397 = sshll.u32 %s390, 4
          %s398 = int_to_ptr.vmem [resolvable:$true] %s397
          %403 = dma.hbm_to_vmem [thread:$0]  %s396, 1024, %s398, %s387, 64, 64, 4
        $region40: #{convmixer_block.1} parent=19 // pred_fallthru
          _
        // Predicated region
        $region41: #{convmixer_block.1} parent=19 // pred_check
          %p404 = pneg %p200
        $region42: #{convmixer_block.1} parent=19 // pred_check_branch
          %406 = sbr.rel (%p404) target = $region44
        $region43: #{convmixer_block.1} parent=19 // pred_region
          %s407 = sand.u32 %s29, 1
          %s408 = scalar_lea.sflag [#allocation13], %s407
          %s409 = sand.u32 %s190, 1
          %s410 = scalar_lea.vmem [#allocation14], %s409
          %s412 = ssub.s32 16, 16
          %413 = vsyncadd %s408, %s412
          %s414 = smul.addr %s29, 16
          %s415 = scalar_lea.hbm %s6, %s414
          %s417 = sshll.u32 %s410, 4
          %s418 = int_to_ptr.vmem [resolvable:$true] %s417
          %420 = dma.hbm_to_vmem [thread:$0]  %s415, 16, %s418, %s408
        $region44: #{convmixer_block.1} parent=19 // pred_fallthru
          _
        // Predicated region
        $region45: #{convmixer_block.1} parent=19 // pred_check
          %p421 = pneg %p226
        $region46: #{convmixer_block.1} parent=19 // pred_check_branch
          %423 = sbr.rel (%p421) target = $region48
        $region47: #{convmixer_block.1} parent=19 // pred_region
          %s424 = sand.u32 %s29, 1
          %s425 = scalar_lea.sflag [#allocation16], %s424
          %s426 = sand.u32 %s216, 1
          %s427 = scalar_lea.vmem [#allocation15], %s426
          %s429 = ssub.s32 16, 16
          %430 = vsyncadd %s425, %s429
          %s431 = smul.addr %s29, 16
          %s432 = scalar_lea.hbm %s7, %s431
          %s434 = sshll.u32 %s427, 4
          %s435 = int_to_ptr.vmem [resolvable:$true] %s434
          %437 = dma.hbm_to_vmem [thread:$0]  %s432, 16, %s435, %s425
        $region48: #{convmixer_block.1} parent=19 // pred_fallthru
          _
        // Predicated region
        $region49: #{convmixer_block.1} parent=19 // pred_check
          %p438 = pneg %p252
        $region50: #{convmixer_block.1} parent=19 // pred_check_branch
          %440 = sbr.rel (%p438) target = $region52
        $region51: #{convmixer_block.1} parent=19 // pred_region
          %s441 = sand.u32 %s29, 1
          %s442 = scalar_lea.sflag [#allocation16], %s441
          %s443 = sand.u32 %s242, 1
          %s444 = scalar_lea.vmem [#allocation17], %s443
          %s446 = ssub.s32 16, 16
          %447 = vsyncadd %s442, %s446
          %s448 = smul.addr %s29, 16
          %s449 = scalar_lea.hbm %s8, %s448
          %s451 = sshll.u32 %s444, 4
          %s452 = int_to_ptr.vmem [resolvable:$true] %s451
          %454 = dma.hbm_to_vmem [thread:$0]  %s449, 16, %s452, %s442
        $region52: #{convmixer_block.1} parent=19 // pred_fallthru
          _
      $region20: #{convmixer_block.1} parent=5 // pred_fallthru
        _
      %p455 = scmp.le.s32.totalorder 1, %s29
      %p456 = scmp.lt.s32.totalorder %s29, 3
      %p457 = pnand %p455, %p456
      %p458 = pneg %p457
      // Predicated region
      $region53: #{convmixer_block.1} parent=5 // pred_check
        _
      $region54: #{convmixer_block.1} parent=5 // pred_check_branch
        %460 = sbr.rel (%p457) target = $region56
      $region55: #{convmixer_block.1} parent=5 // pred_region
        %s461 = ssub.s32 %s29, 1
        // Predicated region
        $region57: #{convmixer_block.1} parent=55 // pred_check
          %p462 = pneg %p50
        $region58: #{convmixer_block.1} parent=55 // pred_check_branch
          %464 = sbr.rel (%p462) target = $region60
        $region59: #{convmixer_block.1} parent=55 // pred_region
          %465 = dma.done [#allocation4], 8192
        $region60: #{convmixer_block.1} parent=55 // pred_fallthru
          _
        %s466 = sand.u32 %s34, 1
        %s467 = scalar_lea.sflag [#allocation7], %s466
        %s468 = sand.u32 %s63, 1
        %s469 = smul.addr %s468, 12
        %s470 = scalar_lea.vmem [#allocation6], %s469
        // Predicated region
        $region61: #{convmixer_block.1} parent=55 // pred_check
          %p471 = pneg %p76
        $region62: #{convmixer_block.1} parent=55 // pred_check_branch
          %473 = sbr.rel (%p471) target = $region64
        $region63: #{convmixer_block.1} parent=55 // pred_region
          %474 = dma.done %s467, 192
        $region64: #{convmixer_block.1} parent=55 // pred_fallthru
          _
        %s475 = sand.u32 %s34, 1
        %s476 = scalar_lea.sflag [#allocation7], %s475
        %s477 = sand.u32 %s89, 1
        %s478 = scalar_lea.vmem [#allocation8], %s477
        // Predicated region
        $region65: #{convmixer_block.1} parent=55 // pred_check
          %p479 = pneg %p102
        $region66: #{convmixer_block.1} parent=55 // pred_check_branch
          %481 = sbr.rel (%p479) target = $region68
        $region67: #{convmixer_block.1} parent=55 // pred_region
          %482 = dma.done %s476, 16
        $region68: #{convmixer_block.1} parent=55 // pred_fallthru
          _
        %s483 = sand.u32 %s34, 1
        %s484 = scalar_lea.sflag [#allocation10], %s483
        %s485 = sand.u32 %s115, 1
        %s486 = scalar_lea.vmem [#allocation9], %s485
        // Predicated region
        $region69: #{convmixer_block.1} parent=55 // pred_check
          %p487 = pneg %p128
        $region70: #{convmixer_block.1} parent=55 // pred_check_branch
          %489 = sbr.rel (%p487) target = $region72
        $region71: #{convmixer_block.1} parent=55 // pred_region
          %490 = dma.done %s484, 16
        $region72: #{convmixer_block.1} parent=55 // pred_fallthru
          _
        %s491 = sand.u32 %s34, 1
        %s492 = scalar_lea.sflag [#allocation10], %s491
        %s493 = sand.u32 %s141, 1
        %s494 = scalar_lea.vmem [#allocation11], %s493
        // Predicated region
        $region73: #{convmixer_block.1} parent=55 // pred_check
          %p495 = pneg %p154
        $region74: #{convmixer_block.1} parent=55 // pred_check_branch
          %497 = sbr.rel (%p495) target = $region76
        $region75: #{convmixer_block.1} parent=55 // pred_region
          %498 = dma.done %s492, 16
        $region76: #{convmixer_block.1} parent=55 // pred_fallthru
          _
        %s499 = sand.u32 %s34, 1
        %s500 = scalar_lea.sflag [#allocation13], %s499
        %s501 = sand.u32 %s167, 1
        %s502 = smul.addr %s501, 64
        %s503 = scalar_lea.vmem [#allocation12], %s502
        // Predicated region
        $region77: #{convmixer_block.1} parent=55 // pred_check
          %p504 = pneg %p180
        $region78: #{convmixer_block.1} parent=55 // pred_check_branch
          %506 = sbr.rel (%p504) target = $region80
        $region79: #{convmixer_block.1} parent=55 // pred_region
          %507 = dma.done %s500, 1024
        $region80: #{convmixer_block.1} parent=55 // pred_fallthru
          _
        %s508 = sand.u32 %s34, 1
        %s509 = scalar_lea.sflag [#allocation13], %s508
        %s510 = sand.u32 %s193, 1
        %s511 = scalar_lea.vmem [#allocation14], %s510
        // Predicated region
        $region81: #{convmixer_block.1} parent=55 // pred_check
          %p512 = pneg %p206
        $region82: #{convmixer_block.1} parent=55 // pred_check_branch
          %514 = sbr.rel (%p512) target = $region84
        $region83: #{convmixer_block.1} parent=55 // pred_region
          %515 = dma.done %s509, 16
        $region84: #{convmixer_block.1} parent=55 // pred_fallthru
          _
        %s516 = sand.u32 %s34, 1
        %s517 = scalar_lea.sflag [#allocation16], %s516
        %s518 = sand.u32 %s219, 1
        %s519 = scalar_lea.vmem [#allocation15], %s518
        // Predicated region
        $region85: #{convmixer_block.1} parent=55 // pred_check
          %p520 = pneg %p232
        $region86: #{convmixer_block.1} parent=55 // pred_check_branch
          %522 = sbr.rel (%p520) target = $region88
        $region87: #{convmixer_block.1} parent=55 // pred_region
          %523 = dma.done %s517, 16
        $region88: #{convmixer_block.1} parent=55 // pred_fallthru
          _
        %s524 = sand.u32 %s34, 1
        %s525 = scalar_lea.sflag [#allocation16], %s524
        %s526 = sand.u32 %s245, 1
        %s527 = scalar_lea.vmem [#allocation17], %s526
        // Predicated region
        $region89: #{convmixer_block.1} parent=55 // pred_check
          %p528 = pneg %p258
        $region90: #{convmixer_block.1} parent=55 // pred_check_branch
          %530 = sbr.rel (%p528) target = $region92
        $region91: #{convmixer_block.1} parent=55 // pred_region
          %531 = dma.done %s525, 16
        $region92: #{convmixer_block.1} parent=55 // pred_fallthru
          _
        %p532 = pneg %p50
        %p533 = pneg %p47
        %s534 = sand.u32 %s34, 1
        %s535 = scalar_lea.sflag [#allocation7], %s534
        %s536 = sand.u32 %s63, 1
        %s537 = smul.addr %s536, 12
        %s538 = scalar_lea.vmem [#allocation6], %s537
        %p539 = pneg %p76
        %p540 = pneg %p73
        %s541 = sand.u32 %s34, 1
        %s542 = scalar_lea.sflag [#allocation7], %s541
        %s543 = sand.u32 %s89, 1
        %s544 = scalar_lea.vmem [#allocation8], %s543
        %p545 = pneg %p102
        %p546 = pneg %p99
        %s547 = sand.u32 %s34, 1
        %s548 = scalar_lea.sflag [#allocation10], %s547
        %s549 = sand.u32 %s115, 1
        %s550 = scalar_lea.vmem [#allocation9], %s549
        %p551 = pneg %p128
        %p552 = pneg %p125
        %s553 = sand.u32 %s34, 1
        %s554 = scalar_lea.sflag [#allocation10], %s553
        %s555 = sand.u32 %s141, 1
        %s556 = scalar_lea.vmem [#allocation11], %s555
        %p557 = pneg %p154
        %p558 = pneg %p151
        %s559 = sand.u32 %s34, 1
        %s560 = scalar_lea.sflag [#allocation13], %s559
        %s561 = sand.u32 %s167, 1
        %s562 = smul.addr %s561, 64
        %s563 = scalar_lea.vmem [#allocation12], %s562
        %p564 = pneg %p180
        %p565 = pneg %p177
        %s566 = sand.u32 %s34, 1
        %s567 = scalar_lea.sflag [#allocation13], %s566
        %s568 = sand.u32 %s193, 1
        %s569 = scalar_lea.vmem [#allocation14], %s568
        %p570 = pneg %p206
        %p571 = pneg %p203
        %s572 = sand.u32 %s34, 1
        %s573 = scalar_lea.sflag [#allocation16], %s572
        %s574 = sand.u32 %s219, 1
        %s575 = scalar_lea.vmem [#allocation15], %s574
        %p576 = pneg %p232
        %p577 = pneg %p229
        %s578 = sand.u32 %s34, 1
        %s579 = scalar_lea.sflag [#allocation16], %s578
        %s580 = sand.u32 %s245, 1
        %s581 = scalar_lea.vmem [#allocation17], %s580
        %p582 = pneg %p258
        %p583 = pneg %p255
        %p584 = pneg %p279
        %p585 = pneg %p276
        %p587 = scmp.eq.s32.totalorder %s34, 0
        // Predicated region
        $region93: #{convmixer_block.1} parent=55 // pred_check
          %p588 = pneg %p587
        $region94: #{convmixer_block.1} parent=55 // pred_check_branch
          %590 = sbr.rel (%p588) target = $region96
        $region95: #{convmixer_block.1} parent=55 // pred_region
          %591 = vst [vmem:[#allocation2] sm:$0xff] 0.0
          %592 = vst [vmem:[#allocation2 + $0x8] sm:$0xff] 0.0
          %593 = vst [vmem:[#allocation2 + $0x10] sm:$0x3] 0.0
          %594 = vst [vmem:[#allocation2 + $0x1b0] sm:$0xff] 0.0
          %595 = vst [vmem:[#allocation2 + $0x1b8] sm:$0xff] 0.0
          %596 = vst [vmem:[#allocation2 + $0x1c0] sm:$0x3] 0.0
          %s597 = scalar_lea.vmem [#allocation2], 408
          %598 = vst [vmem:[%s597] sm:$0xff] 0.0
          %599 = vst [vmem:[%s597 + $0x8] sm:$0xff] 0.0
          %600 = vst [vmem:[%s597 + $0x10] sm:$0x3] 0.0
          %601 = vst [vmem:[%s597 + $0x1b0] sm:$0xff] 0.0
          %602 = vst [vmem:[%s597 + $0x1b8] sm:$0xff] 0.0
          %603 = vst [vmem:[%s597 + $0x1c0] sm:$0x3] 0.0
          %604 = vst [vmem:[#allocation2] sm:$0x1] 0.0
          %605 = vst [vmem:[#allocation2 + $0x18] sm:$0x1] 0.0
          %606 = vst [vmem:[#allocation2 + $0x30] sm:$0x1] 0.0
          %607 = vst [vmem:[#allocation2 + $0x48] sm:$0x1] 0.0
          %608 = vst [vmem:[#allocation2 + $0x60] sm:$0x1] 0.0
          %609 = vst [vmem:[#allocation2 + $0x78] sm:$0x1] 0.0
          %610 = vst [vmem:[#allocation2 + $0x90] sm:$0x1] 0.0
          %611 = vst [vmem:[#allocation2 + $0xa8] sm:$0x1] 0.0
          %612 = vst [vmem:[#allocation2 + $0xc0] sm:$0x1] 0.0
          %613 = vst [vmem:[#allocation2 + $0xd8] sm:$0x1] 0.0
          %614 = vst [vmem:[#allocation2 + $0xf0] sm:$0x1] 0.0
          %615 = vst [vmem:[#allocation2 + $0x108] sm:$0x1] 0.0
          %616 = vst [vmem:[#allocation2 + $0x120] sm:$0x1] 0.0
          %617 = vst [vmem:[#allocation2 + $0x138] sm:$0x1] 0.0
          %618 = vst [vmem:[#allocation2 + $0x150] sm:$0x1] 0.0
          %619 = vst [vmem:[#allocation2 + $0x168] sm:$0x1] 0.0
          %620 = vst [vmem:[#allocation2 + $0x180] sm:$0x1] 0.0
          %621 = vst [vmem:[#allocation2 + $0x198] sm:$0x1] 0.0
          %622 = vst [vmem:[#allocation2 + $0x1b0] sm:$0x1] 0.0
          %623 = vst [vmem:[#allocation2 + $0x1c8] sm:$0x1] 0.0
          %624 = vst [vmem:[#allocation2 + $0x1e0] sm:$0x1] 0.0
          %625 = vst [vmem:[#allocation2 + $0x1f8] sm:$0x1] 0.0
          %626 = vst [vmem:[#allocation2 + $0x210] sm:$0x1] 0.0
          %627 = vst [vmem:[#allocation2 + $0x228] sm:$0x1] 0.0
          %628 = vst [vmem:[#allocation2 + $0x240] sm:$0x1] 0.0
          %629 = vst [vmem:[#allocation2 + $0x258] sm:$0x1] 0.0
          %630 = vst [vmem:[#allocation2 + $0x270] sm:$0x1] 0.0
          %631 = vst [vmem:[#allocation2 + $0x288] sm:$0x1] 0.0
          %632 = vst [vmem:[#allocation2 + $0x2a0] sm:$0x1] 0.0
          %633 = vst [vmem:[#allocation2 + $0x2b8] sm:$0x1] 0.0
          %634 = vst [vmem:[#allocation2 + $0x2d0] sm:$0x1] 0.0
          %635 = vst [vmem:[#allocation2 + $0x2e8] sm:$0x1] 0.0
          %636 = vst [vmem:[#allocation2 + $0x300] sm:$0x1] 0.0
          %637 = vst [vmem:[#allocation2 + $0x318] sm:$0x1] 0.0
          %638 = vst [vmem:[#allocation2 + $0x330] sm:$0x1] 0.0
          %639 = vst [vmem:[#allocation2 + $0x348] sm:$0x1] 0.0
          %640 = vst [vmem:[#allocation2 + $0x11] sm:$0x1] 0.0
          %641 = vst [vmem:[#allocation2 + $0x29] sm:$0x1] 0.0
          %642 = vst [vmem:[#allocation2 + $0x41] sm:$0x1] 0.0
          %643 = vst [vmem:[#allocation2 + $0x59] sm:$0x1] 0.0
          %644 = vst [vmem:[#allocation2 + $0x71] sm:$0x1] 0.0
          %645 = vst [vmem:[#allocation2 + $0x89] sm:$0x1] 0.0
          %646 = vst [vmem:[#allocation2 + $0xa1] sm:$0x1] 0.0
          %647 = vst [vmem:[#allocation2 + $0xb9] sm:$0x1] 0.0
          %648 = vst [vmem:[#allocation2 + $0xd1] sm:$0x1] 0.0
          %649 = vst [vmem:[#allocation2 + $0xe9] sm:$0x1] 0.0
          %650 = vst [vmem:[#allocation2 + $0x101] sm:$0x1] 0.0
          %651 = vst [vmem:[#allocation2 + $0x119] sm:$0x1] 0.0
          %652 = vst [vmem:[#allocation2 + $0x131] sm:$0x1] 0.0
          %653 = vst [vmem:[#allocation2 + $0x149] sm:$0x1] 0.0
          %654 = vst [vmem:[#allocation2 + $0x161] sm:$0x1] 0.0
          %655 = vst [vmem:[#allocation2 + $0x179] sm:$0x1] 0.0
          %656 = vst [vmem:[#allocation2 + $0x191] sm:$0x1] 0.0
          %657 = vst [vmem:[#allocation2 + $0x1a9] sm:$0x1] 0.0
          %658 = vst [vmem:[#allocation2 + $0x1c1] sm:$0x1] 0.0
          %659 = vst [vmem:[#allocation2 + $0x1d9] sm:$0x1] 0.0
          %660 = vst [vmem:[#allocation2 + $0x1f1] sm:$0x1] 0.0
          %661 = vst [vmem:[#allocation2 + $0x209] sm:$0x1] 0.0
          %662 = vst [vmem:[#allocation2 + $0x221] sm:$0x1] 0.0
          %663 = vst [vmem:[#allocation2 + $0x239] sm:$0x1] 0.0
          %664 = vst [vmem:[#allocation2 + $0x251] sm:$0x1] 0.0
          %665 = vst [vmem:[#allocation2 + $0x269] sm:$0x1] 0.0
          %666 = vst [vmem:[#allocation2 + $0x281] sm:$0x1] 0.0
          %667 = vst [vmem:[#allocation2 + $0x299] sm:$0x1] 0.0
          %668 = vst [vmem:[#allocation2 + $0x2b1] sm:$0x1] 0.0
          %669 = vst [vmem:[#allocation2 + $0x2c9] sm:$0x1] 0.0
          %670 = vst [vmem:[#allocation2 + $0x2e1] sm:$0x1] 0.0
          %671 = vst [vmem:[#allocation2 + $0x2f9] sm:$0x1] 0.0
          %672 = vst [vmem:[#allocation2 + $0x311] sm:$0x1] 0.0
          %673 = vst [vmem:[#allocation2 + $0x329] sm:$0x1] 0.0
          %674 = vst [vmem:[#allocation2 + $0x341] sm:$0x1] 0.0
          %675 = vst [vmem:[#allocation2 + $0x359] sm:$0x1] 0.0
          %v676 = vld [vmem:[#allocation3] sm:$0xff]
          %v677 = vld [vmem:[#allocation3 + $0x8] sm:$0xff]
          %v678 = vld [vmem:[#allocation3 + $0x10] sm:$0xff]
          %v679 = vld [vmem:[#allocation3 + $0x18] sm:$0xff]
          %v680 = vld [vmem:[#allocation3 + $0x20] sm:$0xff]
          %v681 = vld [vmem:[#allocation3 + $0x28] sm:$0xff]
          %v682 = vld [vmem:[#allocation3 + $0x30] sm:$0xff]
          %v683 = vld [vmem:[#allocation3 + $0x38] sm:$0xff]
          %v684 = vld [vmem:[#allocation3 + $0x40] sm:$0xff]
          %v685 = vld [vmem:[#allocation3 + $0x48] sm:$0xff]
          %v686 = vld [vmem:[#allocation3 + $0x50] sm:$0xff]
          %v687 = vld [vmem:[#allocation3 + $0x58] sm:$0xff]
          %v688 = vld [vmem:[#allocation3 + $0x60] sm:$0xff]
          %v689 = vld [vmem:[#allocation3 + $0x68] sm:$0xff]
          %v690 = vld [vmem:[#allocation3 + $0x70] sm:$0xff]
          %v691 = vld [vmem:[#allocation3 + $0x78] sm:$0xff]
          %v692 = vld [vmem:[#allocation3 + $0x80] sm:$0xff]
          %v693 = vld [vmem:[#allocation3 + $0x88] sm:$0xff]
          %v694 = vld [vmem:[#allocation3 + $0x90] sm:$0xff]
          %v695 = vld [vmem:[#allocation3 + $0x98] sm:$0xff]
          %v696 = vld [vmem:[#allocation3 + $0xa0] sm:$0xff]
          %v697 = vld [vmem:[#allocation3 + $0xa8] sm:$0xff]
          %v698 = vld [vmem:[#allocation3 + $0xb0] sm:$0xff]
          %v699 = vld [vmem:[#allocation3 + $0xb8] sm:$0xff]
          %v700 = vld [vmem:[#allocation3 + $0xc0] sm:$0xff]
          %v701 = vld [vmem:[#allocation3 + $0xc8] sm:$0xff]
          %v702 = vld [vmem:[#allocation3 + $0xd0] sm:$0xff]
          %v703 = vld [vmem:[#allocation3 + $0xd8] sm:$0xff]
          %v704 = vld [vmem:[#allocation3 + $0xe0] sm:$0xff]
          %v705 = vld [vmem:[#allocation3 + $0xe8] sm:$0xff]
          %v706 = vld [vmem:[#allocation3 + $0xf0] sm:$0xff]
          %v707 = vld [vmem:[#allocation3 + $0xf8] sm:$0xff]
          %v708 = vld [vmem:[#allocation3 + $0x100] sm:$0xff]
          %v709 = vld [vmem:[#allocation3 + $0x108] sm:$0xff]
          %v710 = vld [vmem:[#allocation3 + $0x110] sm:$0xff]
          %v711 = vld [vmem:[#allocation3 + $0x118] sm:$0xff]
          %v712 = vld [vmem:[#allocation3 + $0x120] sm:$0xff]
          %v713 = vld [vmem:[#allocation3 + $0x128] sm:$0xff]
          %v714 = vld [vmem:[#allocation3 + $0x130] sm:$0xff]
          %v715 = vld [vmem:[#allocation3 + $0x138] sm:$0xff]
          %v716 = vld [vmem:[#allocation3 + $0x140] sm:$0xff]
          %v717 = vld [vmem:[#allocation3 + $0x148] sm:$0xff]
          %v718 = vld [vmem:[#allocation3 + $0x150] sm:$0xff]
          %v719 = vld [vmem:[#allocation3 + $0x158] sm:$0xff]
          %v720 = vld [vmem:[#allocation3 + $0x160] sm:$0xff]
          %v721 = vld [vmem:[#allocation3 + $0x168] sm:$0xff]
          %v722 = vld [vmem:[#allocation3 + $0x170] sm:$0xff]
          %v723 = vld [vmem:[#allocation3 + $0x178] sm:$0xff]
          %v724 = vld [vmem:[#allocation3 + $0x180] sm:$0xff]
          %v725 = vld [vmem:[#allocation3 + $0x188] sm:$0xff]
          %v726 = vld [vmem:[#allocation3 + $0x190] sm:$0xff]
          %v727 = vld [vmem:[#allocation3 + $0x198] sm:$0xff]
          %v728 = vld [vmem:[#allocation3 + $0x1a0] sm:$0xff]
          %v729 = vld [vmem:[#allocation3 + $0x1a8] sm:$0xff]
          %v730 = vld [vmem:[#allocation3 + $0x1b0] sm:$0xff]
          %v731 = vld [vmem:[#allocation3 + $0x1b8] sm:$0xff]
          %v732 = vld [vmem:[#allocation3 + $0x1c0] sm:$0xff]
          %v733 = vld [vmem:[#allocation3 + $0x1c8] sm:$0xff]
          %v734 = vld [vmem:[#allocation3 + $0x1d0] sm:$0xff]
          %v735 = vld [vmem:[#allocation3 + $0x1d8] sm:$0xff]
          %v736 = vld [vmem:[#allocation3 + $0x1e0] sm:$0xff]
          %v737 = vld [vmem:[#allocation3 + $0x1e8] sm:$0xff]
          %v738 = vld [vmem:[#allocation3 + $0x1f0] sm:$0xff]
          %v739 = vld [vmem:[#allocation3 + $0x1f8] sm:$0xff]
          %s740 = scalar_lea.vmem [#allocation2], 24
          %741 = vst [vmem:[%s740 + $0x1] sm:$0xff] %v676
          %742 = vst [vmem:[%s740 + $0x9] sm:$0xff] %v677
          %743 = vst [vmem:[%s740 + $0x19] sm:$0xff] %v678
          %744 = vst [vmem:[%s740 + $0x21] sm:$0xff] %v679
          %745 = vst [vmem:[%s740 + $0x31] sm:$0xff] %v680
          %746 = vst [vmem:[%s740 + $0x39] sm:$0xff] %v681
          %747 = vst [vmem:[%s740 + $0x49] sm:$0xff] %v682
          %748 = vst [vmem:[%s740 + $0x51] sm:$0xff] %v683
          %749 = vst [vmem:[%s740 + $0x61] sm:$0xff] %v684
          %750 = vst [vmem:[%s740 + $0x69] sm:$0xff] %v685
          %751 = vst [vmem:[%s740 + $0x79] sm:$0xff] %v686
          %752 = vst [vmem:[%s740 + $0x81] sm:$0xff] %v687
          %753 = vst [vmem:[%s740 + $0x91] sm:$0xff] %v688
          %754 = vst [vmem:[%s740 + $0x99] sm:$0xff] %v689
          %755 = vst [vmem:[%s740 + $0xa9] sm:$0xff] %v690
          %756 = vst [vmem:[%s740 + $0xb1] sm:$0xff] %v691
          %757 = vst [vmem:[%s740 + $0xc1] sm:$0xff] %v692
          %758 = vst [vmem:[%s740 + $0xc9] sm:$0xff] %v693
          %759 = vst [vmem:[%s740 + $0xd9] sm:$0xff] %v694
          %760 = vst [vmem:[%s740 + $0xe1] sm:$0xff] %v695
          %761 = vst [vmem:[%s740 + $0xf1] sm:$0xff] %v696
          %762 = vst [vmem:[%s740 + $0xf9] sm:$0xff] %v697
          %763 = vst [vmem:[%s740 + $0x109] sm:$0xff] %v698
          %764 = vst [vmem:[%s740 + $0x111] sm:$0xff] %v699
          %765 = vst [vmem:[%s740 + $0x121] sm:$0xff] %v700
          %766 = vst [vmem:[%s740 + $0x129] sm:$0xff] %v701
          %767 = vst [vmem:[%s740 + $0x139] sm:$0xff] %v702
          %768 = vst [vmem:[%s740 + $0x141] sm:$0xff] %v703
          %769 = vst [vmem:[%s740 + $0x151] sm:$0xff] %v704
          %770 = vst [vmem:[%s740 + $0x159] sm:$0xff] %v705
          %771 = vst [vmem:[%s740 + $0x169] sm:$0xff] %v706
          %772 = vst [vmem:[%s740 + $0x171] sm:$0xff] %v707
          %773 = vst [vmem:[%s740 + $0x1b1] sm:$0xff] %v708
          %774 = vst [vmem:[%s740 + $0x1b9] sm:$0xff] %v709
          %775 = vst [vmem:[%s740 + $0x1c9] sm:$0xff] %v710
          %776 = vst [vmem:[%s740 + $0x1d1] sm:$0xff] %v711
          %777 = vst [vmem:[%s740 + $0x1e1] sm:$0xff] %v712
          %778 = vst [vmem:[%s740 + $0x1e9] sm:$0xff] %v713
          %779 = vst [vmem:[%s740 + $0x1f9] sm:$0xff] %v714
          %780 = vst [vmem:[%s740 + $0x201] sm:$0xff] %v715
          %781 = vst [vmem:[%s740 + $0x211] sm:$0xff] %v716
          %782 = vst [vmem:[%s740 + $0x219] sm:$0xff] %v717
          %783 = vst [vmem:[%s740 + $0x229] sm:$0xff] %v718
          %784 = vst [vmem:[%s740 + $0x231] sm:$0xff] %v719
          %785 = vst [vmem:[%s740 + $0x241] sm:$0xff] %v720
          %786 = vst [vmem:[%s740 + $0x249] sm:$0xff] %v721
          %787 = vst [vmem:[%s740 + $0x259] sm:$0xff] %v722
          %788 = vst [vmem:[%s740 + $0x261] sm:$0xff] %v723
          %789 = vst [vmem:[%s740 + $0x271] sm:$0xff] %v724
          %790 = vst [vmem:[%s740 + $0x279] sm:$0xff] %v725
          %791 = vst [vmem:[%s740 + $0x289] sm:$0xff] %v726
          %792 = vst [vmem:[%s740 + $0x291] sm:$0xff] %v727
          %793 = vst [vmem:[%s740 + $0x2a1] sm:$0xff] %v728
          %794 = vst [vmem:[%s740 + $0x2a9] sm:$0xff] %v729
          %795 = vst [vmem:[%s740 + $0x2b9] sm:$0xff] %v730
          %796 = vst [vmem:[%s740 + $0x2c1] sm:$0xff] %v731
          %797 = vst [vmem:[%s740 + $0x2d1] sm:$0xff] %v732
          %798 = vst [vmem:[%s740 + $0x2d9] sm:$0xff] %v733
          %799 = vst [vmem:[%s740 + $0x2e9] sm:$0xff] %v734
          %800 = vst [vmem:[%s740 + $0x2f1] sm:$0xff] %v735
          %801 = vst [vmem:[%s740 + $0x301] sm:$0xff] %v736
          %802 = vst [vmem:[%s740 + $0x309] sm:$0xff] %v737
          %803 = vst [vmem:[%s740 + $0x319] sm:$0xff] %v738
          %804 = vst [vmem:[%s740 + $0x321] sm:$0xff] %v739
        $region96: #{convmixer_block.1} parent=55 // pred_fallthru
          _
        %v805 = vld [vmem:[%s470] sm:$0x7]
        %v806 = vld [vmem:[%s470 + $0x4] sm:$0x7]
        %v807 = vld [vmem:[%s470 + $0x8] sm:$0x7]
        %v808 = vld [vmem:[%s478] sm:$0x1]
        %v809 = vld [vmem:[%s486] sm:$0x1]
        %v810 = vld [vmem:[%s494] sm:$0x1]
        %v811 = vld [vmem:[%s503] sm:$0xf]
        %v812 = vld [vmem:[%s503 + $0x4] sm:$0xf]
        %v813 = vld [vmem:[%s503 + $0x8] sm:$0xf]
        %v814 = vld [vmem:[%s503 + $0xc] sm:$0xf]
        %v815 = vld [vmem:[%s503 + $0x10] sm:$0xf]
        %v816 = vld [vmem:[%s503 + $0x14] sm:$0xf]
        %v817 = vld [vmem:[%s503 + $0x18] sm:$0xf]
        %v818 = vld [vmem:[%s503 + $0x1c] sm:$0xf]
        %v819 = vld [vmem:[%s503 + $0x20] sm:$0xf]
        %v820 = vld [vmem:[%s503 + $0x24] sm:$0xf]
        %v821 = vld [vmem:[%s503 + $0x28] sm:$0xf]
        %v822 = vld [vmem:[%s503 + $0x2c] sm:$0xf]
        %v823 = vld [vmem:[%s503 + $0x30] sm:$0xf]
        %v824 = vld [vmem:[%s503 + $0x34] sm:$0xf]
        %v825 = vld [vmem:[%s503 + $0x38] sm:$0xf]
        %v826 = vld [vmem:[%s503 + $0x3c] sm:$0xf]
        %v827 = vld [vmem:[%s511] sm:$0x1]
        %v828 = vld [vmem:[%s519] sm:$0x1]
        %v829 = vld [vmem:[%s527] sm:$0x1]
        %v830 = vld [vmem:[#allocation2] sm:$0xff]
        %v831 = vld [vmem:[#allocation2 + $0x8] sm:$0xff]
        %v832 = vld [vmem:[#allocation2 + $0x18] sm:$0xff]
        %v833 = vld [vmem:[#allocation2 + $0x20] sm:$0xff]
        %v834 = vld [vmem:[#allocation2 + $0x30] sm:$0xff]
        %v835 = vld [vmem:[#allocation2 + $0x38] sm:$0xff]
        %v836 = vld [vmem:[#allocation2 + $0x48] sm:$0xff]
        %v837 = vld [vmem:[#allocation2 + $0x50] sm:$0xff]
        %v838 = vld [vmem:[#allocation2 + $0x60] sm:$0xff]
        %v839 = vld [vmem:[#allocation2 + $0x68] sm:$0xff]
        %v840 = vld [vmem:[#allocation2 + $0x78] sm:$0xff]
        %v841 = vld [vmem:[#allocation2 + $0x80] sm:$0xff]
        %v842 = vld [vmem:[#allocation2 + $0x90] sm:$0xff]
        %v843 = vld [vmem:[#allocation2 + $0x98] sm:$0xff]
        %v844 = vld [vmem:[#allocation2 + $0xa8] sm:$0xff]
        %v845 = vld [vmem:[#allocation2 + $0xb0] sm:$0xff]
        %v846 = vld [vmem:[#allocation2 + $0xc0] sm:$0xff]
        %v847 = vld [vmem:[#allocation2 + $0xc8] sm:$0xff]
        %v848 = vld [vmem:[#allocation2 + $0xd8] sm:$0xff]
        %v849 = vld [vmem:[#allocation2 + $0xe0] sm:$0xff]
        %v850 = vld [vmem:[#allocation2 + $0xf0] sm:$0xff]
        %v851 = vld [vmem:[#allocation2 + $0xf8] sm:$0xff]
        %v852 = vld [vmem:[#allocation2 + $0x108] sm:$0xff]
        %v853 = vld [vmem:[#allocation2 + $0x110] sm:$0xff]
        %v854 = vld [vmem:[#allocation2 + $0x120] sm:$0xff]
        %v855 = vld [vmem:[#allocation2 + $0x128] sm:$0xff]
        %v856 = vld [vmem:[#allocation2 + $0x138] sm:$0xff]
        %v857 = vld [vmem:[#allocation2 + $0x140] sm:$0xff]
        %v858 = vld [vmem:[#allocation2 + $0x150] sm:$0xff]
        %v859 = vld [vmem:[#allocation2 + $0x158] sm:$0xff]
        %v860 = vld [vmem:[#allocation2 + $0x168] sm:$0xff]
        %v861 = vld [vmem:[#allocation2 + $0x170] sm:$0xff]
        %v862 = vld [vmem:[#allocation2 + $0x1b0] sm:$0xff]
        %v863 = vld [vmem:[#allocation2 + $0x1b8] sm:$0xff]
        %v864 = vld [vmem:[#allocation2 + $0x1c8] sm:$0xff]
        %v865 = vld [vmem:[#allocation2 + $0x1d0] sm:$0xff]
        %v866 = vld [vmem:[#allocation2 + $0x1e0] sm:$0xff]
        %v867 = vld [vmem:[#allocation2 + $0x1e8] sm:$0xff]
        %v868 = vld [vmem:[#allocation2 + $0x1f8] sm:$0xff]
        %v869 = vld [vmem:[#allocation2 + $0x200] sm:$0xff]
        %v870 = vld [vmem:[#allocation2 + $0x210] sm:$0xff]
        %v871 = vld [vmem:[#allocation2 + $0x218] sm:$0xff]
        %v872 = vld [vmem:[#allocation2 + $0x228] sm:$0xff]
        %v873 = vld [vmem:[#allocation2 + $0x230] sm:$0xff]
        %v874 = vld [vmem:[#allocation2 + $0x240] sm:$0xff]
        %v875 = vld [vmem:[#allocation2 + $0x248] sm:$0xff]
        %v876 = vld [vmem:[#allocation2 + $0x258] sm:$0xff]
        %v877 = vld [vmem:[#allocation2 + $0x260] sm:$0xff]
        %v878 = vld [vmem:[#allocation2 + $0x270] sm:$0xff]
        %v879 = vld [vmem:[#allocation2 + $0x278] sm:$0xff]
        %v880 = vld [vmem:[#allocation2 + $0x288] sm:$0xff]
        %v881 = vld [vmem:[#allocation2 + $0x290] sm:$0xff]
        %v882 = vld [vmem:[#allocation2 + $0x2a0] sm:$0xff]
        %v883 = vld [vmem:[#allocation2 + $0x2a8] sm:$0xff]
        %v884 = vld [vmem:[#allocation2 + $0x2b8] sm:$0xff]
        %v885 = vld [vmem:[#allocation2 + $0x2c0] sm:$0xff]
        %v886 = vld [vmem:[#allocation2 + $0x2d0] sm:$0xff]
        %v887 = vld [vmem:[#allocation2 + $0x2d8] sm:$0xff]
        %v888 = vld [vmem:[#allocation2 + $0x2e8] sm:$0xff]
        %v889 = vld [vmem:[#allocation2 + $0x2f0] sm:$0xff]
        %v890 = vld [vmem:[#allocation2 + $0x300] sm:$0xff]
        %v891 = vld [vmem:[#allocation2 + $0x308] sm:$0xff]
        %v892 = vld [vmem:[#allocation2 + $0x318] sm:$0xff]
        %v893 = vld [vmem:[#allocation2 + $0x320] sm:$0xff]
        %v894 = vlaneseq
        %v895 = vshrl.u32 %v894, 7
        %v896 = vsub.s32 0, %v895
        %v897 = vrot.slane %v805, %v896
        %v898 = vmul.f32 %v830, %v897
        %v899 = vmul.f32 %v831, %v897
        %v900 = vmul.f32 %v832, %v897
        %v901 = vmul.f32 %v833, %v897
        %v902 = vmul.f32 %v834, %v897
        %v903 = vmul.f32 %v835, %v897
        %v904 = vmul.f32 %v836, %v897
        %v905 = vmul.f32 %v837, %v897
        %v906 = vmul.f32 %v838, %v897
        %v907 = vmul.f32 %v839, %v897
        %v908 = vmul.f32 %v840, %v897
        %v909 = vmul.f32 %v841, %v897
        %v910 = vmul.f32 %v842, %v897
        %v911 = vmul.f32 %v843, %v897
        %v912 = vmul.f32 %v844, %v897
        %v913 = vmul.f32 %v845, %v897
        %v914 = vmul.f32 %v846, %v897
        %v915 = vmul.f32 %v847, %v897
        %v916 = vmul.f32 %v848, %v897
        %v917 = vmul.f32 %v849, %v897
        %v918 = vmul.f32 %v850, %v897
        %v919 = vmul.f32 %v851, %v897
        %v920 = vmul.f32 %v852, %v897
        %v921 = vmul.f32 %v853, %v897
        %v922 = vmul.f32 %v854, %v897
        %v923 = vmul.f32 %v855, %v897
        %v924 = vmul.f32 %v856, %v897
        %v925 = vmul.f32 %v857, %v897
        %v926 = vmul.f32 %v858, %v897
        %v927 = vmul.f32 %v859, %v897
        %v928 = vmul.f32 %v860, %v897
        %v929 = vmul.f32 %v861, %v897
        %v930 = vmul.f32 %v862, %v897
        %v931 = vmul.f32 %v863, %v897
        %v932 = vmul.f32 %v864, %v897
        %v933 = vmul.f32 %v865, %v897
        %v934 = vmul.f32 %v866, %v897
        %v935 = vmul.f32 %v867, %v897
        %v936 = vmul.f32 %v868, %v897
        %v937 = vmul.f32 %v869, %v897
        %v938 = vmul.f32 %v870, %v897
        %v939 = vmul.f32 %v871, %v897
        %v940 = vmul.f32 %v872, %v897
        %v941 = vmul.f32 %v873, %v897
        %v942 = vmul.f32 %v874, %v897
        %v943 = vmul.f32 %v875, %v897
        %v944 = vmul.f32 %v876, %v897
        %v945 = vmul.f32 %v877, %v897
        %v946 = vmul.f32 %v878, %v897
        %v947 = vmul.f32 %v879, %v897
        %v948 = vmul.f32 %v880, %v897
        %v949 = vmul.f32 %v881, %v897
        %v950 = vmul.f32 %v882, %v897
        %v951 = vmul.f32 %v883, %v897
        %v952 = vmul.f32 %v884, %v897
        %v953 = vmul.f32 %v885, %v897
        %v954 = vmul.f32 %v886, %v897
        %v955 = vmul.f32 %v887, %v897
        %v956 = vmul.f32 %v888, %v897
        %v957 = vmul.f32 %v889, %v897
        %v958 = vmul.f32 %v890, %v897
        %v959 = vmul.f32 %v891, %v897
        %v960 = vmul.f32 %v892, %v897
        %v961 = vmul.f32 %v893, %v897
        %v962 = vld [vmem:[#allocation2 + $0x1] sm:$0xff]
        %v963 = vld [vmem:[#allocation2 + $0x9] sm:$0xff]
        %v964 = vld [vmem:[#allocation2 + $0x19] sm:$0xff]
        %v965 = vld [vmem:[#allocation2 + $0x21] sm:$0xff]
        %v966 = vld [vmem:[#allocation2 + $0x31] sm:$0xff]
        %v967 = vld [vmem:[#allocation2 + $0x39] sm:$0xff]
        %v968 = vld [vmem:[#allocation2 + $0x49] sm:$0xff]
        %v969 = vld [vmem:[#allocation2 + $0x51] sm:$0xff]
        %v970 = vld [vmem:[#allocation2 + $0x61] sm:$0xff]
        %v971 = vld [vmem:[#allocation2 + $0x69] sm:$0xff]
        %v972 = vld [vmem:[#allocation2 + $0x79] sm:$0xff]
        %v973 = vld [vmem:[#allocation2 + $0x81] sm:$0xff]
        %v974 = vld [vmem:[#allocation2 + $0x91] sm:$0xff]
        %v975 = vld [vmem:[#allocation2 + $0x99] sm:$0xff]
        %v976 = vld [vmem:[#allocation2 + $0xa9] sm:$0xff]
        %v977 = vld [vmem:[#allocation2 + $0xb1] sm:$0xff]
        %v978 = vld [vmem:[#allocation2 + $0xc1] sm:$0xff]
        %v979 = vld [vmem:[#allocation2 + $0xc9] sm:$0xff]
        %v980 = vld [vmem:[#allocation2 + $0xd9] sm:$0xff]
        %v981 = vld [vmem:[#allocation2 + $0xe1] sm:$0xff]
        %v982 = vld [vmem:[#allocation2 + $0xf1] sm:$0xff]
        %v983 = vld [vmem:[#allocation2 + $0xf9] sm:$0xff]
        %v984 = vld [vmem:[#allocation2 + $0x109] sm:$0xff]
        %v985 = vld [vmem:[#allocation2 + $0x111] sm:$0xff]
        %v986 = vld [vmem:[#allocation2 + $0x121] sm:$0xff]
        %v987 = vld [vmem:[#allocation2 + $0x129] sm:$0xff]
        %v988 = vld [vmem:[#allocation2 + $0x139] sm:$0xff]
        %v989 = vld [vmem:[#allocation2 + $0x141] sm:$0xff]
        %v990 = vld [vmem:[#allocation2 + $0x151] sm:$0xff]
        %v991 = vld [vmem:[#allocation2 + $0x159] sm:$0xff]
        %v992 = vld [vmem:[#allocation2 + $0x169] sm:$0xff]
        %v993 = vld [vmem:[#allocation2 + $0x171] sm:$0xff]
        %v994 = vld [vmem:[#allocation2 + $0x1b1] sm:$0xff]
        %v995 = vld [vmem:[#allocation2 + $0x1b9] sm:$0xff]
        %v996 = vld [vmem:[#allocation2 + $0x1c9] sm:$0xff]
        %v997 = vld [vmem:[#allocation2 + $0x1d1] sm:$0xff]
        %v998 = vld [vmem:[#allocation2 + $0x1e1] sm:$0xff]
        %v999 = vld [vmem:[#allocation2 + $0x1e9] sm:$0xff]
        %v1000 = vld [vmem:[#allocation2 + $0x1f9] sm:$0xff]
        %v1001 = vld [vmem:[#allocation2 + $0x201] sm:$0xff]
        %v1002 = vld [vmem:[#allocation2 + $0x211] sm:$0xff]
        %v1003 = vld [vmem:[#allocation2 + $0x219] sm:$0xff]
        %v1004 = vld [vmem:[#allocation2 + $0x229] sm:$0xff]
        %v1005 = vld [vmem:[#allocation2 + $0x231] sm:$0xff]
        %v1006 = vld [vmem:[#allocation2 + $0x241] sm:$0xff]
        %v1007 = vld [vmem:[#allocation2 + $0x249] sm:$0xff]
        %v1008 = vld [vmem:[#allocation2 + $0x259] sm:$0xff]
        %v1009 = vld [vmem:[#allocation2 + $0x261] sm:$0xff]
        %v1010 = vld [vmem:[#allocation2 + $0x271] sm:$0xff]
        %v1011 = vld [vmem:[#allocation2 + $0x279] sm:$0xff]
        %v1012 = vld [vmem:[#allocation2 + $0x289] sm:$0xff]
        %v1013 = vld [vmem:[#allocation2 + $0x291] sm:$0xff]
        %v1014 = vld [vmem:[#allocation2 + $0x2a1] sm:$0xff]
        %v1015 = vld [vmem:[#allocation2 + $0x2a9] sm:$0xff]
        %v1016 = vld [vmem:[#allocation2 + $0x2b9] sm:$0xff]
        %v1017 = vld [vmem:[#allocation2 + $0x2c1] sm:$0xff]
        %v1018 = vld [vmem:[#allocation2 + $0x2d1] sm:$0xff]
        %v1019 = vld [vmem:[#allocation2 + $0x2d9] sm:$0xff]
        %v1020 = vld [vmem:[#allocation2 + $0x2e9] sm:$0xff]
        %v1021 = vld [vmem:[#allocation2 + $0x2f1] sm:$0xff]
        %v1022 = vld [vmem:[#allocation2 + $0x301] sm:$0xff]
        %v1023 = vld [vmem:[#allocation2 + $0x309] sm:$0xff]
        %v1024 = vld [vmem:[#allocation2 + $0x319] sm:$0xff]
        %v1025 = vld [vmem:[#allocation2 + $0x321] sm:$0xff]
        %v1026 = vlaneseq
        %v1027 = vshrl.u32 %v1026, 7
        %v1028 = vsub.s32 1, %v1027
        %v1029 = vrot.slane %v805, %v1028
        %v1030 = vmul.f32 %v962, %v1029
        %v1031 = vmul.f32 %v963, %v1029
        %v1032 = vmul.f32 %v964, %v1029
        %v1033 = vmul.f32 %v965, %v1029
        %v1034 = vmul.f32 %v966, %v1029
        %v1035 = vmul.f32 %v967, %v1029
        %v1036 = vmul.f32 %v968, %v1029
        %v1037 = vmul.f32 %v969, %v1029
        %v1038 = vmul.f32 %v970, %v1029
        %v1039 = vmul.f32 %v971, %v1029
        %v1040 = vmul.f32 %v972, %v1029
        %v1041 = vmul.f32 %v973, %v1029
        %v1042 = vmul.f32 %v974, %v1029
        %v1043 = vmul.f32 %v975, %v1029
        %v1044 = vmul.f32 %v976, %v1029
        %v1045 = vmul.f32 %v977, %v1029
        %v1046 = vmul.f32 %v978, %v1029
        %v1047 = vmul.f32 %v979, %v1029
        %v1048 = vmul.f32 %v980, %v1029
        %v1049 = vmul.f32 %v981, %v1029
        %v1050 = vmul.f32 %v982, %v1029
        %v1051 = vmul.f32 %v983, %v1029
        %v1052 = vmul.f32 %v984, %v1029
        %v1053 = vmul.f32 %v985, %v1029
        %v1054 = vmul.f32 %v986, %v1029
        %v1055 = vmul.f32 %v987, %v1029
        %v1056 = vmul.f32 %v988, %v1029
        %v1057 = vmul.f32 %v989, %v1029
        %v1058 = vmul.f32 %v990, %v1029
        %v1059 = vmul.f32 %v991, %v1029
        %v1060 = vmul.f32 %v992, %v1029
        %v1061 = vmul.f32 %v993, %v1029
        %v1062 = vmul.f32 %v994, %v1029
        %v1063 = vmul.f32 %v995, %v1029
        %v1064 = vmul.f32 %v996, %v1029
        %v1065 = vmul.f32 %v997, %v1029
        %v1066 = vmul.f32 %v998, %v1029
        %v1067 = vmul.f32 %v999, %v1029
        %v1068 = vmul.f32 %v1000, %v1029
        %v1069 = vmul.f32 %v1001, %v1029
        %v1070 = vmul.f32 %v1002, %v1029
        %v1071 = vmul.f32 %v1003, %v1029
        %v1072 = vmul.f32 %v1004, %v1029
        %v1073 = vmul.f32 %v1005, %v1029
        %v1074 = vmul.f32 %v1006, %v1029
        %v1075 = vmul.f32 %v1007, %v1029
        %v1076 = vmul.f32 %v1008, %v1029
        %v1077 = vmul.f32 %v1009, %v1029
        %v1078 = vmul.f32 %v1010, %v1029
        %v1079 = vmul.f32 %v1011, %v1029
        %v1080 = vmul.f32 %v1012, %v1029
        %v1081 = vmul.f32 %v1013, %v1029
        %v1082 = vmul.f32 %v1014, %v1029
        %v1083 = vmul.f32 %v1015, %v1029
        %v1084 = vmul.f32 %v1016, %v1029
        %v1085 = vmul.f32 %v1017, %v1029
        %v1086 = vmul.f32 %v1018, %v1029
        %v1087 = vmul.f32 %v1019, %v1029
        %v1088 = vmul.f32 %v1020, %v1029
        %v1089 = vmul.f32 %v1021, %v1029
        %v1090 = vmul.f32 %v1022, %v1029
        %v1091 = vmul.f32 %v1023, %v1029
        %v1092 = vmul.f32 %v1024, %v1029
        %v1093 = vmul.f32 %v1025, %v1029
        %v1094 = vadd.f32 %v898, %v1030
        %v1095 = vadd.f32 %v899, %v1031
        %v1096 = vadd.f32 %v900, %v1032
        %v1097 = vadd.f32 %v901, %v1033
        %v1098 = vadd.f32 %v902, %v1034
        %v1099 = vadd.f32 %v903, %v1035
        %v1100 = vadd.f32 %v904, %v1036
        %v1101 = vadd.f32 %v905, %v1037
        %v1102 = vadd.f32 %v906, %v1038
        %v1103 = vadd.f32 %v907, %v1039
        %v1104 = vadd.f32 %v908, %v1040
        %v1105 = vadd.f32 %v909, %v1041
        %v1106 = vadd.f32 %v910, %v1042
        %v1107 = vadd.f32 %v911, %v1043
        %v1108 = vadd.f32 %v912, %v1044
        %v1109 = vadd.f32 %v913, %v1045
        %v1110 = vadd.f32 %v914, %v1046
        %v1111 = vadd.f32 %v915, %v1047
        %v1112 = vadd.f32 %v916, %v1048
        %v1113 = vadd.f32 %v917, %v1049
        %v1114 = vadd.f32 %v918, %v1050
        %v1115 = vadd.f32 %v919, %v1051
        %v1116 = vadd.f32 %v920, %v1052
        %v1117 = vadd.f32 %v921, %v1053
        %v1118 = vadd.f32 %v922, %v1054
        %v1119 = vadd.f32 %v923, %v1055
        %v1120 = vadd.f32 %v924, %v1056
        %v1121 = vadd.f32 %v925, %v1057
        %v1122 = vadd.f32 %v926, %v1058
        %v1123 = vadd.f32 %v927, %v1059
        %v1124 = vadd.f32 %v928, %v1060
        %v1125 = vadd.f32 %v929, %v1061
        %v1126 = vadd.f32 %v930, %v1062
        %v1127 = vadd.f32 %v931, %v1063
        %v1128 = vadd.f32 %v932, %v1064
        %v1129 = vadd.f32 %v933, %v1065
        %v1130 = vadd.f32 %v934, %v1066
        %v1131 = vadd.f32 %v935, %v1067
        %v1132 = vadd.f32 %v936, %v1068
        %v1133 = vadd.f32 %v937, %v1069
        %v1134 = vadd.f32 %v938, %v1070
        %v1135 = vadd.f32 %v939, %v1071
        %v1136 = vadd.f32 %v940, %v1072
        %v1137 = vadd.f32 %v941, %v1073
        %v1138 = vadd.f32 %v942, %v1074
        %v1139 = vadd.f32 %v943, %v1075
        %v1140 = vadd.f32 %v944, %v1076
        %v1141 = vadd.f32 %v945, %v1077
        %v1142 = vadd.f32 %v946, %v1078
        %v1143 = vadd.f32 %v947, %v1079
        %v1144 = vadd.f32 %v948, %v1080
        %v1145 = vadd.f32 %v949, %v1081
        %v1146 = vadd.f32 %v950, %v1082
        %v1147 = vadd.f32 %v951, %v1083
        %v1148 = vadd.f32 %v952, %v1084
        %v1149 = vadd.f32 %v953, %v1085
        %v1150 = vadd.f32 %v954, %v1086
        %v1151 = vadd.f32 %v955, %v1087
        %v1152 = vadd.f32 %v956, %v1088
        %v1153 = vadd.f32 %v957, %v1089
        %v1154 = vadd.f32 %v958, %v1090
        %v1155 = vadd.f32 %v959, %v1091
        %v1156 = vadd.f32 %v960, %v1092
        %v1157 = vadd.f32 %v961, %v1093
        %v1158 = vld [vmem:[#allocation2 + $0x2] sm:$0xff]
        %v1159 = vld [vmem:[#allocation2 + $0xa] sm:$0xff]
        %v1160 = vld [vmem:[#allocation2 + $0x1a] sm:$0xff]
        %v1161 = vld [vmem:[#allocation2 + $0x22] sm:$0xff]
        %v1162 = vld [vmem:[#allocation2 + $0x32] sm:$0xff]
        %v1163 = vld [vmem:[#allocation2 + $0x3a] sm:$0xff]
        %v1164 = vld [vmem:[#allocation2 + $0x4a] sm:$0xff]
        %v1165 = vld [vmem:[#allocation2 + $0x52] sm:$0xff]
        %v1166 = vld [vmem:[#allocation2 + $0x62] sm:$0xff]
        %v1167 = vld [vmem:[#allocation2 + $0x6a] sm:$0xff]
        %v1168 = vld [vmem:[#allocation2 + $0x7a] sm:$0xff]
        %v1169 = vld [vmem:[#allocation2 + $0x82] sm:$0xff]
        %v1170 = vld [vmem:[#allocation2 + $0x92] sm:$0xff]
        %v1171 = vld [vmem:[#allocation2 + $0x9a] sm:$0xff]
        %v1172 = vld [vmem:[#allocation2 + $0xaa] sm:$0xff]
        %v1173 = vld [vmem:[#allocation2 + $0xb2] sm:$0xff]
        %v1174 = vld [vmem:[#allocation2 + $0xc2] sm:$0xff]
        %v1175 = vld [vmem:[#allocation2 + $0xca] sm:$0xff]
        %v1176 = vld [vmem:[#allocation2 + $0xda] sm:$0xff]
        %v1177 = vld [vmem:[#allocation2 + $0xe2] sm:$0xff]
        %v1178 = vld [vmem:[#allocation2 + $0xf2] sm:$0xff]
        %v1179 = vld [vmem:[#allocation2 + $0xfa] sm:$0xff]
        %v1180 = vld [vmem:[#allocation2 + $0x10a] sm:$0xff]
        %v1181 = vld [vmem:[#allocation2 + $0x112] sm:$0xff]
        %v1182 = vld [vmem:[#allocation2 + $0x122] sm:$0xff]
        %v1183 = vld [vmem:[#allocation2 + $0x12a] sm:$0xff]
        %v1184 = vld [vmem:[#allocation2 + $0x13a] sm:$0xff]
        %v1185 = vld [vmem:[#allocation2 + $0x142] sm:$0xff]
        %v1186 = vld [vmem:[#allocation2 + $0x152] sm:$0xff]
        %v1187 = vld [vmem:[#allocation2 + $0x15a] sm:$0xff]
        %v1188 = vld [vmem:[#allocation2 + $0x16a] sm:$0xff]
        %v1189 = vld [vmem:[#allocation2 + $0x172] sm:$0xff]
        %v1190 = vld [vmem:[#allocation2 + $0x1b2] sm:$0xff]
        %v1191 = vld [vmem:[#allocation2 + $0x1ba] sm:$0xff]
        %v1192 = vld [vmem:[#allocation2 + $0x1ca] sm:$0xff]
        %v1193 = vld [vmem:[#allocation2 + $0x1d2] sm:$0xff]
        %v1194 = vld [vmem:[#allocation2 + $0x1e2] sm:$0xff]
        %v1195 = vld [vmem:[#allocation2 + $0x1ea] sm:$0xff]
        %v1196 = vld [vmem:[#allocation2 + $0x1fa] sm:$0xff]
        %v1197 = vld [vmem:[#allocation2 + $0x202] sm:$0xff]
        %v1198 = vld [vmem:[#allocation2 + $0x212] sm:$0xff]
        %v1199 = vld [vmem:[#allocation2 + $0x21a] sm:$0xff]
        %v1200 = vld [vmem:[#allocation2 + $0x22a] sm:$0xff]
        %v1201 = vld [vmem:[#allocation2 + $0x232] sm:$0xff]
        %v1202 = vld [vmem:[#allocation2 + $0x242] sm:$0xff]
        %v1203 = vld [vmem:[#allocation2 + $0x24a] sm:$0xff]
        %v1204 = vld [vmem:[#allocation2 + $0x25a] sm:$0xff]
        %v1205 = vld [vmem:[#allocation2 + $0x262] sm:$0xff]
        %v1206 = vld [vmem:[#allocation2 + $0x272] sm:$0xff]
        %v1207 = vld [vmem:[#allocation2 + $0x27a] sm:$0xff]
        %v1208 = vld [vmem:[#allocation2 + $0x28a] sm:$0xff]
        %v1209 = vld [vmem:[#allocation2 + $0x292] sm:$0xff]
        %v1210 = vld [vmem:[#allocation2 + $0x2a2] sm:$0xff]
        %v1211 = vld [vmem:[#allocation2 + $0x2aa] sm:$0xff]
        %v1212 = vld [vmem:[#allocation2 + $0x2ba] sm:$0xff]
        %v1213 = vld [vmem:[#allocation2 + $0x2c2] sm:$0xff]
        %v1214 = vld [vmem:[#allocation2 + $0x2d2] sm:$0xff]
        %v1215 = vld [vmem:[#allocation2 + $0x2da] sm:$0xff]
        %v1216 = vld [vmem:[#allocation2 + $0x2ea] sm:$0xff]
        %v1217 = vld [vmem:[#allocation2 + $0x2f2] sm:$0xff]
        %v1218 = vld [vmem:[#allocation2 + $0x302] sm:$0xff]
        %v1219 = vld [vmem:[#allocation2 + $0x30a] sm:$0xff]
        %v1220 = vld [vmem:[#allocation2 + $0x31a] sm:$0xff]
        %v1221 = vld [vmem:[#allocation2 + $0x322] sm:$0xff]
        %v1222 = vlaneseq
        %v1223 = vshrl.u32 %v1222, 7
        %v1224 = vsub.s32 2, %v1223
        %v1225 = vrot.slane %v805, %v1224
        %v1226 = vmul.f32 %v1158, %v1225
        %v1227 = vmul.f32 %v1159, %v1225
        %v1228 = vmul.f32 %v1160, %v1225
        %v1229 = vmul.f32 %v1161, %v1225
        %v1230 = vmul.f32 %v1162, %v1225
        %v1231 = vmul.f32 %v1163, %v1225
        %v1232 = vmul.f32 %v1164, %v1225
        %v1233 = vmul.f32 %v1165, %v1225
        %v1234 = vmul.f32 %v1166, %v1225
        %v1235 = vmul.f32 %v1167, %v1225
        %v1236 = vmul.f32 %v1168, %v1225
        %v1237 = vmul.f32 %v1169, %v1225
        %v1238 = vmul.f32 %v1170, %v1225
        %v1239 = vmul.f32 %v1171, %v1225
        %v1240 = vmul.f32 %v1172, %v1225
        %v1241 = vmul.f32 %v1173, %v1225
        %v1242 = vmul.f32 %v1174, %v1225
        %v1243 = vmul.f32 %v1175, %v1225
        %v1244 = vmul.f32 %v1176, %v1225
        %v1245 = vmul.f32 %v1177, %v1225
        %v1246 = vmul.f32 %v1178, %v1225
        %v1247 = vmul.f32 %v1179, %v1225
        %v1248 = vmul.f32 %v1180, %v1225
        %v1249 = vmul.f32 %v1181, %v1225
        %v1250 = vmul.f32 %v1182, %v1225
        %v1251 = vmul.f32 %v1183, %v1225
        %v1252 = vmul.f32 %v1184, %v1225
        %v1253 = vmul.f32 %v1185, %v1225
        %v1254 = vmul.f32 %v1186, %v1225
        %v1255 = vmul.f32 %v1187, %v1225
        %v1256 = vmul.f32 %v1188, %v1225
        %v1257 = vmul.f32 %v1189, %v1225
        %v1258 = vmul.f32 %v1190, %v1225
        %v1259 = vmul.f32 %v1191, %v1225
        %v1260 = vmul.f32 %v1192, %v1225
        %v1261 = vmul.f32 %v1193, %v1225
        %v1262 = vmul.f32 %v1194, %v1225
        %v1263 = vmul.f32 %v1195, %v1225
        %v1264 = vmul.f32 %v1196, %v1225
        %v1265 = vmul.f32 %v1197, %v1225
        %v1266 = vmul.f32 %v1198, %v1225
        %v1267 = vmul.f32 %v1199, %v1225
        %v1268 = vmul.f32 %v1200, %v1225
        %v1269 = vmul.f32 %v1201, %v1225
        %v1270 = vmul.f32 %v1202, %v1225
        %v1271 = vmul.f32 %v1203, %v1225
        %v1272 = vmul.f32 %v1204, %v1225
        %v1273 = vmul.f32 %v1205, %v1225
        %v1274 = vmul.f32 %v1206, %v1225
        %v1275 = vmul.f32 %v1207, %v1225
        %v1276 = vmul.f32 %v1208, %v1225
        %v1277 = vmul.f32 %v1209, %v1225
        %v1278 = vmul.f32 %v1210, %v1225
        %v1279 = vmul.f32 %v1211, %v1225
        %v1280 = vmul.f32 %v1212, %v1225
        %v1281 = vmul.f32 %v1213, %v1225
        %v1282 = vmul.f32 %v1214, %v1225
        %v1283 = vmul.f32 %v1215, %v1225
        %v1284 = vmul.f32 %v1216, %v1225
        %v1285 = vmul.f32 %v1217, %v1225
        %v1286 = vmul.f32 %v1218, %v1225
        %v1287 = vmul.f32 %v1219, %v1225
        %v1288 = vmul.f32 %v1220, %v1225
        %v1289 = vmul.f32 %v1221, %v1225
        %v1290 = vadd.f32 %v1094, %v1226
        %v1291 = vadd.f32 %v1095, %v1227
        %v1292 = vadd.f32 %v1096, %v1228
        %v1293 = vadd.f32 %v1097, %v1229
        %v1294 = vadd.f32 %v1098, %v1230
        %v1295 = vadd.f32 %v1099, %v1231
        %v1296 = vadd.f32 %v1100, %v1232
        %v1297 = vadd.f32 %v1101, %v1233
        %v1298 = vadd.f32 %v1102, %v1234
        %v1299 = vadd.f32 %v1103, %v1235
        %v1300 = vadd.f32 %v1104, %v1236
        %v1301 = vadd.f32 %v1105, %v1237
        %v1302 = vadd.f32 %v1106, %v1238
        %v1303 = vadd.f32 %v1107, %v1239
        %v1304 = vadd.f32 %v1108, %v1240
        %v1305 = vadd.f32 %v1109, %v1241
        %v1306 = vadd.f32 %v1110, %v1242
        %v1307 = vadd.f32 %v1111, %v1243
        %v1308 = vadd.f32 %v1112, %v1244
        %v1309 = vadd.f32 %v1113, %v1245
        %v1310 = vadd.f32 %v1114, %v1246
        %v1311 = vadd.f32 %v1115, %v1247
        %v1312 = vadd.f32 %v1116, %v1248
        %v1313 = vadd.f32 %v1117, %v1249
        %v1314 = vadd.f32 %v1118, %v1250
        %v1315 = vadd.f32 %v1119, %v1251
        %v1316 = vadd.f32 %v1120, %v1252
        %v1317 = vadd.f32 %v1121, %v1253
        %v1318 = vadd.f32 %v1122, %v1254
        %v1319 = vadd.f32 %v1123, %v1255
        %v1320 = vadd.f32 %v1124, %v1256
        %v1321 = vadd.f32 %v1125, %v1257
        %v1322 = vadd.f32 %v1126, %v1258
        %v1323 = vadd.f32 %v1127, %v1259
        %v1324 = vadd.f32 %v1128, %v1260
        %v1325 = vadd.f32 %v1129, %v1261
        %v1326 = vadd.f32 %v1130, %v1262
        %v1327 = vadd.f32 %v1131, %v1263
        %v1328 = vadd.f32 %v1132, %v1264
        %v1329 = vadd.f32 %v1133, %v1265
        %v1330 = vadd.f32 %v1134, %v1266
        %v1331 = vadd.f32 %v1135, %v1267
        %v1332 = vadd.f32 %v1136, %v1268
        %v1333 = vadd.f32 %v1137, %v1269
        %v1334 = vadd.f32 %v1138, %v1270
        %v1335 = vadd.f32 %v1139, %v1271
        %v1336 = vadd.f32 %v1140, %v1272
        %v1337 = vadd.f32 %v1141, %v1273
        %v1338 = vadd.f32 %v1142, %v1274
        %v1339 = vadd.f32 %v1143, %v1275
        %v1340 = vadd.f32 %v1144, %v1276
        %v1341 = vadd.f32 %v1145, %v1277
        %v1342 = vadd.f32 %v1146, %v1278
        %v1343 = vadd.f32 %v1147, %v1279
        %v1344 = vadd.f32 %v1148, %v1280
        %v1345 = vadd.f32 %v1149, %v1281
        %v1346 = vadd.f32 %v1150, %v1282
        %v1347 = vadd.f32 %v1151, %v1283
        %v1348 = vadd.f32 %v1152, %v1284
        %v1349 = vadd.f32 %v1153, %v1285
        %v1350 = vadd.f32 %v1154, %v1286
        %v1351 = vadd.f32 %v1155, %v1287
        %v1352 = vadd.f32 %v1156, %v1288
        %v1353 = vadd.f32 %v1157, %v1289
        %s1354 = scalar_lea.vmem [#allocation2], 24
        %v1355 = vld [vmem:[%s1354] sm:$0xff]
        %v1356 = vld [vmem:[%s1354 + $0x8] sm:$0xff]
        %v1357 = vld [vmem:[%s1354 + $0x18] sm:$0xff]
        %v1358 = vld [vmem:[%s1354 + $0x20] sm:$0xff]
        %v1359 = vld [vmem:[%s1354 + $0x30] sm:$0xff]
        %v1360 = vld [vmem:[%s1354 + $0x38] sm:$0xff]
        %v1361 = vld [vmem:[%s1354 + $0x48] sm:$0xff]
        %v1362 = vld [vmem:[%s1354 + $0x50] sm:$0xff]
        %v1363 = vld [vmem:[%s1354 + $0x60] sm:$0xff]
        %v1364 = vld [vmem:[%s1354 + $0x68] sm:$0xff]
        %v1365 = vld [vmem:[%s1354 + $0x78] sm:$0xff]
        %v1366 = vld [vmem:[%s1354 + $0x80] sm:$0xff]
        %v1367 = vld [vmem:[%s1354 + $0x90] sm:$0xff]
        %v1368 = vld [vmem:[%s1354 + $0x98] sm:$0xff]
        %v1369 = vld [vmem:[%s1354 + $0xa8] sm:$0xff]
        %v1370 = vld [vmem:[%s1354 + $0xb0] sm:$0xff]
        %v1371 = vld [vmem:[%s1354 + $0xc0] sm:$0xff]
        %v1372 = vld [vmem:[%s1354 + $0xc8] sm:$0xff]
        %v1373 = vld [vmem:[%s1354 + $0xd8] sm:$0xff]
        %v1374 = vld [vmem:[%s1354 + $0xe0] sm:$0xff]
        %v1375 = vld [vmem:[%s1354 + $0xf0] sm:$0xff]
        %v1376 = vld [vmem:[%s1354 + $0xf8] sm:$0xff]
        %v1377 = vld [vmem:[%s1354 + $0x108] sm:$0xff]
        %v1378 = vld [vmem:[%s1354 + $0x110] sm:$0xff]
        %v1379 = vld [vmem:[%s1354 + $0x120] sm:$0xff]
        %v1380 = vld [vmem:[%s1354 + $0x128] sm:$0xff]
        %v1381 = vld [vmem:[%s1354 + $0x138] sm:$0xff]
        %v1382 = vld [vmem:[%s1354 + $0x140] sm:$0xff]
        %v1383 = vld [vmem:[%s1354 + $0x150] sm:$0xff]
        %v1384 = vld [vmem:[%s1354 + $0x158] sm:$0xff]
        %v1385 = vld [vmem:[%s1354 + $0x168] sm:$0xff]
        %v1386 = vld [vmem:[%s1354 + $0x170] sm:$0xff]
        %v1387 = vld [vmem:[%s1354 + $0x1b0] sm:$0xff]
        %v1388 = vld [vmem:[%s1354 + $0x1b8] sm:$0xff]
        %v1389 = vld [vmem:[%s1354 + $0x1c8] sm:$0xff]
        %v1390 = vld [vmem:[%s1354 + $0x1d0] sm:$0xff]
        %v1391 = vld [vmem:[%s1354 + $0x1e0] sm:$0xff]
        %v1392 = vld [vmem:[%s1354 + $0x1e8] sm:$0xff]
        %v1393 = vld [vmem:[%s1354 + $0x1f8] sm:$0xff]
        %v1394 = vld [vmem:[%s1354 + $0x200] sm:$0xff]
        %v1395 = vld [vmem:[%s1354 + $0x210] sm:$0xff]
        %v1396 = vld [vmem:[%s1354 + $0x218] sm:$0xff]
        %v1397 = vld [vmem:[%s1354 + $0x228] sm:$0xff]
        %v1398 = vld [vmem:[%s1354 + $0x230] sm:$0xff]
        %v1399 = vld [vmem:[%s1354 + $0x240] sm:$0xff]
        %v1400 = vld [vmem:[%s1354 + $0x248] sm:$0xff]
        %v1401 = vld [vmem:[%s1354 + $0x258] sm:$0xff]
        %v1402 = vld [vmem:[%s1354 + $0x260] sm:$0xff]
        %v1403 = vld [vmem:[%s1354 + $0x270] sm:$0xff]
        %v1404 = vld [vmem:[%s1354 + $0x278] sm:$0xff]
        %v1405 = vld [vmem:[%s1354 + $0x288] sm:$0xff]
        %v1406 = vld [vmem:[%s1354 + $0x290] sm:$0xff]
        %v1407 = vld [vmem:[%s1354 + $0x2a0] sm:$0xff]
        %v1408 = vld [vmem:[%s1354 + $0x2a8] sm:$0xff]
        %v1409 = vld [vmem:[%s1354 + $0x2b8] sm:$0xff]
        %v1410 = vld [vmem:[%s1354 + $0x2c0] sm:$0xff]
        %v1411 = vld [vmem:[%s1354 + $0x2d0] sm:$0xff]
        %v1412 = vld [vmem:[%s1354 + $0x2d8] sm:$0xff]
        %v1413 = vld [vmem:[%s1354 + $0x2e8] sm:$0xff]
        %v1414 = vld [vmem:[%s1354 + $0x2f0] sm:$0xff]
        %v1415 = vld [vmem:[%s1354 + $0x300] sm:$0xff]
        %v1416 = vld [vmem:[%s1354 + $0x308] sm:$0xff]
        %v1417 = vld [vmem:[%s1354 + $0x318] sm:$0xff]
        %v1418 = vld [vmem:[%s1354 + $0x320] sm:$0xff]
        %v1419 = vlaneseq
        %v1420 = vshrl.u32 %v1419, 7
        %v1421 = vsub.s32 0, %v1420
        %v1422 = vrot.slane %v806, %v1421
        %v1423 = vmul.f32 %v1355, %v1422
        %v1424 = vmul.f32 %v1356, %v1422
        %v1425 = vmul.f32 %v1357, %v1422
        %v1426 = vmul.f32 %v1358, %v1422
        %v1427 = vmul.f32 %v1359, %v1422
        %v1428 = vmul.f32 %v1360, %v1422
        %v1429 = vmul.f32 %v1361, %v1422
        %v1430 = vmul.f32 %v1362, %v1422
        %v1431 = vmul.f32 %v1363, %v1422
        %v1432 = vmul.f32 %v1364, %v1422
        %v1433 = vmul.f32 %v1365, %v1422
        %v1434 = vmul.f32 %v1366, %v1422
        %v1435 = vmul.f32 %v1367, %v1422
        %v1436 = vmul.f32 %v1368, %v1422
        %v1437 = vmul.f32 %v1369, %v1422
        %v1438 = vmul.f32 %v1370, %v1422
        %v1439 = vmul.f32 %v1371, %v1422
        %v1440 = vmul.f32 %v1372, %v1422
        %v1441 = vmul.f32 %v1373, %v1422
        %v1442 = vmul.f32 %v1374, %v1422
        %v1443 = vmul.f32 %v1375, %v1422
        %v1444 = vmul.f32 %v1376, %v1422
        %v1445 = vmul.f32 %v1377, %v1422
        %v1446 = vmul.f32 %v1378, %v1422
        %v1447 = vmul.f32 %v1379, %v1422
        %v1448 = vmul.f32 %v1380, %v1422
        %v1449 = vmul.f32 %v1381, %v1422
        %v1450 = vmul.f32 %v1382, %v1422
        %v1451 = vmul.f32 %v1383, %v1422
        %v1452 = vmul.f32 %v1384, %v1422
        %v1453 = vmul.f32 %v1385, %v1422
        %v1454 = vmul.f32 %v1386, %v1422
        %v1455 = vmul.f32 %v1387, %v1422
        %v1456 = vmul.f32 %v1388, %v1422
        %v1457 = vmul.f32 %v1389, %v1422
        %v1458 = vmul.f32 %v1390, %v1422
        %v1459 = vmul.f32 %v1391, %v1422
        %v1460 = vmul.f32 %v1392, %v1422
        %v1461 = vmul.f32 %v1393, %v1422
        %v1462 = vmul.f32 %v1394, %v1422
        %v1463 = vmul.f32 %v1395, %v1422
        %v1464 = vmul.f32 %v1396, %v1422
        %v1465 = vmul.f32 %v1397, %v1422
        %v1466 = vmul.f32 %v1398, %v1422
        %v1467 = vmul.f32 %v1399, %v1422
        %v1468 = vmul.f32 %v1400, %v1422
        %v1469 = vmul.f32 %v1401, %v1422
        %v1470 = vmul.f32 %v1402, %v1422
        %v1471 = vmul.f32 %v1403, %v1422
        %v1472 = vmul.f32 %v1404, %v1422
        %v1473 = vmul.f32 %v1405, %v1422
        %v1474 = vmul.f32 %v1406, %v1422
        %v1475 = vmul.f32 %v1407, %v1422
        %v1476 = vmul.f32 %v1408, %v1422
        %v1477 = vmul.f32 %v1409, %v1422
        %v1478 = vmul.f32 %v1410, %v1422
        %v1479 = vmul.f32 %v1411, %v1422
        %v1480 = vmul.f32 %v1412, %v1422
        %v1481 = vmul.f32 %v1413, %v1422
        %v1482 = vmul.f32 %v1414, %v1422
        %v1483 = vmul.f32 %v1415, %v1422
        %v1484 = vmul.f32 %v1416, %v1422
        %v1485 = vmul.f32 %v1417, %v1422
        %v1486 = vmul.f32 %v1418, %v1422
        %v1487 = vadd.f32 %v1290, %v1423
        %v1488 = vadd.f32 %v1291, %v1424
        %v1489 = vadd.f32 %v1292, %v1425
        %v1490 = vadd.f32 %v1293, %v1426
        %v1491 = vadd.f32 %v1294, %v1427
        %v1492 = vadd.f32 %v1295, %v1428
        %v1493 = vadd.f32 %v1296, %v1429
        %v1494 = vadd.f32 %v1297, %v1430
        %v1495 = vadd.f32 %v1298, %v1431
        %v1496 = vadd.f32 %v1299, %v1432
        %v1497 = vadd.f32 %v1300, %v1433
        %v1498 = vadd.f32 %v1301, %v1434
        %v1499 = vadd.f32 %v1302, %v1435
        %v1500 = vadd.f32 %v1303, %v1436
        %v1501 = vadd.f32 %v1304, %v1437
        %v1502 = vadd.f32 %v1305, %v1438
        %v1503 = vadd.f32 %v1306, %v1439
        %v1504 = vadd.f32 %v1307, %v1440
        %v1505 = vadd.f32 %v1308, %v1441
        %v1506 = vadd.f32 %v1309, %v1442
        %v1507 = vadd.f32 %v1310, %v1443
        %v1508 = vadd.f32 %v1311, %v1444
        %v1509 = vadd.f32 %v1312, %v1445
        %v1510 = vadd.f32 %v1313, %v1446
        %v1511 = vadd.f32 %v1314, %v1447
        %v1512 = vadd.f32 %v1315, %v1448
        %v1513 = vadd.f32 %v1316, %v1449
        %v1514 = vadd.f32 %v1317, %v1450
        %v1515 = vadd.f32 %v1318, %v1451
        %v1516 = vadd.f32 %v1319, %v1452
        %v1517 = vadd.f32 %v1320, %v1453
        %v1518 = vadd.f32 %v1321, %v1454
        %v1519 = vadd.f32 %v1322, %v1455
        %v1520 = vadd.f32 %v1323, %v1456
        %v1521 = vadd.f32 %v1324, %v1457
        %v1522 = vadd.f32 %v1325, %v1458
        %v1523 = vadd.f32 %v1326, %v1459
        %v1524 = vadd.f32 %v1327, %v1460
        %v1525 = vadd.f32 %v1328, %v1461
        %v1526 = vadd.f32 %v1329, %v1462
        %v1527 = vadd.f32 %v1330, %v1463
        %v1528 = vadd.f32 %v1331, %v1464
        %v1529 = vadd.f32 %v1332, %v1465
        %v1530 = vadd.f32 %v1333, %v1466
        %v1531 = vadd.f32 %v1334, %v1467
        %v1532 = vadd.f32 %v1335, %v1468
        %v1533 = vadd.f32 %v1336, %v1469
        %v1534 = vadd.f32 %v1337, %v1470
        %v1535 = vadd.f32 %v1338, %v1471
        %v1536 = vadd.f32 %v1339, %v1472
        %v1537 = vadd.f32 %v1340, %v1473
        %v1538 = vadd.f32 %v1341, %v1474
        %v1539 = vadd.f32 %v1342, %v1475
        %v1540 = vadd.f32 %v1343, %v1476
        %v1541 = vadd.f32 %v1344, %v1477
        %v1542 = vadd.f32 %v1345, %v1478
        %v1543 = vadd.f32 %v1346, %v1479
        %v1544 = vadd.f32 %v1347, %v1480
        %v1545 = vadd.f32 %v1348, %v1481
        %v1546 = vadd.f32 %v1349, %v1482
        %v1547 = vadd.f32 %v1350, %v1483
        %v1548 = vadd.f32 %v1351, %v1484
        %v1549 = vadd.f32 %v1352, %v1485
        %v1550 = vadd.f32 %v1353, %v1486
        %v1551 = vld [vmem:[%s1354 + $0x1] sm:$0xff]
        %v1552 = vld [vmem:[%s1354 + $0x9] sm:$0xff]
        %v1553 = vld [vmem:[%s1354 + $0x19] sm:$0xff]
        %v1554 = vld [vmem:[%s1354 + $0x21] sm:$0xff]
        %v1555 = vld [vmem:[%s1354 + $0x31] sm:$0xff]
        %v1556 = vld [vmem:[%s1354 + $0x39] sm:$0xff]
        %v1557 = vld [vmem:[%s1354 + $0x49] sm:$0xff]
        %v1558 = vld [vmem:[%s1354 + $0x51] sm:$0xff]
        %v1559 = vld [vmem:[%s1354 + $0x61] sm:$0xff]
        %v1560 = vld [vmem:[%s1354 + $0x69] sm:$0xff]
        %v1561 = vld [vmem:[%s1354 + $0x79] sm:$0xff]
        %v1562 = vld [vmem:[%s1354 + $0x81] sm:$0xff]
        %v1563 = vld [vmem:[%s1354 + $0x91] sm:$0xff]
        %v1564 = vld [vmem:[%s1354 + $0x99] sm:$0xff]
        %v1565 = vld [vmem:[%s1354 + $0xa9] sm:$0xff]
        %v1566 = vld [vmem:[%s1354 + $0xb1] sm:$0xff]
        %v1567 = vld [vmem:[%s1354 + $0xc1] sm:$0xff]
        %v1568 = vld [vmem:[%s1354 + $0xc9] sm:$0xff]
        %v1569 = vld [vmem:[%s1354 + $0xd9] sm:$0xff]
        %v1570 = vld [vmem:[%s1354 + $0xe1] sm:$0xff]
        %v1571 = vld [vmem:[%s1354 + $0xf1] sm:$0xff]
        %v1572 = vld [vmem:[%s1354 + $0xf9] sm:$0xff]
        %v1573 = vld [vmem:[%s1354 + $0x109] sm:$0xff]
        %v1574 = vld [vmem:[%s1354 + $0x111] sm:$0xff]
        %v1575 = vld [vmem:[%s1354 + $0x121] sm:$0xff]
        %v1576 = vld [vmem:[%s1354 + $0x129] sm:$0xff]
        %v1577 = vld [vmem:[%s1354 + $0x139] sm:$0xff]
        %v1578 = vld [vmem:[%s1354 + $0x141] sm:$0xff]
        %v1579 = vld [vmem:[%s1354 + $0x151] sm:$0xff]
        %v1580 = vld [vmem:[%s1354 + $0x159] sm:$0xff]
        %v1581 = vld [vmem:[%s1354 + $0x169] sm:$0xff]
        %v1582 = vld [vmem:[%s1354 + $0x171] sm:$0xff]
        %v1583 = vld [vmem:[%s1354 + $0x1b1] sm:$0xff]
        %v1584 = vld [vmem:[%s1354 + $0x1b9] sm:$0xff]
        %v1585 = vld [vmem:[%s1354 + $0x1c9] sm:$0xff]
        %v1586 = vld [vmem:[%s1354 + $0x1d1] sm:$0xff]
        %v1587 = vld [vmem:[%s1354 + $0x1e1] sm:$0xff]
        %v1588 = vld [vmem:[%s1354 + $0x1e9] sm:$0xff]
        %v1589 = vld [vmem:[%s1354 + $0x1f9] sm:$0xff]
        %v1590 = vld [vmem:[%s1354 + $0x201] sm:$0xff]
        %v1591 = vld [vmem:[%s1354 + $0x211] sm:$0xff]
        %v1592 = vld [vmem:[%s1354 + $0x219] sm:$0xff]
        %v1593 = vld [vmem:[%s1354 + $0x229] sm:$0xff]
        %v1594 = vld [vmem:[%s1354 + $0x231] sm:$0xff]
        %v1595 = vld [vmem:[%s1354 + $0x241] sm:$0xff]
        %v1596 = vld [vmem:[%s1354 + $0x249] sm:$0xff]
        %v1597 = vld [vmem:[%s1354 + $0x259] sm:$0xff]
        %v1598 = vld [vmem:[%s1354 + $0x261] sm:$0xff]
        %v1599 = vld [vmem:[%s1354 + $0x271] sm:$0xff]
        %v1600 = vld [vmem:[%s1354 + $0x279] sm:$0xff]
        %v1601 = vld [vmem:[%s1354 + $0x289] sm:$0xff]
        %v1602 = vld [vmem:[%s1354 + $0x291] sm:$0xff]
        %v1603 = vld [vmem:[%s1354 + $0x2a1] sm:$0xff]
        %v1604 = vld [vmem:[%s1354 + $0x2a9] sm:$0xff]
        %v1605 = vld [vmem:[%s1354 + $0x2b9] sm:$0xff]
        %v1606 = vld [vmem:[%s1354 + $0x2c1] sm:$0xff]
        %v1607 = vld [vmem:[%s1354 + $0x2d1] sm:$0xff]
        %v1608 = vld [vmem:[%s1354 + $0x2d9] sm:$0xff]
        %v1609 = vld [vmem:[%s1354 + $0x2e9] sm:$0xff]
        %v1610 = vld [vmem:[%s1354 + $0x2f1] sm:$0xff]
        %v1611 = vld [vmem:[%s1354 + $0x301] sm:$0xff]
        %v1612 = vld [vmem:[%s1354 + $0x309] sm:$0xff]
        %v1613 = vld [vmem:[%s1354 + $0x319] sm:$0xff]
        %v1614 = vld [vmem:[%s1354 + $0x321] sm:$0xff]
        %v1615 = vlaneseq
        %v1616 = vshrl.u32 %v1615, 7
        %v1617 = vsub.s32 1, %v1616
        %v1618 = vrot.slane %v806, %v1617
        %v1619 = vmul.f32 %v1551, %v1618
        %v1620 = vmul.f32 %v1552, %v1618
        %v1621 = vmul.f32 %v1553, %v1618
        %v1622 = vmul.f32 %v1554, %v1618
        %v1623 = vmul.f32 %v1555, %v1618
        %v1624 = vmul.f32 %v1556, %v1618
        %v1625 = vmul.f32 %v1557, %v1618
        %v1626 = vmul.f32 %v1558, %v1618
        %v1627 = vmul.f32 %v1559, %v1618
        %v1628 = vmul.f32 %v1560, %v1618
        %v1629 = vmul.f32 %v1561, %v1618
        %v1630 = vmul.f32 %v1562, %v1618
        %v1631 = vmul.f32 %v1563, %v1618
        %v1632 = vmul.f32 %v1564, %v1618
        %v1633 = vmul.f32 %v1565, %v1618
        %v1634 = vmul.f32 %v1566, %v1618
        %v1635 = vmul.f32 %v1567, %v1618
        %v1636 = vmul.f32 %v1568, %v1618
        %v1637 = vmul.f32 %v1569, %v1618
        %v1638 = vmul.f32 %v1570, %v1618
        %v1639 = vmul.f32 %v1571, %v1618
        %v1640 = vmul.f32 %v1572, %v1618
        %v1641 = vmul.f32 %v1573, %v1618
        %v1642 = vmul.f32 %v1574, %v1618
        %v1643 = vmul.f32 %v1575, %v1618
        %v1644 = vmul.f32 %v1576, %v1618
        %v1645 = vmul.f32 %v1577, %v1618
        %v1646 = vmul.f32 %v1578, %v1618
        %v1647 = vmul.f32 %v1579, %v1618
        %v1648 = vmul.f32 %v1580, %v1618
        %v1649 = vmul.f32 %v1581, %v1618
        %v1650 = vmul.f32 %v1582, %v1618
        %v1651 = vmul.f32 %v1583, %v1618
        %v1652 = vmul.f32 %v1584, %v1618
        %v1653 = vmul.f32 %v1585, %v1618
        %v1654 = vmul.f32 %v1586, %v1618
        %v1655 = vmul.f32 %v1587, %v1618
        %v1656 = vmul.f32 %v1588, %v1618
        %v1657 = vmul.f32 %v1589, %v1618
        %v1658 = vmul.f32 %v1590, %v1618
        %v1659 = vmul.f32 %v1591, %v1618
        %v1660 = vmul.f32 %v1592, %v1618
        %v1661 = vmul.f32 %v1593, %v1618
        %v1662 = vmul.f32 %v1594, %v1618
        %v1663 = vmul.f32 %v1595, %v1618
        %v1664 = vmul.f32 %v1596, %v1618
        %v1665 = vmul.f32 %v1597, %v1618
        %v1666 = vmul.f32 %v1598, %v1618
        %v1667 = vmul.f32 %v1599, %v1618
        %v1668 = vmul.f32 %v1600, %v1618
        %v1669 = vmul.f32 %v1601, %v1618
        %v1670 = vmul.f32 %v1602, %v1618
        %v1671 = vmul.f32 %v1603, %v1618
        %v1672 = vmul.f32 %v1604, %v1618
        %v1673 = vmul.f32 %v1605, %v1618
        %v1674 = vmul.f32 %v1606, %v1618
        %v1675 = vmul.f32 %v1607, %v1618
        %v1676 = vmul.f32 %v1608, %v1618
        %v1677 = vmul.f32 %v1609, %v1618
        %v1678 = vmul.f32 %v1610, %v1618
        %v1679 = vmul.f32 %v1611, %v1618
        %v1680 = vmul.f32 %v1612, %v1618
        %v1681 = vmul.f32 %v1613, %v1618
        %v1682 = vmul.f32 %v1614, %v1618
        %v1683 = vadd.f32 %v1487, %v1619
        %v1684 = vadd.f32 %v1488, %v1620
        %v1685 = vadd.f32 %v1489, %v1621
        %v1686 = vadd.f32 %v1490, %v1622
        %v1687 = vadd.f32 %v1491, %v1623
        %v1688 = vadd.f32 %v1492, %v1624
        %v1689 = vadd.f32 %v1493, %v1625
        %v1690 = vadd.f32 %v1494, %v1626
        %v1691 = vadd.f32 %v1495, %v1627
        %v1692 = vadd.f32 %v1496, %v1628
        %v1693 = vadd.f32 %v1497, %v1629
        %v1694 = vadd.f32 %v1498, %v1630
        %v1695 = vadd.f32 %v1499, %v1631
        %v1696 = vadd.f32 %v1500, %v1632
        %v1697 = vadd.f32 %v1501, %v1633
        %v1698 = vadd.f32 %v1502, %v1634
        %v1699 = vadd.f32 %v1503, %v1635
        %v1700 = vadd.f32 %v1504, %v1636
        %v1701 = vadd.f32 %v1505, %v1637
        %v1702 = vadd.f32 %v1506, %v1638
        %v1703 = vadd.f32 %v1507, %v1639
        %v1704 = vadd.f32 %v1508, %v1640
        %v1705 = vadd.f32 %v1509, %v1641
        %v1706 = vadd.f32 %v1510, %v1642
        %v1707 = vadd.f32 %v1511, %v1643
        %v1708 = vadd.f32 %v1512, %v1644
        %v1709 = vadd.f32 %v1513, %v1645
        %v1710 = vadd.f32 %v1514, %v1646
        %v1711 = vadd.f32 %v1515, %v1647
        %v1712 = vadd.f32 %v1516, %v1648
        %v1713 = vadd.f32 %v1517, %v1649
        %v1714 = vadd.f32 %v1518, %v1650
        %v1715 = vadd.f32 %v1519, %v1651
        %v1716 = vadd.f32 %v1520, %v1652
        %v1717 = vadd.f32 %v1521, %v1653
        %v1718 = vadd.f32 %v1522, %v1654
        %v1719 = vadd.f32 %v1523, %v1655
        %v1720 = vadd.f32 %v1524, %v1656
        %v1721 = vadd.f32 %v1525, %v1657
        %v1722 = vadd.f32 %v1526, %v1658
        %v1723 = vadd.f32 %v1527, %v1659
        %v1724 = vadd.f32 %v1528, %v1660
        %v1725 = vadd.f32 %v1529, %v1661
        %v1726 = vadd.f32 %v1530, %v1662
        %v1727 = vadd.f32 %v1531, %v1663
        %v1728 = vadd.f32 %v1532, %v1664
        %v1729 = vadd.f32 %v1533, %v1665
        %v1730 = vadd.f32 %v1534, %v1666
        %v1731 = vadd.f32 %v1535, %v1667
        %v1732 = vadd.f32 %v1536, %v1668
        %v1733 = vadd.f32 %v1537, %v1669
        %v1734 = vadd.f32 %v1538, %v1670
        %v1735 = vadd.f32 %v1539, %v1671
        %v1736 = vadd.f32 %v1540, %v1672
        %v1737 = vadd.f32 %v1541, %v1673
        %v1738 = vadd.f32 %v1542, %v1674
        %v1739 = vadd.f32 %v1543, %v1675
        %v1740 = vadd.f32 %v1544, %v1676
        %v1741 = vadd.f32 %v1545, %v1677
        %v1742 = vadd.f32 %v1546, %v1678
        %v1743 = vadd.f32 %v1547, %v1679
        %v1744 = vadd.f32 %v1548, %v1680
        %v1745 = vadd.f32 %v1549, %v1681
        %v1746 = vadd.f32 %v1550, %v1682
        %v1747 = vld [vmem:[%s1354 + $0x2] sm:$0xff]
        %v1748 = vld [vmem:[%s1354 + $0xa] sm:$0xff]
        %v1749 = vld [vmem:[%s1354 + $0x1a] sm:$0xff]
        %v1750 = vld [vmem:[%s1354 + $0x22] sm:$0xff]
        %v1751 = vld [vmem:[%s1354 + $0x32] sm:$0xff]
        %v1752 = vld [vmem:[%s1354 + $0x3a] sm:$0xff]
        %v1753 = vld [vmem:[%s1354 + $0x4a] sm:$0xff]
        %v1754 = vld [vmem:[%s1354 + $0x52] sm:$0xff]
        %v1755 = vld [vmem:[%s1354 + $0x62] sm:$0xff]
        %v1756 = vld [vmem:[%s1354 + $0x6a] sm:$0xff]
        %v1757 = vld [vmem:[%s1354 + $0x7a] sm:$0xff]
        %v1758 = vld [vmem:[%s1354 + $0x82] sm:$0xff]
        %v1759 = vld [vmem:[%s1354 + $0x92] sm:$0xff]
        %v1760 = vld [vmem:[%s1354 + $0x9a] sm:$0xff]
        %v1761 = vld [vmem:[%s1354 + $0xaa] sm:$0xff]
        %v1762 = vld [vmem:[%s1354 + $0xb2] sm:$0xff]
        %v1763 = vld [vmem:[%s1354 + $0xc2] sm:$0xff]
        %v1764 = vld [vmem:[%s1354 + $0xca] sm:$0xff]
        %v1765 = vld [vmem:[%s1354 + $0xda] sm:$0xff]
        %v1766 = vld [vmem:[%s1354 + $0xe2] sm:$0xff]
        %v1767 = vld [vmem:[%s1354 + $0xf2] sm:$0xff]
        %v1768 = vld [vmem:[%s1354 + $0xfa] sm:$0xff]
        %v1769 = vld [vmem:[%s1354 + $0x10a] sm:$0xff]
        %v1770 = vld [vmem:[%s1354 + $0x112] sm:$0xff]
        %v1771 = vld [vmem:[%s1354 + $0x122] sm:$0xff]
        %v1772 = vld [vmem:[%s1354 + $0x12a] sm:$0xff]
        %v1773 = vld [vmem:[%s1354 + $0x13a] sm:$0xff]
        %v1774 = vld [vmem:[%s1354 + $0x142] sm:$0xff]
        %v1775 = vld [vmem:[%s1354 + $0x152] sm:$0xff]
        %v1776 = vld [vmem:[%s1354 + $0x15a] sm:$0xff]
        %v1777 = vld [vmem:[%s1354 + $0x16a] sm:$0xff]
        %v1778 = vld [vmem:[%s1354 + $0x172] sm:$0xff]
        %v1779 = vld [vmem:[%s1354 + $0x1b2] sm:$0xff]
        %v1780 = vld [vmem:[%s1354 + $0x1ba] sm:$0xff]
        %v1781 = vld [vmem:[%s1354 + $0x1ca] sm:$0xff]
        %v1782 = vld [vmem:[%s1354 + $0x1d2] sm:$0xff]
        %v1783 = vld [vmem:[%s1354 + $0x1e2] sm:$0xff]
        %v1784 = vld [vmem:[%s1354 + $0x1ea] sm:$0xff]
        %v1785 = vld [vmem:[%s1354 + $0x1fa] sm:$0xff]
        %v1786 = vld [vmem:[%s1354 + $0x202] sm:$0xff]
        %v1787 = vld [vmem:[%s1354 + $0x212] sm:$0xff]
        %v1788 = vld [vmem:[%s1354 + $0x21a] sm:$0xff]
        %v1789 = vld [vmem:[%s1354 + $0x22a] sm:$0xff]
        %v1790 = vld [vmem:[%s1354 + $0x232] sm:$0xff]
        %v1791 = vld [vmem:[%s1354 + $0x242] sm:$0xff]
        %v1792 = vld [vmem:[%s1354 + $0x24a] sm:$0xff]
        %v1793 = vld [vmem:[%s1354 + $0x25a] sm:$0xff]
        %v1794 = vld [vmem:[%s1354 + $0x262] sm:$0xff]
        %v1795 = vld [vmem:[%s1354 + $0x272] sm:$0xff]
        %v1796 = vld [vmem:[%s1354 + $0x27a] sm:$0xff]
        %v1797 = vld [vmem:[%s1354 + $0x28a] sm:$0xff]
        %v1798 = vld [vmem:[%s1354 + $0x292] sm:$0xff]
        %v1799 = vld [vmem:[%s1354 + $0x2a2] sm:$0xff]
        %v1800 = vld [vmem:[%s1354 + $0x2aa] sm:$0xff]
        %v1801 = vld [vmem:[%s1354 + $0x2ba] sm:$0xff]
        %v1802 = vld [vmem:[%s1354 + $0x2c2] sm:$0xff]
        %v1803 = vld [vmem:[%s1354 + $0x2d2] sm:$0xff]
        %v1804 = vld [vmem:[%s1354 + $0x2da] sm:$0xff]
        %v1805 = vld [vmem:[%s1354 + $0x2ea] sm:$0xff]
        %v1806 = vld [vmem:[%s1354 + $0x2f2] sm:$0xff]
        %v1807 = vld [vmem:[%s1354 + $0x302] sm:$0xff]
        %v1808 = vld [vmem:[%s1354 + $0x30a] sm:$0xff]
        %v1809 = vld [vmem:[%s1354 + $0x31a] sm:$0xff]
        %v1810 = vld [vmem:[%s1354 + $0x322] sm:$0xff]
        %v1811 = vlaneseq
        %v1812 = vshrl.u32 %v1811, 7
        %v1813 = vsub.s32 2, %v1812
        %v1814 = vrot.slane %v806, %v1813
        %v1815 = vmul.f32 %v1747, %v1814
        %v1816 = vmul.f32 %v1748, %v1814
        %v1817 = vmul.f32 %v1749, %v1814
        %v1818 = vmul.f32 %v1750, %v1814
        %v1819 = vmul.f32 %v1751, %v1814
        %v1820 = vmul.f32 %v1752, %v1814
        %v1821 = vmul.f32 %v1753, %v1814
        %v1822 = vmul.f32 %v1754, %v1814
        %v1823 = vmul.f32 %v1755, %v1814
        %v1824 = vmul.f32 %v1756, %v1814
        %v1825 = vmul.f32 %v1757, %v1814
        %v1826 = vmul.f32 %v1758, %v1814
        %v1827 = vmul.f32 %v1759, %v1814
        %v1828 = vmul.f32 %v1760, %v1814
        %v1829 = vmul.f32 %v1761, %v1814
        %v1830 = vmul.f32 %v1762, %v1814
        %v1831 = vmul.f32 %v1763, %v1814
        %v1832 = vmul.f32 %v1764, %v1814
        %v1833 = vmul.f32 %v1765, %v1814
        %v1834 = vmul.f32 %v1766, %v1814
        %v1835 = vmul.f32 %v1767, %v1814
        %v1836 = vmul.f32 %v1768, %v1814
        %v1837 = vmul.f32 %v1769, %v1814
        %v1838 = vmul.f32 %v1770, %v1814
        %v1839 = vmul.f32 %v1771, %v1814
        %v1840 = vmul.f32 %v1772, %v1814
        %v1841 = vmul.f32 %v1773, %v1814
        %v1842 = vmul.f32 %v1774, %v1814
        %v1843 = vmul.f32 %v1775, %v1814
        %v1844 = vmul.f32 %v1776, %v1814
        %v1845 = vmul.f32 %v1777, %v1814
        %v1846 = vmul.f32 %v1778, %v1814
        %v1847 = vmul.f32 %v1779, %v1814
        %v1848 = vmul.f32 %v1780, %v1814
        %v1849 = vmul.f32 %v1781, %v1814
        %v1850 = vmul.f32 %v1782, %v1814
        %v1851 = vmul.f32 %v1783, %v1814
        %v1852 = vmul.f32 %v1784, %v1814
        %v1853 = vmul.f32 %v1785, %v1814
        %v1854 = vmul.f32 %v1786, %v1814
        %v1855 = vmul.f32 %v1787, %v1814
        %v1856 = vmul.f32 %v1788, %v1814
        %v1857 = vmul.f32 %v1789, %v1814
        %v1858 = vmul.f32 %v1790, %v1814
        %v1859 = vmul.f32 %v1791, %v1814
        %v1860 = vmul.f32 %v1792, %v1814
        %v1861 = vmul.f32 %v1793, %v1814
        %v1862 = vmul.f32 %v1794, %v1814
        %v1863 = vmul.f32 %v1795, %v1814
        %v1864 = vmul.f32 %v1796, %v1814
        %v1865 = vmul.f32 %v1797, %v1814
        %v1866 = vmul.f32 %v1798, %v1814
        %v1867 = vmul.f32 %v1799, %v1814
        %v1868 = vmul.f32 %v1800, %v1814
        %v1869 = vmul.f32 %v1801, %v1814
        %v1870 = vmul.f32 %v1802, %v1814
        %v1871 = vmul.f32 %v1803, %v1814
        %v1872 = vmul.f32 %v1804, %v1814
        %v1873 = vmul.f32 %v1805, %v1814
        %v1874 = vmul.f32 %v1806, %v1814
        %v1875 = vmul.f32 %v1807, %v1814
        %v1876 = vmul.f32 %v1808, %v1814
        %v1877 = vmul.f32 %v1809, %v1814
        %v1878 = vmul.f32 %v1810, %v1814
        %v1879 = vadd.f32 %v1683, %v1815
        %v1880 = vadd.f32 %v1684, %v1816
        %v1881 = vadd.f32 %v1685, %v1817
        %v1882 = vadd.f32 %v1686, %v1818
        %v1883 = vadd.f32 %v1687, %v1819
        %v1884 = vadd.f32 %v1688, %v1820
        %v1885 = vadd.f32 %v1689, %v1821
        %v1886 = vadd.f32 %v1690, %v1822
        %v1887 = vadd.f32 %v1691, %v1823
        %v1888 = vadd.f32 %v1692, %v1824
        %v1889 = vadd.f32 %v1693, %v1825
        %v1890 = vadd.f32 %v1694, %v1826
        %v1891 = vadd.f32 %v1695, %v1827
        %v1892 = vadd.f32 %v1696, %v1828
        %v1893 = vadd.f32 %v1697, %v1829
        %v1894 = vadd.f32 %v1698, %v1830
        %v1895 = vadd.f32 %v1699, %v1831
        %v1896 = vadd.f32 %v1700, %v1832
        %v1897 = vadd.f32 %v1701, %v1833
        %v1898 = vadd.f32 %v1702, %v1834
        %v1899 = vadd.f32 %v1703, %v1835
        %v1900 = vadd.f32 %v1704, %v1836
        %v1901 = vadd.f32 %v1705, %v1837
        %v1902 = vadd.f32 %v1706, %v1838
        %v1903 = vadd.f32 %v1707, %v1839
        %v1904 = vadd.f32 %v1708, %v1840
        %v1905 = vadd.f32 %v1709, %v1841
        %v1906 = vadd.f32 %v1710, %v1842
        %v1907 = vadd.f32 %v1711, %v1843
        %v1908 = vadd.f32 %v1712, %v1844
        %v1909 = vadd.f32 %v1713, %v1845
        %v1910 = vadd.f32 %v1714, %v1846
        %v1911 = vadd.f32 %v1715, %v1847
        %v1912 = vadd.f32 %v1716, %v1848
        %v1913 = vadd.f32 %v1717, %v1849
        %v1914 = vadd.f32 %v1718, %v1850
        %v1915 = vadd.f32 %v1719, %v1851
        %v1916 = vadd.f32 %v1720, %v1852
        %v1917 = vadd.f32 %v1721, %v1853
        %v1918 = vadd.f32 %v1722, %v1854
        %v1919 = vadd.f32 %v1723, %v1855
        %v1920 = vadd.f32 %v1724, %v1856
        %v1921 = vadd.f32 %v1725, %v1857
        %v1922 = vadd.f32 %v1726, %v1858
        %v1923 = vadd.f32 %v1727, %v1859
        %v1924 = vadd.f32 %v1728, %v1860
        %v1925 = vadd.f32 %v1729, %v1861
        %v1926 = vadd.f32 %v1730, %v1862
        %v1927 = vadd.f32 %v1731, %v1863
        %v1928 = vadd.f32 %v1732, %v1864
        %v1929 = vadd.f32 %v1733, %v1865
        %v1930 = vadd.f32 %v1734, %v1866
        %v1931 = vadd.f32 %v1735, %v1867
        %v1932 = vadd.f32 %v1736, %v1868
        %v1933 = vadd.f32 %v1737, %v1869
        %v1934 = vadd.f32 %v1738, %v1870
        %v1935 = vadd.f32 %v1739, %v1871
        %v1936 = vadd.f32 %v1740, %v1872
        %v1937 = vadd.f32 %v1741, %v1873
        %v1938 = vadd.f32 %v1742, %v1874
        %v1939 = vadd.f32 %v1743, %v1875
        %v1940 = vadd.f32 %v1744, %v1876
        %v1941 = vadd.f32 %v1745, %v1877
        %v1942 = vadd.f32 %v1746, %v1878
        %s1943 = scalar_lea.vmem [#allocation2], 48
        %v1944 = vld [vmem:[%s1943] sm:$0xff]
        %v1945 = vld [vmem:[%s1943 + $0x8] sm:$0xff]
        %v1946 = vld [vmem:[%s1943 + $0x18] sm:$0xff]
        %v1947 = vld [vmem:[%s1943 + $0x20] sm:$0xff]
        %v1948 = vld [vmem:[%s1943 + $0x30] sm:$0xff]
        %v1949 = vld [vmem:[%s1943 + $0x38] sm:$0xff]
        %v1950 = vld [vmem:[%s1943 + $0x48] sm:$0xff]
        %v1951 = vld [vmem:[%s1943 + $0x50] sm:$0xff]
        %v1952 = vld [vmem:[%s1943 + $0x60] sm:$0xff]
        %v1953 = vld [vmem:[%s1943 + $0x68] sm:$0xff]
        %v1954 = vld [vmem:[%s1943 + $0x78] sm:$0xff]
        %v1955 = vld [vmem:[%s1943 + $0x80] sm:$0xff]
        %v1956 = vld [vmem:[%s1943 + $0x90] sm:$0xff]
        %v1957 = vld [vmem:[%s1943 + $0x98] sm:$0xff]
        %v1958 = vld [vmem:[%s1943 + $0xa8] sm:$0xff]
        %v1959 = vld [vmem:[%s1943 + $0xb0] sm:$0xff]
        %v1960 = vld [vmem:[%s1943 + $0xc0] sm:$0xff]
        %v1961 = vld [vmem:[%s1943 + $0xc8] sm:$0xff]
        %v1962 = vld [vmem:[%s1943 + $0xd8] sm:$0xff]
        %v1963 = vld [vmem:[%s1943 + $0xe0] sm:$0xff]
        %v1964 = vld [vmem:[%s1943 + $0xf0] sm:$0xff]
        %v1965 = vld [vmem:[%s1943 + $0xf8] sm:$0xff]
        %v1966 = vld [vmem:[%s1943 + $0x108] sm:$0xff]
        %v1967 = vld [vmem:[%s1943 + $0x110] sm:$0xff]
        %v1968 = vld [vmem:[%s1943 + $0x120] sm:$0xff]
        %v1969 = vld [vmem:[%s1943 + $0x128] sm:$0xff]
        %v1970 = vld [vmem:[%s1943 + $0x138] sm:$0xff]
        %v1971 = vld [vmem:[%s1943 + $0x140] sm:$0xff]
        %v1972 = vld [vmem:[%s1943 + $0x150] sm:$0xff]
        %v1973 = vld [vmem:[%s1943 + $0x158] sm:$0xff]
        %v1974 = vld [vmem:[%s1943 + $0x168] sm:$0xff]
        %v1975 = vld [vmem:[%s1943 + $0x170] sm:$0xff]
        %v1976 = vld [vmem:[%s1943 + $0x1b0] sm:$0xff]
        %v1977 = vld [vmem:[%s1943 + $0x1b8] sm:$0xff]
        %v1978 = vld [vmem:[%s1943 + $0x1c8] sm:$0xff]
        %v1979 = vld [vmem:[%s1943 + $0x1d0] sm:$0xff]
        %v1980 = vld [vmem:[%s1943 + $0x1e0] sm:$0xff]
        %v1981 = vld [vmem:[%s1943 + $0x1e8] sm:$0xff]
        %v1982 = vld [vmem:[%s1943 + $0x1f8] sm:$0xff]
        %v1983 = vld [vmem:[%s1943 + $0x200] sm:$0xff]
        %v1984 = vld [vmem:[%s1943 + $0x210] sm:$0xff]
        %v1985 = vld [vmem:[%s1943 + $0x218] sm:$0xff]
        %v1986 = vld [vmem:[%s1943 + $0x228] sm:$0xff]
        %v1987 = vld [vmem:[%s1943 + $0x230] sm:$0xff]
        %v1988 = vld [vmem:[%s1943 + $0x240] sm:$0xff]
        %v1989 = vld [vmem:[%s1943 + $0x248] sm:$0xff]
        %v1990 = vld [vmem:[%s1943 + $0x258] sm:$0xff]
        %v1991 = vld [vmem:[%s1943 + $0x260] sm:$0xff]
        %v1992 = vld [vmem:[%s1943 + $0x270] sm:$0xff]
        %v1993 = vld [vmem:[%s1943 + $0x278] sm:$0xff]
        %v1994 = vld [vmem:[%s1943 + $0x288] sm:$0xff]
        %v1995 = vld [vmem:[%s1943 + $0x290] sm:$0xff]
        %v1996 = vld [vmem:[%s1943 + $0x2a0] sm:$0xff]
        %v1997 = vld [vmem:[%s1943 + $0x2a8] sm:$0xff]
        %v1998 = vld [vmem:[%s1943 + $0x2b8] sm:$0xff]
        %v1999 = vld [vmem:[%s1943 + $0x2c0] sm:$0xff]
        %v2000 = vld [vmem:[%s1943 + $0x2d0] sm:$0xff]
        %v2001 = vld [vmem:[%s1943 + $0x2d8] sm:$0xff]
        %v2002 = vld [vmem:[%s1943 + $0x2e8] sm:$0xff]
        %v2003 = vld [vmem:[%s1943 + $0x2f0] sm:$0xff]
        %v2004 = vld [vmem:[%s1943 + $0x300] sm:$0xff]
        %v2005 = vld [vmem:[%s1943 + $0x308] sm:$0xff]
        %v2006 = vld [vmem:[%s1943 + $0x318] sm:$0xff]
        %v2007 = vld [vmem:[%s1943 + $0x320] sm:$0xff]
        %v2008 = vlaneseq
        %v2009 = vshrl.u32 %v2008, 7
        %v2010 = vsub.s32 0, %v2009
        %v2011 = vrot.slane %v807, %v2010
        %v2012 = vmul.f32 %v1944, %v2011
        %v2013 = vmul.f32 %v1945, %v2011
        %v2014 = vmul.f32 %v1946, %v2011
        %v2015 = vmul.f32 %v1947, %v2011
        %v2016 = vmul.f32 %v1948, %v2011
        %v2017 = vmul.f32 %v1949, %v2011
        %v2018 = vmul.f32 %v1950, %v2011
        %v2019 = vmul.f32 %v1951, %v2011
        %v2020 = vmul.f32 %v1952, %v2011
        %v2021 = vmul.f32 %v1953, %v2011
        %v2022 = vmul.f32 %v1954, %v2011
        %v2023 = vmul.f32 %v1955, %v2011
        %v2024 = vmul.f32 %v1956, %v2011
        %v2025 = vmul.f32 %v1957, %v2011
        %v2026 = vmul.f32 %v1958, %v2011
        %v2027 = vmul.f32 %v1959, %v2011
        %v2028 = vmul.f32 %v1960, %v2011
        %v2029 = vmul.f32 %v1961, %v2011
        %v2030 = vmul.f32 %v1962, %v2011
        %v2031 = vmul.f32 %v1963, %v2011
        %v2032 = vmul.f32 %v1964, %v2011
        %v2033 = vmul.f32 %v1965, %v2011
        %v2034 = vmul.f32 %v1966, %v2011
        %v2035 = vmul.f32 %v1967, %v2011
        %v2036 = vmul.f32 %v1968, %v2011
        %v2037 = vmul.f32 %v1969, %v2011
        %v2038 = vmul.f32 %v1970, %v2011
        %v2039 = vmul.f32 %v1971, %v2011
        %v2040 = vmul.f32 %v1972, %v2011
        %v2041 = vmul.f32 %v1973, %v2011
        %v2042 = vmul.f32 %v1974, %v2011
        %v2043 = vmul.f32 %v1975, %v2011
        %v2044 = vmul.f32 %v1976, %v2011
        %v2045 = vmul.f32 %v1977, %v2011
        %v2046 = vmul.f32 %v1978, %v2011
        %v2047 = vmul.f32 %v1979, %v2011
        %v2048 = vmul.f32 %v1980, %v2011
        %v2049 = vmul.f32 %v1981, %v2011
        %v2050 = vmul.f32 %v1982, %v2011
        %v2051 = vmul.f32 %v1983, %v2011
        %v2052 = vmul.f32 %v1984, %v2011
        %v2053 = vmul.f32 %v1985, %v2011
        %v2054 = vmul.f32 %v1986, %v2011
        %v2055 = vmul.f32 %v1987, %v2011
        %v2056 = vmul.f32 %v1988, %v2011
        %v2057 = vmul.f32 %v1989, %v2011
        %v2058 = vmul.f32 %v1990, %v2011
        %v2059 = vmul.f32 %v1991, %v2011
        %v2060 = vmul.f32 %v1992, %v2011
        %v2061 = vmul.f32 %v1993, %v2011
        %v2062 = vmul.f32 %v1994, %v2011
        %v2063 = vmul.f32 %v1995, %v2011
        %v2064 = vmul.f32 %v1996, %v2011
        %v2065 = vmul.f32 %v1997, %v2011
        %v2066 = vmul.f32 %v1998, %v2011
        %v2067 = vmul.f32 %v1999, %v2011
        %v2068 = vmul.f32 %v2000, %v2011
        %v2069 = vmul.f32 %v2001, %v2011
        %v2070 = vmul.f32 %v2002, %v2011
        %v2071 = vmul.f32 %v2003, %v2011
        %v2072 = vmul.f32 %v2004, %v2011
        %v2073 = vmul.f32 %v2005, %v2011
        %v2074 = vmul.f32 %v2006, %v2011
        %v2075 = vmul.f32 %v2007, %v2011
        %v2076 = vadd.f32 %v1879, %v2012
        %v2077 = vadd.f32 %v1880, %v2013
        %v2078 = vadd.f32 %v1881, %v2014
        %v2079 = vadd.f32 %v1882, %v2015
        %v2080 = vadd.f32 %v1883, %v2016
        %v2081 = vadd.f32 %v1884, %v2017
        %v2082 = vadd.f32 %v1885, %v2018
        %v2083 = vadd.f32 %v1886, %v2019
        %v2084 = vadd.f32 %v1887, %v2020
        %v2085 = vadd.f32 %v1888, %v2021
        %v2086 = vadd.f32 %v1889, %v2022
        %v2087 = vadd.f32 %v1890, %v2023
        %v2088 = vadd.f32 %v1891, %v2024
        %v2089 = vadd.f32 %v1892, %v2025
        %v2090 = vadd.f32 %v1893, %v2026
        %v2091 = vadd.f32 %v1894, %v2027
        %v2092 = vadd.f32 %v1895, %v2028
        %v2093 = vadd.f32 %v1896, %v2029
        %v2094 = vadd.f32 %v1897, %v2030
        %v2095 = vadd.f32 %v1898, %v2031
        %v2096 = vadd.f32 %v1899, %v2032
        %v2097 = vadd.f32 %v1900, %v2033
        %v2098 = vadd.f32 %v1901, %v2034
        %v2099 = vadd.f32 %v1902, %v2035
        %v2100 = vadd.f32 %v1903, %v2036
        %v2101 = vadd.f32 %v1904, %v2037
        %v2102 = vadd.f32 %v1905, %v2038
        %v2103 = vadd.f32 %v1906, %v2039
        %v2104 = vadd.f32 %v1907, %v2040
        %v2105 = vadd.f32 %v1908, %v2041
        %v2106 = vadd.f32 %v1909, %v2042
        %v2107 = vadd.f32 %v1910, %v2043
        %v2108 = vadd.f32 %v1911, %v2044
        %v2109 = vadd.f32 %v1912, %v2045
        %v2110 = vadd.f32 %v1913, %v2046
        %v2111 = vadd.f32 %v1914, %v2047
        %v2112 = vadd.f32 %v1915, %v2048
        %v2113 = vadd.f32 %v1916, %v2049
        %v2114 = vadd.f32 %v1917, %v2050
        %v2115 = vadd.f32 %v1918, %v2051
        %v2116 = vadd.f32 %v1919, %v2052
        %v2117 = vadd.f32 %v1920, %v2053
        %v2118 = vadd.f32 %v1921, %v2054
        %v2119 = vadd.f32 %v1922, %v2055
        %v2120 = vadd.f32 %v1923, %v2056
        %v2121 = vadd.f32 %v1924, %v2057
        %v2122 = vadd.f32 %v1925, %v2058
        %v2123 = vadd.f32 %v1926, %v2059
        %v2124 = vadd.f32 %v1927, %v2060
        %v2125 = vadd.f32 %v1928, %v2061
        %v2126 = vadd.f32 %v1929, %v2062
        %v2127 = vadd.f32 %v1930, %v2063
        %v2128 = vadd.f32 %v1931, %v2064
        %v2129 = vadd.f32 %v1932, %v2065
        %v2130 = vadd.f32 %v1933, %v2066
        %v2131 = vadd.f32 %v1934, %v2067
        %v2132 = vadd.f32 %v1935, %v2068
        %v2133 = vadd.f32 %v1936, %v2069
        %v2134 = vadd.f32 %v1937, %v2070
        %v2135 = vadd.f32 %v1938, %v2071
        %v2136 = vadd.f32 %v1939, %v2072
        %v2137 = vadd.f32 %v1940, %v2073
        %v2138 = vadd.f32 %v1941, %v2074
        %v2139 = vadd.f32 %v1942, %v2075
        %v2140 = vld [vmem:[%s1943 + $0x1] sm:$0xff]
        %v2141 = vld [vmem:[%s1943 + $0x9] sm:$0xff]
        %v2142 = vld [vmem:[%s1943 + $0x19] sm:$0xff]
        %v2143 = vld [vmem:[%s1943 + $0x21] sm:$0xff]
        %v2144 = vld [vmem:[%s1943 + $0x31] sm:$0xff]
        %v2145 = vld [vmem:[%s1943 + $0x39] sm:$0xff]
        %v2146 = vld [vmem:[%s1943 + $0x49] sm:$0xff]
        %v2147 = vld [vmem:[%s1943 + $0x51] sm:$0xff]
        %v2148 = vld [vmem:[%s1943 + $0x61] sm:$0xff]
        %v2149 = vld [vmem:[%s1943 + $0x69] sm:$0xff]
        %v2150 = vld [vmem:[%s1943 + $0x79] sm:$0xff]
        %v2151 = vld [vmem:[%s1943 + $0x81] sm:$0xff]
        %v2152 = vld [vmem:[%s1943 + $0x91] sm:$0xff]
        %v2153 = vld [vmem:[%s1943 + $0x99] sm:$0xff]
        %v2154 = vld [vmem:[%s1943 + $0xa9] sm:$0xff]
        %v2155 = vld [vmem:[%s1943 + $0xb1] sm:$0xff]
        %v2156 = vld [vmem:[%s1943 + $0xc1] sm:$0xff]
        %v2157 = vld [vmem:[%s1943 + $0xc9] sm:$0xff]
        %v2158 = vld [vmem:[%s1943 + $0xd9] sm:$0xff]
        %v2159 = vld [vmem:[%s1943 + $0xe1] sm:$0xff]
        %v2160 = vld [vmem:[%s1943 + $0xf1] sm:$0xff]
        %v2161 = vld [vmem:[%s1943 + $0xf9] sm:$0xff]
        %v2162 = vld [vmem:[%s1943 + $0x109] sm:$0xff]
        %v2163 = vld [vmem:[%s1943 + $0x111] sm:$0xff]
        %v2164 = vld [vmem:[%s1943 + $0x121] sm:$0xff]
        %v2165 = vld [vmem:[%s1943 + $0x129] sm:$0xff]
        %v2166 = vld [vmem:[%s1943 + $0x139] sm:$0xff]
        %v2167 = vld [vmem:[%s1943 + $0x141] sm:$0xff]
        %v2168 = vld [vmem:[%s1943 + $0x151] sm:$0xff]
        %v2169 = vld [vmem:[%s1943 + $0x159] sm:$0xff]
        %v2170 = vld [vmem:[%s1943 + $0x169] sm:$0xff]
        %v2171 = vld [vmem:[%s1943 + $0x171] sm:$0xff]
        %v2172 = vld [vmem:[%s1943 + $0x1b1] sm:$0xff]
        %v2173 = vld [vmem:[%s1943 + $0x1b9] sm:$0xff]
        %v2174 = vld [vmem:[%s1943 + $0x1c9] sm:$0xff]
        %v2175 = vld [vmem:[%s1943 + $0x1d1] sm:$0xff]
        %v2176 = vld [vmem:[%s1943 + $0x1e1] sm:$0xff]
        %v2177 = vld [vmem:[%s1943 + $0x1e9] sm:$0xff]
        %v2178 = vld [vmem:[%s1943 + $0x1f9] sm:$0xff]
        %v2179 = vld [vmem:[%s1943 + $0x201] sm:$0xff]
        %v2180 = vld [vmem:[%s1943 + $0x211] sm:$0xff]
        %v2181 = vld [vmem:[%s1943 + $0x219] sm:$0xff]
        %v2182 = vld [vmem:[%s1943 + $0x229] sm:$0xff]
        %v2183 = vld [vmem:[%s1943 + $0x231] sm:$0xff]
        %v2184 = vld [vmem:[%s1943 + $0x241] sm:$0xff]
        %v2185 = vld [vmem:[%s1943 + $0x249] sm:$0xff]
        %v2186 = vld [vmem:[%s1943 + $0x259] sm:$0xff]
        %v2187 = vld [vmem:[%s1943 + $0x261] sm:$0xff]
        %v2188 = vld [vmem:[%s1943 + $0x271] sm:$0xff]
        %v2189 = vld [vmem:[%s1943 + $0x279] sm:$0xff]
        %v2190 = vld [vmem:[%s1943 + $0x289] sm:$0xff]
        %v2191 = vld [vmem:[%s1943 + $0x291] sm:$0xff]
        %v2192 = vld [vmem:[%s1943 + $0x2a1] sm:$0xff]
        %v2193 = vld [vmem:[%s1943 + $0x2a9] sm:$0xff]
        %v2194 = vld [vmem:[%s1943 + $0x2b9] sm:$0xff]
        %v2195 = vld [vmem:[%s1943 + $0x2c1] sm:$0xff]
        %v2196 = vld [vmem:[%s1943 + $0x2d1] sm:$0xff]
        %v2197 = vld [vmem:[%s1943 + $0x2d9] sm:$0xff]
        %v2198 = vld [vmem:[%s1943 + $0x2e9] sm:$0xff]
        %v2199 = vld [vmem:[%s1943 + $0x2f1] sm:$0xff]
        %v2200 = vld [vmem:[%s1943 + $0x301] sm:$0xff]
        %v2201 = vld [vmem:[%s1943 + $0x309] sm:$0xff]
        %v2202 = vld [vmem:[%s1943 + $0x319] sm:$0xff]
        %v2203 = vld [vmem:[%s1943 + $0x321] sm:$0xff]
        %v2204 = vlaneseq
        %v2205 = vshrl.u32 %v2204, 7
        %v2206 = vsub.s32 1, %v2205
        %v2207 = vrot.slane %v807, %v2206
        %v2208 = vmul.f32 %v2140, %v2207
        %v2209 = vmul.f32 %v2141, %v2207
        %v2210 = vmul.f32 %v2142, %v2207
        %v2211 = vmul.f32 %v2143, %v2207
        %v2212 = vmul.f32 %v2144, %v2207
        %v2213 = vmul.f32 %v2145, %v2207
        %v2214 = vmul.f32 %v2146, %v2207
        %v2215 = vmul.f32 %v2147, %v2207
        %v2216 = vmul.f32 %v2148, %v2207
        %v2217 = vmul.f32 %v2149, %v2207
        %v2218 = vmul.f32 %v2150, %v2207
        %v2219 = vmul.f32 %v2151, %v2207
        %v2220 = vmul.f32 %v2152, %v2207
        %v2221 = vmul.f32 %v2153, %v2207
        %v2222 = vmul.f32 %v2154, %v2207
        %v2223 = vmul.f32 %v2155, %v2207
        %v2224 = vmul.f32 %v2156, %v2207
        %v2225 = vmul.f32 %v2157, %v2207
        %v2226 = vmul.f32 %v2158, %v2207
        %v2227 = vmul.f32 %v2159, %v2207
        %v2228 = vmul.f32 %v2160, %v2207
        %v2229 = vmul.f32 %v2161, %v2207
        %v2230 = vmul.f32 %v2162, %v2207
        %v2231 = vmul.f32 %v2163, %v2207
        %v2232 = vmul.f32 %v2164, %v2207
        %v2233 = vmul.f32 %v2165, %v2207
        %v2234 = vmul.f32 %v2166, %v2207
        %v2235 = vmul.f32 %v2167, %v2207
        %v2236 = vmul.f32 %v2168, %v2207
        %v2237 = vmul.f32 %v2169, %v2207
        %v2238 = vmul.f32 %v2170, %v2207
        %v2239 = vmul.f32 %v2171, %v2207
        %v2240 = vmul.f32 %v2172, %v2207
        %v2241 = vmul.f32 %v2173, %v2207
        %v2242 = vmul.f32 %v2174, %v2207
        %v2243 = vmul.f32 %v2175, %v2207
        %v2244 = vmul.f32 %v2176, %v2207
        %v2245 = vmul.f32 %v2177, %v2207
        %v2246 = vmul.f32 %v2178, %v2207
        %v2247 = vmul.f32 %v2179, %v2207
        %v2248 = vmul.f32 %v2180, %v2207
        %v2249 = vmul.f32 %v2181, %v2207
        %v2250 = vmul.f32 %v2182, %v2207
        %v2251 = vmul.f32 %v2183, %v2207
        %v2252 = vmul.f32 %v2184, %v2207
        %v2253 = vmul.f32 %v2185, %v2207
        %v2254 = vmul.f32 %v2186, %v2207
        %v2255 = vmul.f32 %v2187, %v2207
        %v2256 = vmul.f32 %v2188, %v2207
        %v2257 = vmul.f32 %v2189, %v2207
        %v2258 = vmul.f32 %v2190, %v2207
        %v2259 = vmul.f32 %v2191, %v2207
        %v2260 = vmul.f32 %v2192, %v2207
        %v2261 = vmul.f32 %v2193, %v2207
        %v2262 = vmul.f32 %v2194, %v2207
        %v2263 = vmul.f32 %v2195, %v2207
        %v2264 = vmul.f32 %v2196, %v2207
        %v2265 = vmul.f32 %v2197, %v2207
        %v2266 = vmul.f32 %v2198, %v2207
        %v2267 = vmul.f32 %v2199, %v2207
        %v2268 = vmul.f32 %v2200, %v2207
        %v2269 = vmul.f32 %v2201, %v2207
        %v2270 = vmul.f32 %v2202, %v2207
        %v2271 = vmul.f32 %v2203, %v2207
        %v2272 = vadd.f32 %v2076, %v2208
        %v2273 = vadd.f32 %v2077, %v2209
        %v2274 = vadd.f32 %v2078, %v2210
        %v2275 = vadd.f32 %v2079, %v2211
        %v2276 = vadd.f32 %v2080, %v2212
        %v2277 = vadd.f32 %v2081, %v2213
        %v2278 = vadd.f32 %v2082, %v2214
        %v2279 = vadd.f32 %v2083, %v2215
        %v2280 = vadd.f32 %v2084, %v2216
        %v2281 = vadd.f32 %v2085, %v2217
        %v2282 = vadd.f32 %v2086, %v2218
        %v2283 = vadd.f32 %v2087, %v2219
        %v2284 = vadd.f32 %v2088, %v2220
        %v2285 = vadd.f32 %v2089, %v2221
        %v2286 = vadd.f32 %v2090, %v2222
        %v2287 = vadd.f32 %v2091, %v2223
        %v2288 = vadd.f32 %v2092, %v2224
        %v2289 = vadd.f32 %v2093, %v2225
        %v2290 = vadd.f32 %v2094, %v2226
        %v2291 = vadd.f32 %v2095, %v2227
        %v2292 = vadd.f32 %v2096, %v2228
        %v2293 = vadd.f32 %v2097, %v2229
        %v2294 = vadd.f32 %v2098, %v2230
        %v2295 = vadd.f32 %v2099, %v2231
        %v2296 = vadd.f32 %v2100, %v2232
        %v2297 = vadd.f32 %v2101, %v2233
        %v2298 = vadd.f32 %v2102, %v2234
        %v2299 = vadd.f32 %v2103, %v2235
        %v2300 = vadd.f32 %v2104, %v2236
        %v2301 = vadd.f32 %v2105, %v2237
        %v2302 = vadd.f32 %v2106, %v2238
        %v2303 = vadd.f32 %v2107, %v2239
        %v2304 = vadd.f32 %v2108, %v2240
        %v2305 = vadd.f32 %v2109, %v2241
        %v2306 = vadd.f32 %v2110, %v2242
        %v2307 = vadd.f32 %v2111, %v2243
        %v2308 = vadd.f32 %v2112, %v2244
        %v2309 = vadd.f32 %v2113, %v2245
        %v2310 = vadd.f32 %v2114, %v2246
        %v2311 = vadd.f32 %v2115, %v2247
        %v2312 = vadd.f32 %v2116, %v2248
        %v2313 = vadd.f32 %v2117, %v2249
        %v2314 = vadd.f32 %v2118, %v2250
        %v2315 = vadd.f32 %v2119, %v2251
        %v2316 = vadd.f32 %v2120, %v2252
        %v2317 = vadd.f32 %v2121, %v2253
        %v2318 = vadd.f32 %v2122, %v2254
        %v2319 = vadd.f32 %v2123, %v2255
        %v2320 = vadd.f32 %v2124, %v2256
        %v2321 = vadd.f32 %v2125, %v2257
        %v2322 = vadd.f32 %v2126, %v2258
        %v2323 = vadd.f32 %v2127, %v2259
        %v2324 = vadd.f32 %v2128, %v2260
        %v2325 = vadd.f32 %v2129, %v2261
        %v2326 = vadd.f32 %v2130, %v2262
        %v2327 = vadd.f32 %v2131, %v2263
        %v2328 = vadd.f32 %v2132, %v2264
        %v2329 = vadd.f32 %v2133, %v2265
        %v2330 = vadd.f32 %v2134, %v2266
        %v2331 = vadd.f32 %v2135, %v2267
        %v2332 = vadd.f32 %v2136, %v2268
        %v2333 = vadd.f32 %v2137, %v2269
        %v2334 = vadd.f32 %v2138, %v2270
        %v2335 = vadd.f32 %v2139, %v2271
        %v2336 = vld [vmem:[%s1943 + $0x2] sm:$0xff]
        %v2337 = vld [vmem:[%s1943 + $0xa] sm:$0xff]
        %v2338 = vld [vmem:[%s1943 + $0x1a] sm:$0xff]
        %v2339 = vld [vmem:[%s1943 + $0x22] sm:$0xff]
        %v2340 = vld [vmem:[%s1943 + $0x32] sm:$0xff]
        %v2341 = vld [vmem:[%s1943 + $0x3a] sm:$0xff]
        %v2342 = vld [vmem:[%s1943 + $0x4a] sm:$0xff]
        %v2343 = vld [vmem:[%s1943 + $0x52] sm:$0xff]
        %v2344 = vld [vmem:[%s1943 + $0x62] sm:$0xff]
        %v2345 = vld [vmem:[%s1943 + $0x6a] sm:$0xff]
        %v2346 = vld [vmem:[%s1943 + $0x7a] sm:$0xff]
        %v2347 = vld [vmem:[%s1943 + $0x82] sm:$0xff]
        %v2348 = vld [vmem:[%s1943 + $0x92] sm:$0xff]
        %v2349 = vld [vmem:[%s1943 + $0x9a] sm:$0xff]
        %v2350 = vld [vmem:[%s1943 + $0xaa] sm:$0xff]
        %v2351 = vld [vmem:[%s1943 + $0xb2] sm:$0xff]
        %v2352 = vld [vmem:[%s1943 + $0xc2] sm:$0xff]
        %v2353 = vld [vmem:[%s1943 + $0xca] sm:$0xff]
        %v2354 = vld [vmem:[%s1943 + $0xda] sm:$0xff]
        %v2355 = vld [vmem:[%s1943 + $0xe2] sm:$0xff]
        %v2356 = vld [vmem:[%s1943 + $0xf2] sm:$0xff]
        %v2357 = vld [vmem:[%s1943 + $0xfa] sm:$0xff]
        %v2358 = vld [vmem:[%s1943 + $0x10a] sm:$0xff]
        %v2359 = vld [vmem:[%s1943 + $0x112] sm:$0xff]
        %v2360 = vld [vmem:[%s1943 + $0x122] sm:$0xff]
        %v2361 = vld [vmem:[%s1943 + $0x12a] sm:$0xff]
        %v2362 = vld [vmem:[%s1943 + $0x13a] sm:$0xff]
        %v2363 = vld [vmem:[%s1943 + $0x142] sm:$0xff]
        %v2364 = vld [vmem:[%s1943 + $0x152] sm:$0xff]
        %v2365 = vld [vmem:[%s1943 + $0x15a] sm:$0xff]
        %v2366 = vld [vmem:[%s1943 + $0x16a] sm:$0xff]
        %v2367 = vld [vmem:[%s1943 + $0x172] sm:$0xff]
        %v2368 = vld [vmem:[%s1943 + $0x1b2] sm:$0xff]
        %v2369 = vld [vmem:[%s1943 + $0x1ba] sm:$0xff]
        %v2370 = vld [vmem:[%s1943 + $0x1ca] sm:$0xff]
        %v2371 = vld [vmem:[%s1943 + $0x1d2] sm:$0xff]
        %v2372 = vld [vmem:[%s1943 + $0x1e2] sm:$0xff]
        %v2373 = vld [vmem:[%s1943 + $0x1ea] sm:$0xff]
        %v2374 = vld [vmem:[%s1943 + $0x1fa] sm:$0xff]
        %v2375 = vld [vmem:[%s1943 + $0x202] sm:$0xff]
        %v2376 = vld [vmem:[%s1943 + $0x212] sm:$0xff]
        %v2377 = vld [vmem:[%s1943 + $0x21a] sm:$0xff]
        %v2378 = vld [vmem:[%s1943 + $0x22a] sm:$0xff]
        %v2379 = vld [vmem:[%s1943 + $0x232] sm:$0xff]
        %v2380 = vld [vmem:[%s1943 + $0x242] sm:$0xff]
        %v2381 = vld [vmem:[%s1943 + $0x24a] sm:$0xff]
        %v2382 = vld [vmem:[%s1943 + $0x25a] sm:$0xff]
        %v2383 = vld [vmem:[%s1943 + $0x262] sm:$0xff]
        %v2384 = vld [vmem:[%s1943 + $0x272] sm:$0xff]
        %v2385 = vld [vmem:[%s1943 + $0x27a] sm:$0xff]
        %v2386 = vld [vmem:[%s1943 + $0x28a] sm:$0xff]
        %v2387 = vld [vmem:[%s1943 + $0x292] sm:$0xff]
        %v2388 = vld [vmem:[%s1943 + $0x2a2] sm:$0xff]
        %v2389 = vld [vmem:[%s1943 + $0x2aa] sm:$0xff]
        %v2390 = vld [vmem:[%s1943 + $0x2ba] sm:$0xff]
        %v2391 = vld [vmem:[%s1943 + $0x2c2] sm:$0xff]
        %v2392 = vld [vmem:[%s1943 + $0x2d2] sm:$0xff]
        %v2393 = vld [vmem:[%s1943 + $0x2da] sm:$0xff]
        %v2394 = vld [vmem:[%s1943 + $0x2ea] sm:$0xff]
        %v2395 = vld [vmem:[%s1943 + $0x2f2] sm:$0xff]
        %v2396 = vld [vmem:[%s1943 + $0x302] sm:$0xff]
        %v2397 = vld [vmem:[%s1943 + $0x30a] sm:$0xff]
        %v2398 = vld [vmem:[%s1943 + $0x31a] sm:$0xff]
        %v2399 = vld [vmem:[%s1943 + $0x322] sm:$0xff]
        %v2400 = vlaneseq
        %v2401 = vshrl.u32 %v2400, 7
        %v2402 = vsub.s32 2, %v2401
        %v2403 = vrot.slane %v807, %v2402
        %v2404 = vmul.f32 %v2336, %v2403
        %v2405 = vmul.f32 %v2337, %v2403
        %v2406 = vmul.f32 %v2338, %v2403
        %v2407 = vmul.f32 %v2339, %v2403
        %v2408 = vmul.f32 %v2340, %v2403
        %v2409 = vmul.f32 %v2341, %v2403
        %v2410 = vmul.f32 %v2342, %v2403
        %v2411 = vmul.f32 %v2343, %v2403
        %v2412 = vmul.f32 %v2344, %v2403
        %v2413 = vmul.f32 %v2345, %v2403
        %v2414 = vmul.f32 %v2346, %v2403
        %v2415 = vmul.f32 %v2347, %v2403
        %v2416 = vmul.f32 %v2348, %v2403
        %v2417 = vmul.f32 %v2349, %v2403
        %v2418 = vmul.f32 %v2350, %v2403
        %v2419 = vmul.f32 %v2351, %v2403
        %v2420 = vmul.f32 %v2352, %v2403
        %v2421 = vmul.f32 %v2353, %v2403
        %v2422 = vmul.f32 %v2354, %v2403
        %v2423 = vmul.f32 %v2355, %v2403
        %v2424 = vmul.f32 %v2356, %v2403
        %v2425 = vmul.f32 %v2357, %v2403
        %v2426 = vmul.f32 %v2358, %v2403
        %v2427 = vmul.f32 %v2359, %v2403
        %v2428 = vmul.f32 %v2360, %v2403
        %v2429 = vmul.f32 %v2361, %v2403
        %v2430 = vmul.f32 %v2362, %v2403
        %v2431 = vmul.f32 %v2363, %v2403
        %v2432 = vmul.f32 %v2364, %v2403
        %v2433 = vmul.f32 %v2365, %v2403
        %v2434 = vmul.f32 %v2366, %v2403
        %v2435 = vmul.f32 %v2367, %v2403
        %v2436 = vmul.f32 %v2368, %v2403
        %v2437 = vmul.f32 %v2369, %v2403
        %v2438 = vmul.f32 %v2370, %v2403
        %v2439 = vmul.f32 %v2371, %v2403
        %v2440 = vmul.f32 %v2372, %v2403
        %v2441 = vmul.f32 %v2373, %v2403
        %v2442 = vmul.f32 %v2374, %v2403
        %v2443 = vmul.f32 %v2375, %v2403
        %v2444 = vmul.f32 %v2376, %v2403
        %v2445 = vmul.f32 %v2377, %v2403
        %v2446 = vmul.f32 %v2378, %v2403
        %v2447 = vmul.f32 %v2379, %v2403
        %v2448 = vmul.f32 %v2380, %v2403
        %v2449 = vmul.f32 %v2381, %v2403
        %v2450 = vmul.f32 %v2382, %v2403
        %v2451 = vmul.f32 %v2383, %v2403
        %v2452 = vmul.f32 %v2384, %v2403
        %v2453 = vmul.f32 %v2385, %v2403
        %v2454 = vmul.f32 %v2386, %v2403
        %v2455 = vmul.f32 %v2387, %v2403
        %v2456 = vmul.f32 %v2388, %v2403
        %v2457 = vmul.f32 %v2389, %v2403
        %v2458 = vmul.f32 %v2390, %v2403
        %v2459 = vmul.f32 %v2391, %v2403
        %v2460 = vmul.f32 %v2392, %v2403
        %v2461 = vmul.f32 %v2393, %v2403
        %v2462 = vmul.f32 %v2394, %v2403
        %v2463 = vmul.f32 %v2395, %v2403
        %v2464 = vmul.f32 %v2396, %v2403
        %v2465 = vmul.f32 %v2397, %v2403
        %v2466 = vmul.f32 %v2398, %v2403
        %v2467 = vmul.f32 %v2399, %v2403
        %v2468 = vadd.f32 %v2272, %v2404
        %v2469 = vadd.f32 %v2273, %v2405
        %v2470 = vadd.f32 %v2274, %v2406
        %v2471 = vadd.f32 %v2275, %v2407
        %v2472 = vadd.f32 %v2276, %v2408
        %v2473 = vadd.f32 %v2277, %v2409
        %v2474 = vadd.f32 %v2278, %v2410
        %v2475 = vadd.f32 %v2279, %v2411
        %v2476 = vadd.f32 %v2280, %v2412
        %v2477 = vadd.f32 %v2281, %v2413
        %v2478 = vadd.f32 %v2282, %v2414
        %v2479 = vadd.f32 %v2283, %v2415
        %v2480 = vadd.f32 %v2284, %v2416
        %v2481 = vadd.f32 %v2285, %v2417
        %v2482 = vadd.f32 %v2286, %v2418
        %v2483 = vadd.f32 %v2287, %v2419
        %v2484 = vadd.f32 %v2288, %v2420
        %v2485 = vadd.f32 %v2289, %v2421
        %v2486 = vadd.f32 %v2290, %v2422
        %v2487 = vadd.f32 %v2291, %v2423
        %v2488 = vadd.f32 %v2292, %v2424
        %v2489 = vadd.f32 %v2293, %v2425
        %v2490 = vadd.f32 %v2294, %v2426
        %v2491 = vadd.f32 %v2295, %v2427
        %v2492 = vadd.f32 %v2296, %v2428
        %v2493 = vadd.f32 %v2297, %v2429
        %v2494 = vadd.f32 %v2298, %v2430
        %v2495 = vadd.f32 %v2299, %v2431
        %v2496 = vadd.f32 %v2300, %v2432
        %v2497 = vadd.f32 %v2301, %v2433
        %v2498 = vadd.f32 %v2302, %v2434
        %v2499 = vadd.f32 %v2303, %v2435
        %v2500 = vadd.f32 %v2304, %v2436
        %v2501 = vadd.f32 %v2305, %v2437
        %v2502 = vadd.f32 %v2306, %v2438
        %v2503 = vadd.f32 %v2307, %v2439
        %v2504 = vadd.f32 %v2308, %v2440
        %v2505 = vadd.f32 %v2309, %v2441
        %v2506 = vadd.f32 %v2310, %v2442
        %v2507 = vadd.f32 %v2311, %v2443
        %v2508 = vadd.f32 %v2312, %v2444
        %v2509 = vadd.f32 %v2313, %v2445
        %v2510 = vadd.f32 %v2314, %v2446
        %v2511 = vadd.f32 %v2315, %v2447
        %v2512 = vadd.f32 %v2316, %v2448
        %v2513 = vadd.f32 %v2317, %v2449
        %v2514 = vadd.f32 %v2318, %v2450
        %v2515 = vadd.f32 %v2319, %v2451
        %v2516 = vadd.f32 %v2320, %v2452
        %v2517 = vadd.f32 %v2321, %v2453
        %v2518 = vadd.f32 %v2322, %v2454
        %v2519 = vadd.f32 %v2323, %v2455
        %v2520 = vadd.f32 %v2324, %v2456
        %v2521 = vadd.f32 %v2325, %v2457
        %v2522 = vadd.f32 %v2326, %v2458
        %v2523 = vadd.f32 %v2327, %v2459
        %v2524 = vadd.f32 %v2328, %v2460
        %v2525 = vadd.f32 %v2329, %v2461
        %v2526 = vadd.f32 %v2330, %v2462
        %v2527 = vadd.f32 %v2331, %v2463
        %v2528 = vadd.f32 %v2332, %v2464
        %v2529 = vadd.f32 %v2333, %v2465
        %v2530 = vadd.f32 %v2334, %v2466
        %v2531 = vadd.f32 %v2335, %v2467
        %v2533 = vlaneseq
        %v2534 = vshrl.u32 %v2533, 7
        %v2535 = vsub.s32 0, %v2534
        %v2536 = vrot.slane %v808, %v2535
        %v2538 = vadd.f32 %v2468, %v2536
        %v2539 = vadd.f32 %v2469, %v2536
        %v2540 = vadd.f32 %v2470, %v2536
        %v2541 = vadd.f32 %v2471, %v2536
        %v2542 = vadd.f32 %v2472, %v2536
        %v2543 = vadd.f32 %v2473, %v2536
        %v2544 = vadd.f32 %v2474, %v2536
        %v2545 = vadd.f32 %v2475, %v2536
        %v2546 = vadd.f32 %v2476, %v2536
        %v2547 = vadd.f32 %v2477, %v2536
        %v2548 = vadd.f32 %v2478, %v2536
        %v2549 = vadd.f32 %v2479, %v2536
        %v2550 = vadd.f32 %v2480, %v2536
        %v2551 = vadd.f32 %v2481, %v2536
        %v2552 = vadd.f32 %v2482, %v2536
        %v2553 = vadd.f32 %v2483, %v2536
        %v2554 = vadd.f32 %v2484, %v2536
        %v2555 = vadd.f32 %v2485, %v2536
        %v2556 = vadd.f32 %v2486, %v2536
        %v2557 = vadd.f32 %v2487, %v2536
        %v2558 = vadd.f32 %v2488, %v2536
        %v2559 = vadd.f32 %v2489, %v2536
        %v2560 = vadd.f32 %v2490, %v2536
        %v2561 = vadd.f32 %v2491, %v2536
        %v2562 = vadd.f32 %v2492, %v2536
        %v2563 = vadd.f32 %v2493, %v2536
        %v2564 = vadd.f32 %v2494, %v2536
        %v2565 = vadd.f32 %v2495, %v2536
        %v2566 = vadd.f32 %v2496, %v2536
        %v2567 = vadd.f32 %v2497, %v2536
        %v2568 = vadd.f32 %v2498, %v2536
        %v2569 = vadd.f32 %v2499, %v2536
        %v2570 = vadd.f32 %v2500, %v2536
        %v2571 = vadd.f32 %v2501, %v2536
        %v2572 = vadd.f32 %v2502, %v2536
        %v2573 = vadd.f32 %v2503, %v2536
        %v2574 = vadd.f32 %v2504, %v2536
        %v2575 = vadd.f32 %v2505, %v2536
        %v2576 = vadd.f32 %v2506, %v2536
        %v2577 = vadd.f32 %v2507, %v2536
        %v2578 = vadd.f32 %v2508, %v2536
        %v2579 = vadd.f32 %v2509, %v2536
        %v2580 = vadd.f32 %v2510, %v2536
        %v2581 = vadd.f32 %v2511, %v2536
        %v2582 = vadd.f32 %v2512, %v2536
        %v2583 = vadd.f32 %v2513, %v2536
        %v2584 = vadd.f32 %v2514, %v2536
        %v2585 = vadd.f32 %v2515, %v2536
        %v2586 = vadd.f32 %v2516, %v2536
        %v2587 = vadd.f32 %v2517, %v2536
        %v2588 = vadd.f32 %v2518, %v2536
        %v2589 = vadd.f32 %v2519, %v2536
        %v2590 = vadd.f32 %v2520, %v2536
        %v2591 = vadd.f32 %v2521, %v2536
        %v2592 = vadd.f32 %v2522, %v2536
        %v2593 = vadd.f32 %v2523, %v2536
        %v2594 = vadd.f32 %v2524, %v2536
        %v2595 = vadd.f32 %v2525, %v2536
        %v2596 = vadd.f32 %v2526, %v2536
        %v2597 = vadd.f32 %v2527, %v2536
        %v2598 = vadd.f32 %v2528, %v2536
        %v2599 = vadd.f32 %v2529, %v2536
        %v2600 = vadd.f32 %v2530, %v2536
        %v2601 = vadd.f32 %v2531, %v2536
        %v2602 = vmul.f32 %v2538, 0.5
        %v2603 = vmul.f32 %v2539, 0.5
        %v2604 = vmul.f32 %v2540, 0.5
        %v2605 = vmul.f32 %v2541, 0.5
        %v2606 = vmul.f32 %v2542, 0.5
        %v2607 = vmul.f32 %v2543, 0.5
        %v2608 = vmul.f32 %v2544, 0.5
        %v2609 = vmul.f32 %v2545, 0.5
        %v2610 = vmul.f32 %v2546, 0.5
        %v2611 = vmul.f32 %v2547, 0.5
        %v2612 = vmul.f32 %v2548, 0.5
        %v2613 = vmul.f32 %v2549, 0.5
        %v2614 = vmul.f32 %v2550, 0.5
        %v2615 = vmul.f32 %v2551, 0.5
        %v2616 = vmul.f32 %v2552, 0.5
        %v2617 = vmul.f32 %v2553, 0.5
        %v2618 = vmul.f32 %v2554, 0.5
        %v2619 = vmul.f32 %v2555, 0.5
        %v2620 = vmul.f32 %v2556, 0.5
        %v2621 = vmul.f32 %v2557, 0.5
        %v2622 = vmul.f32 %v2558, 0.5
        %v2623 = vmul.f32 %v2559, 0.5
        %v2624 = vmul.f32 %v2560, 0.5
        %v2625 = vmul.f32 %v2561, 0.5
        %v2626 = vmul.f32 %v2562, 0.5
        %v2627 = vmul.f32 %v2563, 0.5
        %v2628 = vmul.f32 %v2564, 0.5
        %v2629 = vmul.f32 %v2565, 0.5
        %v2630 = vmul.f32 %v2566, 0.5
        %v2631 = vmul.f32 %v2567, 0.5
        %v2632 = vmul.f32 %v2568, 0.5
        %v2633 = vmul.f32 %v2569, 0.5
        %v2634 = vmul.f32 %v2570, 0.5
        %v2635 = vmul.f32 %v2571, 0.5
        %v2636 = vmul.f32 %v2572, 0.5
        %v2637 = vmul.f32 %v2573, 0.5
        %v2638 = vmul.f32 %v2574, 0.5
        %v2639 = vmul.f32 %v2575, 0.5
        %v2640 = vmul.f32 %v2576, 0.5
        %v2641 = vmul.f32 %v2577, 0.5
        %v2642 = vmul.f32 %v2578, 0.5
        %v2643 = vmul.f32 %v2579, 0.5
        %v2644 = vmul.f32 %v2580, 0.5
        %v2645 = vmul.f32 %v2581, 0.5
        %v2646 = vmul.f32 %v2582, 0.5
        %v2647 = vmul.f32 %v2583, 0.5
        %v2648 = vmul.f32 %v2584, 0.5
        %v2649 = vmul.f32 %v2585, 0.5
        %v2650 = vmul.f32 %v2586, 0.5
        %v2651 = vmul.f32 %v2587, 0.5
        %v2652 = vmul.f32 %v2588, 0.5
        %v2653 = vmul.f32 %v2589, 0.5
        %v2654 = vmul.f32 %v2590, 0.5
        %v2655 = vmul.f32 %v2591, 0.5
        %v2656 = vmul.f32 %v2592, 0.5
        %v2657 = vmul.f32 %v2593, 0.5
        %v2658 = vmul.f32 %v2594, 0.5
        %v2659 = vmul.f32 %v2595, 0.5
        %v2660 = vmul.f32 %v2596, 0.5
        %v2661 = vmul.f32 %v2597, 0.5
        %v2662 = vmul.f32 %v2598, 0.5
        %v2663 = vmul.f32 %v2599, 0.5
        %v2664 = vmul.f32 %v2600, 0.5
        %v2665 = vmul.f32 %v2601, 0.5
        %v2666 = vmul.f32 %v2538, 0.70710677
        %v2667 = vmul.f32 %v2539, 0.70710677
        %v2668 = vmul.f32 %v2540, 0.70710677
        %v2669 = vmul.f32 %v2541, 0.70710677
        %v2670 = vmul.f32 %v2542, 0.70710677
        %v2671 = vmul.f32 %v2543, 0.70710677
        %v2672 = vmul.f32 %v2544, 0.70710677
        %v2673 = vmul.f32 %v2545, 0.70710677
        %v2674 = vmul.f32 %v2546, 0.70710677
        %v2675 = vmul.f32 %v2547, 0.70710677
        %v2676 = vmul.f32 %v2548, 0.70710677
        %v2677 = vmul.f32 %v2549, 0.70710677
        %v2678 = vmul.f32 %v2550, 0.70710677
        %v2679 = vmul.f32 %v2551, 0.70710677
        %v2680 = vmul.f32 %v2552, 0.70710677
        %v2681 = vmul.f32 %v2553, 0.70710677
        %v2682 = vmul.f32 %v2554, 0.70710677
        %v2683 = vmul.f32 %v2555, 0.70710677
        %v2684 = vmul.f32 %v2556, 0.70710677
        %v2685 = vmul.f32 %v2557, 0.70710677
        %v2686 = vmul.f32 %v2558, 0.70710677
        %v2687 = vmul.f32 %v2559, 0.70710677
        %v2688 = vmul.f32 %v2560, 0.70710677
        %v2689 = vmul.f32 %v2561, 0.70710677
        %v2690 = vmul.f32 %v2562, 0.70710677
        %v2691 = vmul.f32 %v2563, 0.70710677
        %v2692 = vmul.f32 %v2564, 0.70710677
        %v2693 = vmul.f32 %v2565, 0.70710677
        %v2694 = vmul.f32 %v2566, 0.70710677
        %v2695 = vmul.f32 %v2567, 0.70710677
        %v2696 = vmul.f32 %v2568, 0.70710677
        %v2697 = vmul.f32 %v2569, 0.70710677
        %v2698 = vmul.f32 %v2570, 0.70710677
        %v2699 = vmul.f32 %v2571, 0.70710677
        %v2700 = vmul.f32 %v2572, 0.70710677
        %v2701 = vmul.f32 %v2573, 0.70710677
        %v2702 = vmul.f32 %v2574, 0.70710677
        %v2703 = vmul.f32 %v2575, 0.70710677
        %v2704 = vmul.f32 %v2576, 0.70710677
        %v2705 = vmul.f32 %v2577, 0.70710677
        %v2706 = vmul.f32 %v2578, 0.70710677
        %v2707 = vmul.f32 %v2579, 0.70710677
        %v2708 = vmul.f32 %v2580, 0.70710677
        %v2709 = vmul.f32 %v2581, 0.70710677
        %v2710 = vmul.f32 %v2582, 0.70710677
        %v2711 = vmul.f32 %v2583, 0.70710677
        %v2712 = vmul.f32 %v2584, 0.70710677
        %v2713 = vmul.f32 %v2585, 0.70710677
        %v2714 = vmul.f32 %v2586, 0.70710677
        %v2715 = vmul.f32 %v2587, 0.70710677
        %v2716 = vmul.f32 %v2588, 0.70710677
        %v2717 = vmul.f32 %v2589, 0.70710677
        %v2718 = vmul.f32 %v2590, 0.70710677
        %v2719 = vmul.f32 %v2591, 0.70710677
        %v2720 = vmul.f32 %v2592, 0.70710677
        %v2721 = vmul.f32 %v2593, 0.70710677
        %v2722 = vmul.f32 %v2594, 0.70710677
        %v2723 = vmul.f32 %v2595, 0.70710677
        %v2724 = vmul.f32 %v2596, 0.70710677
        %v2725 = vmul.f32 %v2597, 0.70710677
        %v2726 = vmul.f32 %v2598, 0.70710677
        %v2727 = vmul.f32 %v2599, 0.70710677
        %v2728 = vmul.f32 %v2600, 0.70710677
        %v2729 = vmul.f32 %v2601, 0.70710677
        %v2730 = verf.f32.pop %v2666
        %v2731 = verf.f32.pop %v2667
        %v2732 = verf.f32.pop %v2668
        %v2733 = verf.f32.pop %v2669
        %v2734 = verf.f32.pop %v2670
        %v2735 = verf.f32.pop %v2671
        %v2736 = verf.f32.pop %v2672
        %v2737 = verf.f32.pop %v2673
        %v2738 = verf.f32.pop %v2674
        %v2739 = verf.f32.pop %v2675
        %v2740 = verf.f32.pop %v2676
        %v2741 = verf.f32.pop %v2677
        %v2742 = verf.f32.pop %v2678
        %v2743 = verf.f32.pop %v2679
        %v2744 = verf.f32.pop %v2680
        %v2745 = verf.f32.pop %v2681
        %v2746 = verf.f32.pop %v2682
        %v2747 = verf.f32.pop %v2683
        %v2748 = verf.f32.pop %v2684
        %v2749 = verf.f32.pop %v2685
        %v2750 = verf.f32.pop %v2686
        %v2751 = verf.f32.pop %v2687
        %v2752 = verf.f32.pop %v2688
        %v2753 = verf.f32.pop %v2689
        %v2754 = verf.f32.pop %v2690
        %v2755 = verf.f32.pop %v2691
        %v2756 = verf.f32.pop %v2692
        %v2757 = verf.f32.pop %v2693
        %v2758 = verf.f32.pop %v2694
        %v2759 = verf.f32.pop %v2695
        %v2760 = verf.f32.pop %v2696
        %v2761 = verf.f32.pop %v2697
        %v2762 = verf.f32.pop %v2698
        %v2763 = verf.f32.pop %v2699
        %v2764 = verf.f32.pop %v2700
        %v2765 = verf.f32.pop %v2701
        %v2766 = verf.f32.pop %v2702
        %v2767 = verf.f32.pop %v2703
        %v2768 = verf.f32.pop %v2704
        %v2769 = verf.f32.pop %v2705
        %v2770 = verf.f32.pop %v2706
        %v2771 = verf.f32.pop %v2707
        %v2772 = verf.f32.pop %v2708
        %v2773 = verf.f32.pop %v2709
        %v2774 = verf.f32.pop %v2710
        %v2775 = verf.f32.pop %v2711
        %v2776 = verf.f32.pop %v2712
        %v2777 = verf.f32.pop %v2713
        %v2778 = verf.f32.pop %v2714
        %v2779 = verf.f32.pop %v2715
        %v2780 = verf.f32.pop %v2716
        %v2781 = verf.f32.pop %v2717
        %v2782 = verf.f32.pop %v2718
        %v2783 = verf.f32.pop %v2719
        %v2784 = verf.f32.pop %v2720
        %v2785 = verf.f32.pop %v2721
        %v2786 = verf.f32.pop %v2722
        %v2787 = verf.f32.pop %v2723
        %v2788 = verf.f32.pop %v2724
        %v2789 = verf.f32.pop %v2725
        %v2790 = verf.f32.pop %v2726
        %v2791 = verf.f32.pop %v2727
        %v2792 = verf.f32.pop %v2728
        %v2793 = verf.f32.pop %v2729
        %v2794 = vadd.f32 %v2730, 1.0
        %v2795 = vadd.f32 %v2731, 1.0
        %v2796 = vadd.f32 %v2732, 1.0
        %v2797 = vadd.f32 %v2733, 1.0
        %v2798 = vadd.f32 %v2734, 1.0
        %v2799 = vadd.f32 %v2735, 1.0
        %v2800 = vadd.f32 %v2736, 1.0
        %v2801 = vadd.f32 %v2737, 1.0
        %v2802 = vadd.f32 %v2738, 1.0
        %v2803 = vadd.f32 %v2739, 1.0
        %v2804 = vadd.f32 %v2740, 1.0
        %v2805 = vadd.f32 %v2741, 1.0
        %v2806 = vadd.f32 %v2742, 1.0
        %v2807 = vadd.f32 %v2743, 1.0
        %v2808 = vadd.f32 %v2744, 1.0
        %v2809 = vadd.f32 %v2745, 1.0
        %v2810 = vadd.f32 %v2746, 1.0
        %v2811 = vadd.f32 %v2747, 1.0
        %v2812 = vadd.f32 %v2748, 1.0
        %v2813 = vadd.f32 %v2749, 1.0
        %v2814 = vadd.f32 %v2750, 1.0
        %v2815 = vadd.f32 %v2751, 1.0
        %v2816 = vadd.f32 %v2752, 1.0
        %v2817 = vadd.f32 %v2753, 1.0
        %v2818 = vadd.f32 %v2754, 1.0
        %v2819 = vadd.f32 %v2755, 1.0
        %v2820 = vadd.f32 %v2756, 1.0
        %v2821 = vadd.f32 %v2757, 1.0
        %v2822 = vadd.f32 %v2758, 1.0
        %v2823 = vadd.f32 %v2759, 1.0
        %v2824 = vadd.f32 %v2760, 1.0
        %v2825 = vadd.f32 %v2761, 1.0
        %v2826 = vadd.f32 %v2762, 1.0
        %v2827 = vadd.f32 %v2763, 1.0
        %v2828 = vadd.f32 %v2764, 1.0
        %v2829 = vadd.f32 %v2765, 1.0
        %v2830 = vadd.f32 %v2766, 1.0
        %v2831 = vadd.f32 %v2767, 1.0
        %v2832 = vadd.f32 %v2768, 1.0
        %v2833 = vadd.f32 %v2769, 1.0
        %v2834 = vadd.f32 %v2770, 1.0
        %v2835 = vadd.f32 %v2771, 1.0
        %v2836 = vadd.f32 %v2772, 1.0
        %v2837 = vadd.f32 %v2773, 1.0
        %v2838 = vadd.f32 %v2774, 1.0
        %v2839 = vadd.f32 %v2775, 1.0
        %v2840 = vadd.f32 %v2776, 1.0
        %v2841 = vadd.f32 %v2777, 1.0
        %v2842 = vadd.f32 %v2778, 1.0
        %v2843 = vadd.f32 %v2779, 1.0
        %v2844 = vadd.f32 %v2780, 1.0
        %v2845 = vadd.f32 %v2781, 1.0
        %v2846 = vadd.f32 %v2782, 1.0
        %v2847 = vadd.f32 %v2783, 1.0
        %v2848 = vadd.f32 %v2784, 1.0
        %v2849 = vadd.f32 %v2785, 1.0
        %v2850 = vadd.f32 %v2786, 1.0
        %v2851 = vadd.f32 %v2787, 1.0
        %v2852 = vadd.f32 %v2788, 1.0
        %v2853 = vadd.f32 %v2789, 1.0
        %v2854 = vadd.f32 %v2790, 1.0
        %v2855 = vadd.f32 %v2791, 1.0
        %v2856 = vadd.f32 %v2792, 1.0
        %v2857 = vadd.f32 %v2793, 1.0
        %v2858 = vmul.f32 %v2602, %v2794
        %v2859 = vmul.f32 %v2603, %v2795
        %v2860 = vmul.f32 %v2604, %v2796
        %v2861 = vmul.f32 %v2605, %v2797
        %v2862 = vmul.f32 %v2606, %v2798
        %v2863 = vmul.f32 %v2607, %v2799
        %v2864 = vmul.f32 %v2608, %v2800
        %v2865 = vmul.f32 %v2609, %v2801
        %v2866 = vmul.f32 %v2610, %v2802
        %v2867 = vmul.f32 %v2611, %v2803
        %v2868 = vmul.f32 %v2612, %v2804
        %v2869 = vmul.f32 %v2613, %v2805
        %v2870 = vmul.f32 %v2614, %v2806
        %v2871 = vmul.f32 %v2615, %v2807
        %v2872 = vmul.f32 %v2616, %v2808
        %v2873 = vmul.f32 %v2617, %v2809
        %v2874 = vmul.f32 %v2618, %v2810
        %v2875 = vmul.f32 %v2619, %v2811
        %v2876 = vmul.f32 %v2620, %v2812
        %v2877 = vmul.f32 %v2621, %v2813
        %v2878 = vmul.f32 %v2622, %v2814
        %v2879 = vmul.f32 %v2623, %v2815
        %v2880 = vmul.f32 %v2624, %v2816
        %v2881 = vmul.f32 %v2625, %v2817
        %v2882 = vmul.f32 %v2626, %v2818
        %v2883 = vmul.f32 %v2627, %v2819
        %v2884 = vmul.f32 %v2628, %v2820
        %v2885 = vmul.f32 %v2629, %v2821
        %v2886 = vmul.f32 %v2630, %v2822
        %v2887 = vmul.f32 %v2631, %v2823
        %v2888 = vmul.f32 %v2632, %v2824
        %v2889 = vmul.f32 %v2633, %v2825
        %v2890 = vmul.f32 %v2634, %v2826
        %v2891 = vmul.f32 %v2635, %v2827
        %v2892 = vmul.f32 %v2636, %v2828
        %v2893 = vmul.f32 %v2637, %v2829
        %v2894 = vmul.f32 %v2638, %v2830
        %v2895 = vmul.f32 %v2639, %v2831
        %v2896 = vmul.f32 %v2640, %v2832
        %v2897 = vmul.f32 %v2641, %v2833
        %v2898 = vmul.f32 %v2642, %v2834
        %v2899 = vmul.f32 %v2643, %v2835
        %v2900 = vmul.f32 %v2644, %v2836
        %v2901 = vmul.f32 %v2645, %v2837
        %v2902 = vmul.f32 %v2646, %v2838
        %v2903 = vmul.f32 %v2647, %v2839
        %v2904 = vmul.f32 %v2648, %v2840
        %v2905 = vmul.f32 %v2649, %v2841
        %v2906 = vmul.f32 %v2650, %v2842
        %v2907 = vmul.f32 %v2651, %v2843
        %v2908 = vmul.f32 %v2652, %v2844
        %v2909 = vmul.f32 %v2653, %v2845
        %v2910 = vmul.f32 %v2654, %v2846
        %v2911 = vmul.f32 %v2655, %v2847
        %v2912 = vmul.f32 %v2656, %v2848
        %v2913 = vmul.f32 %v2657, %v2849
        %v2914 = vmul.f32 %v2658, %v2850
        %v2915 = vmul.f32 %v2659, %v2851
        %v2916 = vmul.f32 %v2660, %v2852
        %v2917 = vmul.f32 %v2661, %v2853
        %v2918 = vmul.f32 %v2662, %v2854
        %v2919 = vmul.f32 %v2663, %v2855
        %v2920 = vmul.f32 %v2664, %v2856
        %v2921 = vmul.f32 %v2665, %v2857
        %v2922 = vadd.f32 %v2858, %v2890
        %v2923 = vadd.f32 %v2859, %v2891
        %v2924 = vadd.f32 %v2860, %v2892
        %v2925 = vadd.f32 %v2861, %v2893
        %v2926 = vadd.f32 %v2862, %v2894
        %v2927 = vadd.f32 %v2863, %v2895
        %v2928 = vadd.f32 %v2864, %v2896
        %v2929 = vadd.f32 %v2865, %v2897
        %v2930 = vadd.f32 %v2866, %v2898
        %v2931 = vadd.f32 %v2867, %v2899
        %v2932 = vadd.f32 %v2868, %v2900
        %v2933 = vadd.f32 %v2869, %v2901
        %v2934 = vadd.f32 %v2870, %v2902
        %v2935 = vadd.f32 %v2871, %v2903
        %v2936 = vadd.f32 %v2872, %v2904
        %v2937 = vadd.f32 %v2873, %v2905
        %v2938 = vadd.f32 %v2874, %v2906
        %v2939 = vadd.f32 %v2875, %v2907
        %v2940 = vadd.f32 %v2876, %v2908
        %v2941 = vadd.f32 %v2877, %v2909
        %v2942 = vadd.f32 %v2878, %v2910
        %v2943 = vadd.f32 %v2879, %v2911
        %v2944 = vadd.f32 %v2880, %v2912
        %v2945 = vadd.f32 %v2881, %v2913
        %v2946 = vadd.f32 %v2882, %v2914
        %v2947 = vadd.f32 %v2883, %v2915
        %v2948 = vadd.f32 %v2884, %v2916
        %v2949 = vadd.f32 %v2885, %v2917
        %v2950 = vadd.f32 %v2886, %v2918
        %v2951 = vadd.f32 %v2887, %v2919
        %v2952 = vadd.f32 %v2888, %v2920
        %v2953 = vadd.f32 %v2889, %v2921
        %v2954 = vadd.f32 %v2922, %v2924
        %v2955 = vadd.f32 %v2954, %v2926
        %v2956 = vadd.f32 %v2955, %v2928
        %v2957 = vadd.f32 %v2956, %v2930
        %v2958 = vadd.f32 %v2957, %v2932
        %v2959 = vadd.f32 %v2958, %v2934
        %v2960 = vadd.f32 %v2959, %v2936
        %v2961 = vadd.f32 %v2960, %v2938
        %v2962 = vadd.f32 %v2961, %v2940
        %v2963 = vadd.f32 %v2962, %v2942
        %v2964 = vadd.f32 %v2963, %v2944
        %v2965 = vadd.f32 %v2964, %v2946
        %v2966 = vadd.f32 %v2965, %v2948
        %v2967 = vadd.f32 %v2966, %v2950
        %v2968 = vadd.f32 %v2967, %v2952
        %v2969 = vadd.f32 %v2923, %v2925
        %v2970 = vadd.f32 %v2969, %v2927
        %v2971 = vadd.f32 %v2970, %v2929
        %v2972 = vadd.f32 %v2971, %v2931
        %v2973 = vadd.f32 %v2972, %v2933
        %v2974 = vadd.f32 %v2973, %v2935
        %v2975 = vadd.f32 %v2974, %v2937
        %v2976 = vadd.f32 %v2975, %v2939
        %v2977 = vadd.f32 %v2976, %v2941
        %v2978 = vadd.f32 %v2977, %v2943
        %v2979 = vadd.f32 %v2978, %v2945
        %v2980 = vadd.f32 %v2979, %v2947
        %v2981 = vadd.f32 %v2980, %v2949
        %v2982 = vadd.f32 %v2981, %v2951
        %v2983 = vadd.f32 %v2982, %v2953
        %v2984 = vadd.f32 %v2968, %v2983
        %v2985 = vrot.slane %v2984, 4
        %v2986 = vadd.f32 %v2984, %v2985
        %v2987 = vrot.slane %v2986, 2
        %v2988 = vadd.f32 %v2986, %v2987
        %v2989 = vrot.slane %v2988, 1
        %v2990 = vadd.f32 %v2988, %v2989
        %v2991 = vmul.f32 %v2990, 0.001953125
        %v2992 = vsub.f32 %v2858, %v2991
        %v2993 = vsub.f32 %v2859, %v2991
        %v2994 = vsub.f32 %v2860, %v2991
        %v2995 = vsub.f32 %v2861, %v2991
        %v2996 = vsub.f32 %v2862, %v2991
        %v2997 = vsub.f32 %v2863, %v2991
        %v2998 = vsub.f32 %v2864, %v2991
        %v2999 = vsub.f32 %v2865, %v2991
        %v3000 = vsub.f32 %v2866, %v2991
        %v3001 = vsub.f32 %v2867, %v2991
        %v3002 = vsub.f32 %v2868, %v2991
        %v3003 = vsub.f32 %v2869, %v2991
        %v3004 = vsub.f32 %v2870, %v2991
        %v3005 = vsub.f32 %v2871, %v2991
        %v3006 = vsub.f32 %v2872, %v2991
        %v3007 = vsub.f32 %v2873, %v2991
        %v3008 = vsub.f32 %v2874, %v2991
        %v3009 = vsub.f32 %v2875, %v2991
        %v3010 = vsub.f32 %v2876, %v2991
        %v3011 = vsub.f32 %v2877, %v2991
        %v3012 = vsub.f32 %v2878, %v2991
        %v3013 = vsub.f32 %v2879, %v2991
        %v3014 = vsub.f32 %v2880, %v2991
        %v3015 = vsub.f32 %v2881, %v2991
        %v3016 = vsub.f32 %v2882, %v2991
        %v3017 = vsub.f32 %v2883, %v2991
        %v3018 = vsub.f32 %v2884, %v2991
        %v3019 = vsub.f32 %v2885, %v2991
        %v3020 = vsub.f32 %v2886, %v2991
        %v3021 = vsub.f32 %v2887, %v2991
        %v3022 = vsub.f32 %v2888, %v2991
        %v3023 = vsub.f32 %v2889, %v2991
        %v3024 = vsub.f32 %v2890, %v2991
        %v3025 = vsub.f32 %v2891, %v2991
        %v3026 = vsub.f32 %v2892, %v2991
        %v3027 = vsub.f32 %v2893, %v2991
        %v3028 = vsub.f32 %v2894, %v2991
        %v3029 = vsub.f32 %v2895, %v2991
        %v3030 = vsub.f32 %v2896, %v2991
        %v3031 = vsub.f32 %v2897, %v2991
        %v3032 = vsub.f32 %v2898, %v2991
        %v3033 = vsub.f32 %v2899, %v2991
        %v3034 = vsub.f32 %v2900, %v2991
        %v3035 = vsub.f32 %v2901, %v2991
        %v3036 = vsub.f32 %v2902, %v2991
        %v3037 = vsub.f32 %v2903, %v2991
        %v3038 = vsub.f32 %v2904, %v2991
        %v3039 = vsub.f32 %v2905, %v2991
        %v3040 = vsub.f32 %v2906, %v2991
        %v3041 = vsub.f32 %v2907, %v2991
        %v3042 = vsub.f32 %v2908, %v2991
        %v3043 = vsub.f32 %v2909, %v2991
        %v3044 = vsub.f32 %v2910, %v2991
        %v3045 = vsub.f32 %v2911, %v2991
        %v3046 = vsub.f32 %v2912, %v2991
        %v3047 = vsub.f32 %v2913, %v2991
        %v3048 = vsub.f32 %v2914, %v2991
        %v3049 = vsub.f32 %v2915, %v2991
        %v3050 = vsub.f32 %v2916, %v2991
        %v3051 = vsub.f32 %v2917, %v2991
        %v3052 = vsub.f32 %v2918, %v2991
        %v3053 = vsub.f32 %v2919, %v2991
        %v3054 = vsub.f32 %v2920, %v2991
        %v3055 = vsub.f32 %v2921, %v2991
        %v3056 = vmul.f32 %v2992, %v2992
        %v3057 = vmul.f32 %v2993, %v2993
        %v3058 = vmul.f32 %v2994, %v2994
        %v3059 = vmul.f32 %v2995, %v2995
        %v3060 = vmul.f32 %v2996, %v2996
        %v3061 = vmul.f32 %v2997, %v2997
        %v3062 = vmul.f32 %v2998, %v2998
        %v3063 = vmul.f32 %v2999, %v2999
        %v3064 = vmul.f32 %v3000, %v3000
        %v3065 = vmul.f32 %v3001, %v3001
        %v3066 = vmul.f32 %v3002, %v3002
        %v3067 = vmul.f32 %v3003, %v3003
        %v3068 = vmul.f32 %v3004, %v3004
        %v3069 = vmul.f32 %v3005, %v3005
        %v3070 = vmul.f32 %v3006, %v3006
        %v3071 = vmul.f32 %v3007, %v3007
        %v3072 = vmul.f32 %v3008, %v3008
        %v3073 = vmul.f32 %v3009, %v3009
        %v3074 = vmul.f32 %v3010, %v3010
        %v3075 = vmul.f32 %v3011, %v3011
        %v3076 = vmul.f32 %v3012, %v3012
        %v3077 = vmul.f32 %v3013, %v3013
        %v3078 = vmul.f32 %v3014, %v3014
        %v3079 = vmul.f32 %v3015, %v3015
        %v3080 = vmul.f32 %v3016, %v3016
        %v3081 = vmul.f32 %v3017, %v3017
        %v3082 = vmul.f32 %v3018, %v3018
        %v3083 = vmul.f32 %v3019, %v3019
        %v3084 = vmul.f32 %v3020, %v3020
        %v3085 = vmul.f32 %v3021, %v3021
        %v3086 = vmul.f32 %v3022, %v3022
        %v3087 = vmul.f32 %v3023, %v3023
        %v3088 = vmul.f32 %v3024, %v3024
        %v3089 = vmul.f32 %v3025, %v3025
        %v3090 = vmul.f32 %v3026, %v3026
        %v3091 = vmul.f32 %v3027, %v3027
        %v3092 = vmul.f32 %v3028, %v3028
        %v3093 = vmul.f32 %v3029, %v3029
        %v3094 = vmul.f32 %v3030, %v3030
        %v3095 = vmul.f32 %v3031, %v3031
        %v3096 = vmul.f32 %v3032, %v3032
        %v3097 = vmul.f32 %v3033, %v3033
        %v3098 = vmul.f32 %v3034, %v3034
        %v3099 = vmul.f32 %v3035, %v3035
        %v3100 = vmul.f32 %v3036, %v3036
        %v3101 = vmul.f32 %v3037, %v3037
        %v3102 = vmul.f32 %v3038, %v3038
        %v3103 = vmul.f32 %v3039, %v3039
        %v3104 = vmul.f32 %v3040, %v3040
        %v3105 = vmul.f32 %v3041, %v3041
        %v3106 = vmul.f32 %v3042, %v3042
        %v3107 = vmul.f32 %v3043, %v3043
        %v3108 = vmul.f32 %v3044, %v3044
        %v3109 = vmul.f32 %v3045, %v3045
        %v3110 = vmul.f32 %v3046, %v3046
        %v3111 = vmul.f32 %v3047, %v3047
        %v3112 = vmul.f32 %v3048, %v3048
        %v3113 = vmul.f32 %v3049, %v3049
        %v3114 = vmul.f32 %v3050, %v3050
        %v3115 = vmul.f32 %v3051, %v3051
        %v3116 = vmul.f32 %v3052, %v3052
        %v3117 = vmul.f32 %v3053, %v3053
        %v3118 = vmul.f32 %v3054, %v3054
        %v3119 = vmul.f32 %v3055, %v3055
        %v3120 = vadd.f32 %v3056, %v3088
        %v3121 = vadd.f32 %v3057, %v3089
        %v3122 = vadd.f32 %v3058, %v3090
        %v3123 = vadd.f32 %v3059, %v3091
        %v3124 = vadd.f32 %v3060, %v3092
        %v3125 = vadd.f32 %v3061, %v3093
        %v3126 = vadd.f32 %v3062, %v3094
        %v3127 = vadd.f32 %v3063, %v3095
        %v3128 = vadd.f32 %v3064, %v3096
        %v3129 = vadd.f32 %v3065, %v3097
        %v3130 = vadd.f32 %v3066, %v3098
        %v3131 = vadd.f32 %v3067, %v3099
        %v3132 = vadd.f32 %v3068, %v3100
        %v3133 = vadd.f32 %v3069, %v3101
        %v3134 = vadd.f32 %v3070, %v3102
        %v3135 = vadd.f32 %v3071, %v3103
        %v3136 = vadd.f32 %v3072, %v3104
        %v3137 = vadd.f32 %v3073, %v3105
        %v3138 = vadd.f32 %v3074, %v3106
        %v3139 = vadd.f32 %v3075, %v3107
        %v3140 = vadd.f32 %v3076, %v3108
        %v3141 = vadd.f32 %v3077, %v3109
        %v3142 = vadd.f32 %v3078, %v3110
        %v3143 = vadd.f32 %v3079, %v3111
        %v3144 = vadd.f32 %v3080, %v3112
        %v3145 = vadd.f32 %v3081, %v3113
        %v3146 = vadd.f32 %v3082, %v3114
        %v3147 = vadd.f32 %v3083, %v3115
        %v3148 = vadd.f32 %v3084, %v3116
        %v3149 = vadd.f32 %v3085, %v3117
        %v3150 = vadd.f32 %v3086, %v3118
        %v3151 = vadd.f32 %v3087, %v3119
        %v3152 = vadd.f32 %v3120, %v3122
        %v3153 = vadd.f32 %v3152, %v3124
        %v3154 = vadd.f32 %v3153, %v3126
        %v3155 = vadd.f32 %v3154, %v3128
        %v3156 = vadd.f32 %v3155, %v3130
        %v3157 = vadd.f32 %v3156, %v3132
        %v3158 = vadd.f32 %v3157, %v3134
        %v3159 = vadd.f32 %v3158, %v3136
        %v3160 = vadd.f32 %v3159, %v3138
        %v3161 = vadd.f32 %v3160, %v3140
        %v3162 = vadd.f32 %v3161, %v3142
        %v3163 = vadd.f32 %v3162, %v3144
        %v3164 = vadd.f32 %v3163, %v3146
        %v3165 = vadd.f32 %v3164, %v3148
        %v3166 = vadd.f32 %v3165, %v3150
        %v3167 = vadd.f32 %v3121, %v3123
        %v3168 = vadd.f32 %v3167, %v3125
        %v3169 = vadd.f32 %v3168, %v3127
        %v3170 = vadd.f32 %v3169, %v3129
        %v3171 = vadd.f32 %v3170, %v3131
        %v3172 = vadd.f32 %v3171, %v3133
        %v3173 = vadd.f32 %v3172, %v3135
        %v3174 = vadd.f32 %v3173, %v3137
        %v3175 = vadd.f32 %v3174, %v3139
        %v3176 = vadd.f32 %v3175, %v3141
        %v3177 = vadd.f32 %v3176, %v3143
        %v3178 = vadd.f32 %v3177, %v3145
        %v3179 = vadd.f32 %v3178, %v3147
        %v3180 = vadd.f32 %v3179, %v3149
        %v3181 = vadd.f32 %v3180, %v3151
        %v3182 = vadd.f32 %v3166, %v3181
        %v3183 = vrot.slane %v3182, 4
        %v3184 = vadd.f32 %v3182, %v3183
        %v3185 = vrot.slane %v3184, 2
        %v3186 = vadd.f32 %v3184, %v3185
        %v3187 = vrot.slane %v3186, 1
        %v3188 = vadd.f32 %v3186, %v3187
        %v3189 = vmul.f32 %v3188, 0.001953125
        %v3190 = vadd.f32 %v3189, 1e-05
        %v3191 = vrsqrt.pop %v3190
        %v3192 = vmul.f32 %v2992, %v3191
        %v3193 = vmul.f32 %v2993, %v3191
        %v3194 = vmul.f32 %v2994, %v3191
        %v3195 = vmul.f32 %v2995, %v3191
        %v3196 = vmul.f32 %v2996, %v3191
        %v3197 = vmul.f32 %v2997, %v3191
        %v3198 = vmul.f32 %v2998, %v3191
        %v3199 = vmul.f32 %v2999, %v3191
        %v3200 = vmul.f32 %v3000, %v3191
        %v3201 = vmul.f32 %v3001, %v3191
        %v3202 = vmul.f32 %v3002, %v3191
        %v3203 = vmul.f32 %v3003, %v3191
        %v3204 = vmul.f32 %v3004, %v3191
        %v3205 = vmul.f32 %v3005, %v3191
        %v3206 = vmul.f32 %v3006, %v3191
        %v3207 = vmul.f32 %v3007, %v3191
        %v3208 = vmul.f32 %v3008, %v3191
        %v3209 = vmul.f32 %v3009, %v3191
        %v3210 = vmul.f32 %v3010, %v3191
        %v3211 = vmul.f32 %v3011, %v3191
        %v3212 = vmul.f32 %v3012, %v3191
        %v3213 = vmul.f32 %v3013, %v3191
        %v3214 = vmul.f32 %v3014, %v3191
        %v3215 = vmul.f32 %v3015, %v3191
        %v3216 = vmul.f32 %v3016, %v3191
        %v3217 = vmul.f32 %v3017, %v3191
        %v3218 = vmul.f32 %v3018, %v3191
        %v3219 = vmul.f32 %v3019, %v3191
        %v3220 = vmul.f32 %v3020, %v3191
        %v3221 = vmul.f32 %v3021, %v3191
        %v3222 = vmul.f32 %v3022, %v3191
        %v3223 = vmul.f32 %v3023, %v3191
        %v3224 = vmul.f32 %v3024, %v3191
        %v3225 = vmul.f32 %v3025, %v3191
        %v3226 = vmul.f32 %v3026, %v3191
        %v3227 = vmul.f32 %v3027, %v3191
        %v3228 = vmul.f32 %v3028, %v3191
        %v3229 = vmul.f32 %v3029, %v3191
        %v3230 = vmul.f32 %v3030, %v3191
        %v3231 = vmul.f32 %v3031, %v3191
        %v3232 = vmul.f32 %v3032, %v3191
        %v3233 = vmul.f32 %v3033, %v3191
        %v3234 = vmul.f32 %v3034, %v3191
        %v3235 = vmul.f32 %v3035, %v3191
        %v3236 = vmul.f32 %v3036, %v3191
        %v3237 = vmul.f32 %v3037, %v3191
        %v3238 = vmul.f32 %v3038, %v3191
        %v3239 = vmul.f32 %v3039, %v3191
        %v3240 = vmul.f32 %v3040, %v3191
        %v3241 = vmul.f32 %v3041, %v3191
        %v3242 = vmul.f32 %v3042, %v3191
        %v3243 = vmul.f32 %v3043, %v3191
        %v3244 = vmul.f32 %v3044, %v3191
        %v3245 = vmul.f32 %v3045, %v3191
        %v3246 = vmul.f32 %v3046, %v3191
        %v3247 = vmul.f32 %v3047, %v3191
        %v3248 = vmul.f32 %v3048, %v3191
        %v3249 = vmul.f32 %v3049, %v3191
        %v3250 = vmul.f32 %v3050, %v3191
        %v3251 = vmul.f32 %v3051, %v3191
        %v3252 = vmul.f32 %v3052, %v3191
        %v3253 = vmul.f32 %v3053, %v3191
        %v3254 = vmul.f32 %v3054, %v3191
        %v3255 = vmul.f32 %v3055, %v3191
        %v3257 = vlaneseq
        %v3258 = vshrl.u32 %v3257, 7
        %v3259 = vsub.s32 0, %v3258
        %v3260 = vrot.slane %v809, %v3259
        %v3262 = vmul.f32 %v3192, %v3260
        %v3263 = vmul.f32 %v3193, %v3260
        %v3264 = vmul.f32 %v3194, %v3260
        %v3265 = vmul.f32 %v3195, %v3260
        %v3266 = vmul.f32 %v3196, %v3260
        %v3267 = vmul.f32 %v3197, %v3260
        %v3268 = vmul.f32 %v3198, %v3260
        %v3269 = vmul.f32 %v3199, %v3260
        %v3270 = vmul.f32 %v3200, %v3260
        %v3271 = vmul.f32 %v3201, %v3260
        %v3272 = vmul.f32 %v3202, %v3260
        %v3273 = vmul.f32 %v3203, %v3260
        %v3274 = vmul.f32 %v3204, %v3260
        %v3275 = vmul.f32 %v3205, %v3260
        %v3276 = vmul.f32 %v3206, %v3260
        %v3277 = vmul.f32 %v3207, %v3260
        %v3278 = vmul.f32 %v3208, %v3260
        %v3279 = vmul.f32 %v3209, %v3260
        %v3280 = vmul.f32 %v3210, %v3260
        %v3281 = vmul.f32 %v3211, %v3260
        %v3282 = vmul.f32 %v3212, %v3260
        %v3283 = vmul.f32 %v3213, %v3260
        %v3284 = vmul.f32 %v3214, %v3260
        %v3285 = vmul.f32 %v3215, %v3260
        %v3286 = vmul.f32 %v3216, %v3260
        %v3287 = vmul.f32 %v3217, %v3260
        %v3288 = vmul.f32 %v3218, %v3260
        %v3289 = vmul.f32 %v3219, %v3260
        %v3290 = vmul.f32 %v3220, %v3260
        %v3291 = vmul.f32 %v3221, %v3260
        %v3292 = vmul.f32 %v3222, %v3260
        %v3293 = vmul.f32 %v3223, %v3260
        %v3294 = vmul.f32 %v3224, %v3260
        %v3295 = vmul.f32 %v3225, %v3260
        %v3296 = vmul.f32 %v3226, %v3260
        %v3297 = vmul.f32 %v3227, %v3260
        %v3298 = vmul.f32 %v3228, %v3260
        %v3299 = vmul.f32 %v3229, %v3260
        %v3300 = vmul.f32 %v3230, %v3260
        %v3301 = vmul.f32 %v3231, %v3260
        %v3302 = vmul.f32 %v3232, %v3260
        %v3303 = vmul.f32 %v3233, %v3260
        %v3304 = vmul.f32 %v3234, %v3260
        %v3305 = vmul.f32 %v3235, %v3260
        %v3306 = vmul.f32 %v3236, %v3260
        %v3307 = vmul.f32 %v3237, %v3260
        %v3308 = vmul.f32 %v3238, %v3260
        %v3309 = vmul.f32 %v3239, %v3260
        %v3310 = vmul.f32 %v3240, %v3260
        %v3311 = vmul.f32 %v3241, %v3260
        %v3312 = vmul.f32 %v3242, %v3260
        %v3313 = vmul.f32 %v3243, %v3260
        %v3314 = vmul.f32 %v3244, %v3260
        %v3315 = vmul.f32 %v3245, %v3260
        %v3316 = vmul.f32 %v3246, %v3260
        %v3317 = vmul.f32 %v3247, %v3260
        %v3318 = vmul.f32 %v3248, %v3260
        %v3319 = vmul.f32 %v3249, %v3260
        %v3320 = vmul.f32 %v3250, %v3260
        %v3321 = vmul.f32 %v3251, %v3260
        %v3322 = vmul.f32 %v3252, %v3260
        %v3323 = vmul.f32 %v3253, %v3260
        %v3324 = vmul.f32 %v3254, %v3260
        %v3325 = vmul.f32 %v3255, %v3260
        %v3327 = vlaneseq
        %v3328 = vshrl.u32 %v3327, 7
        %v3329 = vsub.s32 0, %v3328
        %v3330 = vrot.slane %v810, %v3329
        %v3332 = vadd.f32 %v3262, %v3330
        %v3333 = vadd.f32 %v3263, %v3330
        %v3334 = vadd.f32 %v3264, %v3330
        %v3335 = vadd.f32 %v3265, %v3330
        %v3336 = vadd.f32 %v3266, %v3330
        %v3337 = vadd.f32 %v3267, %v3330
        %v3338 = vadd.f32 %v3268, %v3330
        %v3339 = vadd.f32 %v3269, %v3330
        %v3340 = vadd.f32 %v3270, %v3330
        %v3341 = vadd.f32 %v3271, %v3330
        %v3342 = vadd.f32 %v3272, %v3330
        %v3343 = vadd.f32 %v3273, %v3330
        %v3344 = vadd.f32 %v3274, %v3330
        %v3345 = vadd.f32 %v3275, %v3330
        %v3346 = vadd.f32 %v3276, %v3330
        %v3347 = vadd.f32 %v3277, %v3330
        %v3348 = vadd.f32 %v3278, %v3330
        %v3349 = vadd.f32 %v3279, %v3330
        %v3350 = vadd.f32 %v3280, %v3330
        %v3351 = vadd.f32 %v3281, %v3330
        %v3352 = vadd.f32 %v3282, %v3330
        %v3353 = vadd.f32 %v3283, %v3330
        %v3354 = vadd.f32 %v3284, %v3330
        %v3355 = vadd.f32 %v3285, %v3330
        %v3356 = vadd.f32 %v3286, %v3330
        %v3357 = vadd.f32 %v3287, %v3330
        %v3358 = vadd.f32 %v3288, %v3330
        %v3359 = vadd.f32 %v3289, %v3330
        %v3360 = vadd.f32 %v3290, %v3330
        %v3361 = vadd.f32 %v3291, %v3330
        %v3362 = vadd.f32 %v3292, %v3330
        %v3363 = vadd.f32 %v3293, %v3330
        %v3364 = vadd.f32 %v3294, %v3330
        %v3365 = vadd.f32 %v3295, %v3330
        %v3366 = vadd.f32 %v3296, %v3330
        %v3367 = vadd.f32 %v3297, %v3330
        %v3368 = vadd.f32 %v3298, %v3330
        %v3369 = vadd.f32 %v3299, %v3330
        %v3370 = vadd.f32 %v3300, %v3330
        %v3371 = vadd.f32 %v3301, %v3330
        %v3372 = vadd.f32 %v3302, %v3330
        %v3373 = vadd.f32 %v3303, %v3330
        %v3374 = vadd.f32 %v3304, %v3330
        %v3375 = vadd.f32 %v3305, %v3330
        %v3376 = vadd.f32 %v3306, %v3330
        %v3377 = vadd.f32 %v3307, %v3330
        %v3378 = vadd.f32 %v3308, %v3330
        %v3379 = vadd.f32 %v3309, %v3330
        %v3380 = vadd.f32 %v3310, %v3330
        %v3381 = vadd.f32 %v3311, %v3330
        %v3382 = vadd.f32 %v3312, %v3330
        %v3383 = vadd.f32 %v3313, %v3330
        %v3384 = vadd.f32 %v3314, %v3330
        %v3385 = vadd.f32 %v3315, %v3330
        %v3386 = vadd.f32 %v3316, %v3330
        %v3387 = vadd.f32 %v3317, %v3330
        %v3388 = vadd.f32 %v3318, %v3330
        %v3389 = vadd.f32 %v3319, %v3330
        %v3390 = vadd.f32 %v3320, %v3330
        %v3391 = vadd.f32 %v3321, %v3330
        %v3392 = vadd.f32 %v3322, %v3330
        %v3393 = vadd.f32 %v3323, %v3330
        %v3394 = vadd.f32 %v3324, %v3330
        %v3395 = vadd.f32 %v3325, %v3330
        %v3396 = vadd.f32 %v3332, %v1551
        %v3397 = vadd.f32 %v3333, %v1552
        %v3398 = vadd.f32 %v3334, %v1553
        %v3399 = vadd.f32 %v3335, %v1554
        %v3400 = vadd.f32 %v3336, %v1555
        %v3401 = vadd.f32 %v3337, %v1556
        %v3402 = vadd.f32 %v3338, %v1557
        %v3403 = vadd.f32 %v3339, %v1558
        %v3404 = vadd.f32 %v3340, %v1559
        %v3405 = vadd.f32 %v3341, %v1560
        %v3406 = vadd.f32 %v3342, %v1561
        %v3407 = vadd.f32 %v3343, %v1562
        %v3408 = vadd.f32 %v3344, %v1563
        %v3409 = vadd.f32 %v3345, %v1564
        %v3410 = vadd.f32 %v3346, %v1565
        %v3411 = vadd.f32 %v3347, %v1566
        %v3412 = vadd.f32 %v3348, %v1567
        %v3413 = vadd.f32 %v3349, %v1568
        %v3414 = vadd.f32 %v3350, %v1569
        %v3415 = vadd.f32 %v3351, %v1570
        %v3416 = vadd.f32 %v3352, %v1571
        %v3417 = vadd.f32 %v3353, %v1572
        %v3418 = vadd.f32 %v3354, %v1573
        %v3419 = vadd.f32 %v3355, %v1574
        %v3420 = vadd.f32 %v3356, %v1575
        %v3421 = vadd.f32 %v3357, %v1576
        %v3422 = vadd.f32 %v3358, %v1577
        %v3423 = vadd.f32 %v3359, %v1578
        %v3424 = vadd.f32 %v3360, %v1579
        %v3425 = vadd.f32 %v3361, %v1580
        %v3426 = vadd.f32 %v3362, %v1581
        %v3427 = vadd.f32 %v3363, %v1582
        %v3428 = vadd.f32 %v3364, %v1583
        %v3429 = vadd.f32 %v3365, %v1584
        %v3430 = vadd.f32 %v3366, %v1585
        %v3431 = vadd.f32 %v3367, %v1586
        %v3432 = vadd.f32 %v3368, %v1587
        %v3433 = vadd.f32 %v3369, %v1588
        %v3434 = vadd.f32 %v3370, %v1589
        %v3435 = vadd.f32 %v3371, %v1590
        %v3436 = vadd.f32 %v3372, %v1591
        %v3437 = vadd.f32 %v3373, %v1592
        %v3438 = vadd.f32 %v3374, %v1593
        %v3439 = vadd.f32 %v3375, %v1594
        %v3440 = vadd.f32 %v3376, %v1595
        %v3441 = vadd.f32 %v3377, %v1596
        %v3442 = vadd.f32 %v3378, %v1597
        %v3443 = vadd.f32 %v3379, %v1598
        %v3444 = vadd.f32 %v3380, %v1599
        %v3445 = vadd.f32 %v3381, %v1600
        %v3446 = vadd.f32 %v3382, %v1601
        %v3447 = vadd.f32 %v3383, %v1602
        %v3448 = vadd.f32 %v3384, %v1603
        %v3449 = vadd.f32 %v3385, %v1604
        %v3450 = vadd.f32 %v3386, %v1605
        %v3451 = vadd.f32 %v3387, %v1606
        %v3452 = vadd.f32 %v3388, %v1607
        %v3453 = vadd.f32 %v3389, %v1608
        %v3454 = vadd.f32 %v3390, %v1609
        %v3455 = vadd.f32 %v3391, %v1610
        %v3456 = vadd.f32 %v3392, %v1611
        %v3457 = vadd.f32 %v3393, %v1612
        %v3458 = vadd.f32 %v3394, %v1613
        %v3459 = vadd.f32 %v3395, %v1614
        %v3460 = vpack.c.bf16 %v3397, %v3396
        %v3461 = vpack.c.bf16 %v3399, %v3398
        %v3462 = vpack.c.bf16 %v3401, %v3400
        %v3463 = vpack.c.bf16 %v3403, %v3402
        %v3464 = vpack.c.bf16 %v3405, %v3404
        %v3465 = vpack.c.bf16 %v3407, %v3406
        %v3466 = vpack.c.bf16 %v3409, %v3408
        %v3467 = vpack.c.bf16 %v3411, %v3410
        %v3468 = vpack.c.bf16 %v3413, %v3412
        %v3469 = vpack.c.bf16 %v3415, %v3414
        %v3470 = vpack.c.bf16 %v3417, %v3416
        %v3471 = vpack.c.bf16 %v3419, %v3418
        %v3472 = vpack.c.bf16 %v3421, %v3420
        %v3473 = vpack.c.bf16 %v3423, %v3422
        %v3474 = vpack.c.bf16 %v3425, %v3424
        %v3475 = vpack.c.bf16 %v3427, %v3426
        %v3476 = vpack.c.bf16 %v3429, %v3428
        %v3477 = vpack.c.bf16 %v3431, %v3430
        %v3478 = vpack.c.bf16 %v3433, %v3432
        %v3479 = vpack.c.bf16 %v3435, %v3434
        %v3480 = vpack.c.bf16 %v3437, %v3436
        %v3481 = vpack.c.bf16 %v3439, %v3438
        %v3482 = vpack.c.bf16 %v3441, %v3440
        %v3483 = vpack.c.bf16 %v3443, %v3442
        %v3484 = vpack.c.bf16 %v3445, %v3444
        %v3485 = vpack.c.bf16 %v3447, %v3446
        %v3486 = vpack.c.bf16 %v3449, %v3448
        %v3487 = vpack.c.bf16 %v3451, %v3450
        %v3488 = vpack.c.bf16 %v3453, %v3452
        %v3489 = vpack.c.bf16 %v3455, %v3454
        %v3490 = vpack.c.bf16 %v3457, %v3456
        %v3491 = vpack.c.bf16 %v3459, %v3458
        %v3493 = vlaneseq
        %v3494 = vshrl.u32 %v3493, 7
        %v3495 = vsub.s32 0, %v3494
        %v3496 = vrot.slane %v827, %v3495
        %v3514 = vunpack.c.l.b16 %v811
        %v3515 = vunpack.c.l.b16 %v812
        %v3516 = vunpack.c.l.b16 %v813
        %v3517 = vunpack.c.l.b16 %v814
        %v3518 = vunpack.c.l.b16 %v815
        %v3519 = vunpack.c.l.b16 %v816
        %v3520 = vunpack.c.l.b16 %v817
        %v3521 = vunpack.c.l.b16 %v818
        %v3522 = vunpack.c.l.b16 %v819
        %v3523 = vunpack.c.l.b16 %v820
        %v3524 = vunpack.c.l.b16 %v821
        %v3525 = vunpack.c.l.b16 %v822
        %v3526 = vunpack.c.l.b16 %v823
        %v3527 = vunpack.c.l.b16 %v824
        %v3528 = vunpack.c.l.b16 %v825
        %v3529 = vunpack.c.l.b16 %v826
        %v3530 = vpack.c.b16 %v3515, %v3514
        %v3531 = vpack.c.b16 %v3517, %v3516
        %v3532 = vpack.c.b16 %v3519, %v3518
        %v3533 = vpack.c.b16 %v3521, %v3520
        %v3534 = vpack.c.b16 %v3523, %v3522
        %v3535 = vpack.c.b16 %v3525, %v3524
        %v3536 = vpack.c.b16 %v3527, %v3526
        %v3537 = vpack.c.b16 %v3529, %v3528
        %3546 = vmatprep.subr.bf16.mxu0 0
        %3547 = vmatpush1.bf16.msra.mxu0 %v3530
        %3548 = vmatprep.subr.bf16.mxu0 0
        %3549 = vmatpush1.bf16.msra.mxu0 %v3531
        %3550 = vmatprep.subr.bf16.mxu0 0
        %3551 = vmatpush1.bf16.msra.mxu0 %v3532
        %3552 = vmatprep.subr.bf16.mxu0 0
        %3553 = vmatpush1.bf16.msra.mxu0 %v3533
        %3554 = vmatprep.subr.bf16.mxu0 0
        %3555 = vmatpush1.bf16.msra.mxu0 %v3534
        %3556 = vmatprep.subr.bf16.mxu0 0
        %3557 = vmatpush1.bf16.msra.mxu0 %v3535
        %3558 = vmatprep.subr.bf16.mxu0 0
        %3559 = vmatpush1.bf16.msra.mxu0 %v3536
        %3560 = vmatprep.subr.bf16.mxu0 0
        %3561 = vmatpush1.bf16.msra.mxu0 %v3537
        %3562 = vmatprep.subr.bf16.mxu0 0
        %3563 = vmatpush1.bf16.msra.mxu0 0
        %3564 = vmatprep.subr.bf16.mxu0 0
        %3565 = vmatpush1.bf16.msra.mxu0 0
        %3566 = vmatprep.subr.bf16.mxu0 0
        %3567 = vmatpush1.bf16.msra.mxu0 0
        %3568 = vmatprep.subr.bf16.mxu0 0
        %3569 = vmatpush1.bf16.msra.mxu0 0
        %3570 = vmatprep.subr.bf16.mxu0 0
        %3571 = vmatpush1.bf16.msra.mxu0 0
        %3572 = vmatprep.subr.bf16.mxu0 0
        %3573 = vmatpush1.bf16.msra.mxu0 0
        %3574 = vmatprep.subr.bf16.mxu0 0
        %3575 = vmatpush1.bf16.msra.mxu0 0
        %3576 = vmatprep.subr.bf16.mxu0 0
        %3577 = vmatpush1.bf16.msra.mxu0 0
        %3578 = vmatprep.mubr.bf16.mxu0 0
        %3579 = vmatmul.mubr.bf16.gmra.mrb[0].mxu0 %v3460
        %v3580 = vpop.f32.mrb[0].mxu0
        %v3581 = vadd.f32 %v3496, %v3580
        %v3582 = vpop.f32.mrb[0].mxu0
        %v3583 = vpop.f32.mrb[0].mxu0
        %v3584 = vadd.f32 %v3496, %v3583
        %v3585 = vpop.f32.mrb[0].mxu0
        %3586 = vmatprep.mubr.bf16.mxu0 0
        %3587 = vmatmul.mubr.bf16.gmra.mrb[0].mxu0 %v3461
        %v3588 = vpop.f32.mrb[0].mxu0
        %v3589 = vadd.f32 %v3496, %v3588
        %v3590 = vpop.f32.mrb[0].mxu0
        %v3591 = vpop.f32.mrb[0].mxu0
        %v3592 = vadd.f32 %v3496, %v3591
        %v3593 = vpop.f32.mrb[0].mxu0
        %3594 = vmatprep.mubr.bf16.mxu0 0
        %3595 = vmatmul.mubr.bf16.gmra.mrb[0].mxu0 %v3462
        %v3596 = vpop.f32.mrb[0].mxu0
        %v3597 = vadd.f32 %v3496, %v3596
        %v3598 = vpop.f32.mrb[0].mxu0
        %v3599 = vpop.f32.mrb[0].mxu0
        %v3600 = vadd.f32 %v3496, %v3599
        %v3601 = vpop.f32.mrb[0].mxu0
        %3602 = vmatprep.mubr.bf16.mxu0 0
        %3603 = vmatmul.mubr.bf16.gmra.mrb[0].mxu0 %v3463
        %v3604 = vpop.f32.mrb[0].mxu0
        %v3605 = vadd.f32 %v3496, %v3604
        %v3606 = vpop.f32.mrb[0].mxu0
        %v3607 = vpop.f32.mrb[0].mxu0
        %v3608 = vadd.f32 %v3496, %v3607
        %v3609 = vpop.f32.mrb[0].mxu0
        %3610 = vmatprep.mubr.bf16.mxu0 0
        %3611 = vmatmul.mubr.bf16.gmra.mrb[0].mxu0 %v3464
        %v3612 = vpop.f32.mrb[0].mxu0
        %v3613 = vadd.f32 %v3496, %v3612
        %v3614 = vpop.f32.mrb[0].mxu0
        %v3615 = vpop.f32.mrb[0].mxu0
        %v3616 = vadd.f32 %v3496, %v3615
        %v3617 = vpop.f32.mrb[0].mxu0
        %3618 = vmatprep.mubr.bf16.mxu0 0
        %3619 = vmatmul.mubr.bf16.gmra.mrb[0].mxu0 %v3465
        %v3620 = vpop.f32.mrb[0].mxu0
        %v3621 = vadd.f32 %v3496, %v3620
        %v3622 = vpop.f32.mrb[0].mxu0
        %v3623 = vpop.f32.mrb[0].mxu0
        %v3624 = vadd.f32 %v3496, %v3623
        %v3625 = vpop.f32.mrb[0].mxu0
        %3626 = vmatprep.mubr.bf16.mxu0 0
        %3627 = vmatmul.mubr.bf16.gmra.mrb[0].mxu0 %v3466
        %v3628 = vpop.f32.mrb[0].mxu0
        %v3629 = vadd.f32 %v3496, %v3628
        %v3630 = vpop.f32.mrb[0].mxu0
        %v3631 = vpop.f32.mrb[0].mxu0
        %v3632 = vadd.f32 %v3496, %v3631
        %v3633 = vpop.f32.mrb[0].mxu0
        %3634 = vmatprep.mubr.bf16.mxu0 0
        %3635 = vmatmul.mubr.bf16.gmra.mrb[0].mxu0 %v3467
        %v3636 = vpop.f32.mrb[0].mxu0
        %v3637 = vadd.f32 %v3496, %v3636
        %v3638 = vpop.f32.mrb[0].mxu0
        %v3639 = vpop.f32.mrb[0].mxu0
        %v3640 = vadd.f32 %v3496, %v3639
        %v3641 = vpop.f32.mrb[0].mxu0
        %3642 = vmatprep.mubr.bf16.mxu0 0
        %3643 = vmatmul.mubr.bf16.gmra.mrb[0].mxu0 %v3468
        %v3644 = vpop.f32.mrb[0].mxu0
        %v3645 = vadd.f32 %v3496, %v3644
        %v3646 = vpop.f32.mrb[0].mxu0
        %v3647 = vpop.f32.mrb[0].mxu0
        %v3648 = vadd.f32 %v3496, %v3647
        %v3649 = vpop.f32.mrb[0].mxu0
        %3650 = vmatprep.mubr.bf16.mxu0 0
        %3651 = vmatmul.mubr.bf16.gmra.mrb[0].mxu0 %v3469
        %v3652 = vpop.f32.mrb[0].mxu0
        %v3653 = vadd.f32 %v3496, %v3652
        %v3654 = vpop.f32.mrb[0].mxu0
        %v3655 = vpop.f32.mrb[0].mxu0
        %v3656 = vadd.f32 %v3496, %v3655
        %v3657 = vpop.f32.mrb[0].mxu0
        %3658 = vmatprep.mubr.bf16.mxu0 0
        %3659 = vmatmul.mubr.bf16.gmra.mrb[0].mxu0 %v3470
        %v3660 = vpop.f32.mrb[0].mxu0
        %v3661 = vadd.f32 %v3496, %v3660
        %v3662 = vpop.f32.mrb[0].mxu0
        %v3663 = vpop.f32.mrb[0].mxu0
        %v3664 = vadd.f32 %v3496, %v3663
        %v3665 = vpop.f32.mrb[0].mxu0
        %3666 = vmatprep.mubr.bf16.mxu0 0
        %3667 = vmatmul.mubr.bf16.gmra.mrb[0].mxu0 %v3471
        %v3668 = vpop.f32.mrb[0].mxu0
        %v3669 = vadd.f32 %v3496, %v3668
        %v3670 = vpop.f32.mrb[0].mxu0
        %v3671 = vpop.f32.mrb[0].mxu0
        %v3672 = vadd.f32 %v3496, %v3671
        %v3673 = vpop.f32.mrb[0].mxu0
        %3674 = vmatprep.mubr.bf16.mxu0 0
        %3675 = vmatmul.mubr.bf16.gmra.mrb[0].mxu0 %v3472
        %v3676 = vpop.f32.mrb[0].mxu0
        %v3677 = vadd.f32 %v3496, %v3676
        %v3678 = vpop.f32.mrb[0].mxu0
        %v3679 = vpop.f32.mrb[0].mxu0
        %v3680 = vadd.f32 %v3496, %v3679
        %v3681 = vpop.f32.mrb[0].mxu0
        %3682 = vmatprep.mubr.bf16.mxu0 0
        %3683 = vmatmul.mubr.bf16.gmra.mrb[0].mxu0 %v3473
        %v3684 = vpop.f32.mrb[0].mxu0
        %v3685 = vadd.f32 %v3496, %v3684
        %v3686 = vpop.f32.mrb[0].mxu0
        %v3687 = vpop.f32.mrb[0].mxu0
        %v3688 = vadd.f32 %v3496, %v3687
        %v3689 = vpop.f32.mrb[0].mxu0
        %3690 = vmatprep.mubr.bf16.mxu0 0
        %3691 = vmatmul.mubr.bf16.gmra.mrb[0].mxu0 %v3474
        %v3692 = vpop.f32.mrb[0].mxu0
        %v3693 = vadd.f32 %v3496, %v3692
        %v3694 = vpop.f32.mrb[0].mxu0
        %v3695 = vpop.f32.mrb[0].mxu0
        %v3696 = vadd.f32 %v3496, %v3695
        %v3697 = vpop.f32.mrb[0].mxu0
        %3698 = vmatprep.mubr.bf16.mxu0 0
        %3699 = vmatmul.mubr.bf16.gmra.mrb[0].mxu0 %v3475
        %v3700 = vpop.f32.mrb[0].mxu0
        %v3701 = vadd.f32 %v3496, %v3700
        %v3702 = vpop.f32.mrb[0].mxu0
        %v3703 = vpop.f32.mrb[0].mxu0
        %v3704 = vadd.f32 %v3496, %v3703
        %v3705 = vpop.f32.mrb[0].mxu0
        %3706 = vmatprep.mubr.bf16.mxu0 0
        %3707 = vmatmul.mubr.bf16.gmra.mrb[0].mxu0 %v3476
        %v3708 = vpop.f32.mrb[0].mxu0
        %v3709 = vadd.f32 %v3496, %v3708
        %v3710 = vpop.f32.mrb[0].mxu0
        %v3711 = vpop.f32.mrb[0].mxu0
        %v3712 = vadd.f32 %v3496, %v3711
        %v3713 = vpop.f32.mrb[0].mxu0
        %3714 = vmatprep.mubr.bf16.mxu0 0
        %3715 = vmatmul.mubr.bf16.gmra.mrb[0].mxu0 %v3477
        %v3716 = vpop.f32.mrb[0].mxu0
        %v3717 = vadd.f32 %v3496, %v3716
        %v3718 = vpop.f32.mrb[0].mxu0
        %v3719 = vpop.f32.mrb[0].mxu0
        %v3720 = vadd.f32 %v3496, %v3719
        %v3721 = vpop.f32.mrb[0].mxu0
        %3722 = vmatprep.mubr.bf16.mxu0 0
        %3723 = vmatmul.mubr.bf16.gmra.mrb[0].mxu0 %v3478
        %v3724 = vpop.f32.mrb[0].mxu0
        %v3725 = vadd.f32 %v3496, %v3724
        %v3726 = vpop.f32.mrb[0].mxu0
        %v3727 = vpop.f32.mrb[0].mxu0
        %v3728 = vadd.f32 %v3496, %v3727
        %v3729 = vpop.f32.mrb[0].mxu0
        %3730 = vmatprep.mubr.bf16.mxu0 0
        %3731 = vmatmul.mubr.bf16.gmra.mrb[0].mxu0 %v3479
        %v3732 = vpop.f32.mrb[0].mxu0
        %v3733 = vadd.f32 %v3496, %v3732
        %v3734 = vpop.f32.mrb[0].mxu0
        %v3735 = vpop.f32.mrb[0].mxu0
        %v3736 = vadd.f32 %v3496, %v3735
        %v3737 = vpop.f32.mrb[0].mxu0
        %3738 = vmatprep.mubr.bf16.mxu0 0
        %3739 = vmatmul.mubr.bf16.gmra.mrb[0].mxu0 %v3480
        %v3740 = vpop.f32.mrb[0].mxu0
        %v3741 = vadd.f32 %v3496, %v3740
        %v3742 = vpop.f32.mrb[0].mxu0
        %v3743 = vpop.f32.mrb[0].mxu0
        %v3744 = vadd.f32 %v3496, %v3743
        %v3745 = vpop.f32.mrb[0].mxu0
        %3746 = vmatprep.mubr.bf16.mxu0 0
        %3747 = vmatmul.mubr.bf16.gmra.mrb[0].mxu0 %v3481
        %v3748 = vpop.f32.mrb[0].mxu0
        %v3749 = vadd.f32 %v3496, %v3748
        %v3750 = vpop.f32.mrb[0].mxu0
        %v3751 = vpop.f32.mrb[0].mxu0
        %v3752 = vadd.f32 %v3496, %v3751
        %v3753 = vpop.f32.mrb[0].mxu0
        %3754 = vmatprep.mubr.bf16.mxu0 0
        %3755 = vmatmul.mubr.bf16.gmra.mrb[0].mxu0 %v3482
        %v3756 = vpop.f32.mrb[0].mxu0
        %v3757 = vadd.f32 %v3496, %v3756
        %v3758 = vpop.f32.mrb[0].mxu0
        %v3759 = vpop.f32.mrb[0].mxu0
        %v3760 = vadd.f32 %v3496, %v3759
        %v3761 = vpop.f32.mrb[0].mxu0
        %3762 = vmatprep.mubr.bf16.mxu0 0
        %3763 = vmatmul.mubr.bf16.gmra.mrb[0].mxu0 %v3483
        %v3764 = vpop.f32.mrb[0].mxu0
        %v3765 = vadd.f32 %v3496, %v3764
        %v3766 = vpop.f32.mrb[0].mxu0
        %v3767 = vpop.f32.mrb[0].mxu0
        %v3768 = vadd.f32 %v3496, %v3767
        %v3769 = vpop.f32.mrb[0].mxu0
        %3770 = vmatprep.mubr.bf16.mxu0 0
        %3771 = vmatmul.mubr.bf16.gmra.mrb[0].mxu0 %v3484
        %v3772 = vpop.f32.mrb[0].mxu0
        %v3773 = vadd.f32 %v3496, %v3772
        %v3774 = vpop.f32.mrb[0].mxu0
        %v3775 = vpop.f32.mrb[0].mxu0
        %v3776 = vadd.f32 %v3496, %v3775
        %v3777 = vpop.f32.mrb[0].mxu0
        %3778 = vmatprep.mubr.bf16.mxu0 0
        %3779 = vmatmul.mubr.bf16.gmra.mrb[0].mxu0 %v3485
        %v3780 = vpop.f32.mrb[0].mxu0
        %v3781 = vadd.f32 %v3496, %v3780
        %v3782 = vpop.f32.mrb[0].mxu0
        %v3783 = vpop.f32.mrb[0].mxu0
        %v3784 = vadd.f32 %v3496, %v3783
        %v3785 = vpop.f32.mrb[0].mxu0
        %3786 = vmatprep.mubr.bf16.mxu0 0
        %3787 = vmatmul.mubr.bf16.gmra.mrb[0].mxu0 %v3486
        %v3788 = vpop.f32.mrb[0].mxu0
        %v3789 = vadd.f32 %v3496, %v3788
        %v3790 = vpop.f32.mrb[0].mxu0
        %v3791 = vpop.f32.mrb[0].mxu0
        %v3792 = vadd.f32 %v3496, %v3791
        %v3793 = vpop.f32.mrb[0].mxu0
        %3794 = vmatprep.mubr.bf16.mxu0 0
        %3795 = vmatmul.mubr.bf16.gmra.mrb[0].mxu0 %v3487
        %v3796 = vpop.f32.mrb[0].mxu0
        %v3797 = vadd.f32 %v3496, %v3796
        %v3798 = vpop.f32.mrb[0].mxu0
        %v3799 = vpop.f32.mrb[0].mxu0
        %v3800 = vadd.f32 %v3496, %v3799
        %v3801 = vpop.f32.mrb[0].mxu0
        %3802 = vmatprep.mubr.bf16.mxu0 0
        %3803 = vmatmul.mubr.bf16.gmra.mrb[0].mxu0 %v3488
        %v3804 = vpop.f32.mrb[0].mxu0
        %v3805 = vadd.f32 %v3496, %v3804
        %v3806 = vpop.f32.mrb[0].mxu0
        %v3807 = vpop.f32.mrb[0].mxu0
        %v3808 = vadd.f32 %v3496, %v3807
        %v3809 = vpop.f32.mrb[0].mxu0
        %3810 = vmatprep.mubr.bf16.mxu0 0
        %3811 = vmatmul.mubr.bf16.gmra.mrb[0].mxu0 %v3489
        %v3812 = vpop.f32.mrb[0].mxu0
        %v3813 = vadd.f32 %v3496, %v3812
        %v3814 = vpop.f32.mrb[0].mxu0
        %v3815 = vpop.f32.mrb[0].mxu0
        %v3816 = vadd.f32 %v3496, %v3815
        %v3817 = vpop.f32.mrb[0].mxu0
        %3818 = vmatprep.mubr.bf16.mxu0 0
        %3819 = vmatmul.mubr.bf16.gmra.mrb[0].mxu0 %v3490
        %v3820 = vpop.f32.mrb[0].mxu0
        %v3821 = vadd.f32 %v3496, %v3820
        %v3822 = vpop.f32.mrb[0].mxu0
        %v3823 = vpop.f32.mrb[0].mxu0
        %v3824 = vadd.f32 %v3496, %v3823
        %v3825 = vpop.f32.mrb[0].mxu0
        %3826 = vmatprep.mubr.bf16.mxu0 0
        %3827 = vmatmul.mubr.bf16.gmra.mrb[0].mxu0 %v3491
        %v3828 = vpop.f32.mrb[0].mxu0
        %v3829 = vadd.f32 %v3496, %v3828
        %v3830 = vpop.f32.mrb[0].mxu0
        %v3831 = vpop.f32.mrb[0].mxu0
        %v3832 = vadd.f32 %v3496, %v3831
        %v3833 = vpop.f32.mrb[0].mxu0
        %3834 = vdwg.mxu0
        %v3835 = vmul.f32 %v3581, 0.5
        %v3836 = vmul.f32 %v3584, 0.5
        %v3837 = vmul.f32 %v3589, 0.5
        %v3838 = vmul.f32 %v3592, 0.5
        %v3839 = vmul.f32 %v3597, 0.5
        %v3840 = vmul.f32 %v3600, 0.5
        %v3841 = vmul.f32 %v3605, 0.5
        %v3842 = vmul.f32 %v3608, 0.5
        %v3843 = vmul.f32 %v3613, 0.5
        %v3844 = vmul.f32 %v3616, 0.5
        %v3845 = vmul.f32 %v3621, 0.5
        %v3846 = vmul.f32 %v3624, 0.5
        %v3847 = vmul.f32 %v3629, 0.5
        %v3848 = vmul.f32 %v3632, 0.5
        %v3849 = vmul.f32 %v3637, 0.5
        %v3850 = vmul.f32 %v3640, 0.5
        %v3851 = vmul.f32 %v3645, 0.5
        %v3852 = vmul.f32 %v3648, 0.5
        %v3853 = vmul.f32 %v3653, 0.5
        %v3854 = vmul.f32 %v3656, 0.5
        %v3855 = vmul.f32 %v3661, 0.5
        %v3856 = vmul.f32 %v3664, 0.5
        %v3857 = vmul.f32 %v3669, 0.5
        %v3858 = vmul.f32 %v3672, 0.5
        %v3859 = vmul.f32 %v3677, 0.5
        %v3860 = vmul.f32 %v3680, 0.5
        %v3861 = vmul.f32 %v3685, 0.5
        %v3862 = vmul.f32 %v3688, 0.5
        %v3863 = vmul.f32 %v3693, 0.5
        %v3864 = vmul.f32 %v3696, 0.5
        %v3865 = vmul.f32 %v3701, 0.5
        %v3866 = vmul.f32 %v3704, 0.5
        %v3867 = vmul.f32 %v3709, 0.5
        %v3868 = vmul.f32 %v3712, 0.5
        %v3869 = vmul.f32 %v3717, 0.5
        %v3870 = vmul.f32 %v3720, 0.5
        %v3871 = vmul.f32 %v3725, 0.5
        %v3872 = vmul.f32 %v3728, 0.5
        %v3873 = vmul.f32 %v3733, 0.5
        %v3874 = vmul.f32 %v3736, 0.5
        %v3875 = vmul.f32 %v3741, 0.5
        %v3876 = vmul.f32 %v3744, 0.5
        %v3877 = vmul.f32 %v3749, 0.5
        %v3878 = vmul.f32 %v3752, 0.5
        %v3879 = vmul.f32 %v3757, 0.5
        %v3880 = vmul.f32 %v3760, 0.5
        %v3881 = vmul.f32 %v3765, 0.5
        %v3882 = vmul.f32 %v3768, 0.5
        %v3883 = vmul.f32 %v3773, 0.5
        %v3884 = vmul.f32 %v3776, 0.5
        %v3885 = vmul.f32 %v3781, 0.5
        %v3886 = vmul.f32 %v3784, 0.5
        %v3887 = vmul.f32 %v3789, 0.5
        %v3888 = vmul.f32 %v3792, 0.5
        %v3889 = vmul.f32 %v3797, 0.5
        %v3890 = vmul.f32 %v3800, 0.5
        %v3891 = vmul.f32 %v3805, 0.5
        %v3892 = vmul.f32 %v3808, 0.5
        %v3893 = vmul.f32 %v3813, 0.5
        %v3894 = vmul.f32 %v3816, 0.5
        %v3895 = vmul.f32 %v3821, 0.5
        %v3896 = vmul.f32 %v3824, 0.5
        %v3897 = vmul.f32 %v3829, 0.5
        %v3898 = vmul.f32 %v3832, 0.5
        %v3899 = vmul.f32 %v3581, 0.70710677
        %v3900 = vmul.f32 %v3584, 0.70710677
        %v3901 = vmul.f32 %v3589, 0.70710677
        %v3902 = vmul.f32 %v3592, 0.70710677
        %v3903 = vmul.f32 %v3597, 0.70710677
        %v3904 = vmul.f32 %v3600, 0.70710677
        %v3905 = vmul.f32 %v3605, 0.70710677
        %v3906 = vmul.f32 %v3608, 0.70710677
        %v3907 = vmul.f32 %v3613, 0.70710677
        %v3908 = vmul.f32 %v3616, 0.70710677
        %v3909 = vmul.f32 %v3621, 0.70710677
        %v3910 = vmul.f32 %v3624, 0.70710677
        %v3911 = vmul.f32 %v3629, 0.70710677
        %v3912 = vmul.f32 %v3632, 0.70710677
        %v3913 = vmul.f32 %v3637, 0.70710677
        %v3914 = vmul.f32 %v3640, 0.70710677
        %v3915 = vmul.f32 %v3645, 0.70710677
        %v3916 = vmul.f32 %v3648, 0.70710677
        %v3917 = vmul.f32 %v3653, 0.70710677
        %v3918 = vmul.f32 %v3656, 0.70710677
        %v3919 = vmul.f32 %v3661, 0.70710677
        %v3920 = vmul.f32 %v3664, 0.70710677
        %v3921 = vmul.f32 %v3669, 0.70710677
        %v3922 = vmul.f32 %v3672, 0.70710677
        %v3923 = vmul.f32 %v3677, 0.70710677
        %v3924 = vmul.f32 %v3680, 0.70710677
        %v3925 = vmul.f32 %v3685, 0.70710677
        %v3926 = vmul.f32 %v3688, 0.70710677
        %v3927 = vmul.f32 %v3693, 0.70710677
        %v3928 = vmul.f32 %v3696, 0.70710677
        %v3929 = vmul.f32 %v3701, 0.70710677
        %v3930 = vmul.f32 %v3704, 0.70710677
        %v3931 = vmul.f32 %v3709, 0.70710677
        %v3932 = vmul.f32 %v3712, 0.70710677
        %v3933 = vmul.f32 %v3717, 0.70710677
        %v3934 = vmul.f32 %v3720, 0.70710677
        %v3935 = vmul.f32 %v3725, 0.70710677
        %v3936 = vmul.f32 %v3728, 0.70710677
        %v3937 = vmul.f32 %v3733, 0.70710677
        %v3938 = vmul.f32 %v3736, 0.70710677
        %v3939 = vmul.f32 %v3741, 0.70710677
        %v3940 = vmul.f32 %v3744, 0.70710677
        %v3941 = vmul.f32 %v3749, 0.70710677
        %v3942 = vmul.f32 %v3752, 0.70710677
        %v3943 = vmul.f32 %v3757, 0.70710677
        %v3944 = vmul.f32 %v3760, 0.70710677
        %v3945 = vmul.f32 %v3765, 0.70710677
        %v3946 = vmul.f32 %v3768, 0.70710677
        %v3947 = vmul.f32 %v3773, 0.70710677
        %v3948 = vmul.f32 %v3776, 0.70710677
        %v3949 = vmul.f32 %v3781, 0.70710677
        %v3950 = vmul.f32 %v3784, 0.70710677
        %v3951 = vmul.f32 %v3789, 0.70710677
        %v3952 = vmul.f32 %v3792, 0.70710677
        %v3953 = vmul.f32 %v3797, 0.70710677
        %v3954 = vmul.f32 %v3800, 0.70710677
        %v3955 = vmul.f32 %v3805, 0.70710677
        %v3956 = vmul.f32 %v3808, 0.70710677
        %v3957 = vmul.f32 %v3813, 0.70710677
        %v3958 = vmul.f32 %v3816, 0.70710677
        %v3959 = vmul.f32 %v3821, 0.70710677
        %v3960 = vmul.f32 %v3824, 0.70710677
        %v3961 = vmul.f32 %v3829, 0.70710677
        %v3962 = vmul.f32 %v3832, 0.70710677
        %v3963 = verf.f32.pop %v3899
        %v3964 = verf.f32.pop %v3900
        %v3965 = verf.f32.pop %v3901
        %v3966 = verf.f32.pop %v3902
        %v3967 = verf.f32.pop %v3903
        %v3968 = verf.f32.pop %v3904
        %v3969 = verf.f32.pop %v3905
        %v3970 = verf.f32.pop %v3906
        %v3971 = verf.f32.pop %v3907
        %v3972 = verf.f32.pop %v3908
        %v3973 = verf.f32.pop %v3909
        %v3974 = verf.f32.pop %v3910
        %v3975 = verf.f32.pop %v3911
        %v3976 = verf.f32.pop %v3912
        %v3977 = verf.f32.pop %v3913
        %v3978 = verf.f32.pop %v3914
        %v3979 = verf.f32.pop %v3915
        %v3980 = verf.f32.pop %v3916
        %v3981 = verf.f32.pop %v3917
        %v3982 = verf.f32.pop %v3918
        %v3983 = verf.f32.pop %v3919
        %v3984 = verf.f32.pop %v3920
        %v3985 = verf.f32.pop %v3921
        %v3986 = verf.f32.pop %v3922
        %v3987 = verf.f32.pop %v3923
        %v3988 = verf.f32.pop %v3924
        %v3989 = verf.f32.pop %v3925
        %v3990 = verf.f32.pop %v3926
        %v3991 = verf.f32.pop %v3927
        %v3992 = verf.f32.pop %v3928
        %v3993 = verf.f32.pop %v3929
        %v3994 = verf.f32.pop %v3930
        %v3995 = verf.f32.pop %v3931
        %v3996 = verf.f32.pop %v3932
        %v3997 = verf.f32.pop %v3933
        %v3998 = verf.f32.pop %v3934
        %v3999 = verf.f32.pop %v3935
        %v4000 = verf.f32.pop %v3936
        %v4001 = verf.f32.pop %v3937
        %v4002 = verf.f32.pop %v3938
        %v4003 = verf.f32.pop %v3939
        %v4004 = verf.f32.pop %v3940
        %v4005 = verf.f32.pop %v3941
        %v4006 = verf.f32.pop %v3942
        %v4007 = verf.f32.pop %v3943
        %v4008 = verf.f32.pop %v3944
        %v4009 = verf.f32.pop %v3945
        %v4010 = verf.f32.pop %v3946
        %v4011 = verf.f32.pop %v3947
        %v4012 = verf.f32.pop %v3948
        %v4013 = verf.f32.pop %v3949
        %v4014 = verf.f32.pop %v3950
        %v4015 = verf.f32.pop %v3951
        %v4016 = verf.f32.pop %v3952
        %v4017 = verf.f32.pop %v3953
        %v4018 = verf.f32.pop %v3954
        %v4019 = verf.f32.pop %v3955
        %v4020 = verf.f32.pop %v3956
        %v4021 = verf.f32.pop %v3957
        %v4022 = verf.f32.pop %v3958
        %v4023 = verf.f32.pop %v3959
        %v4024 = verf.f32.pop %v3960
        %v4025 = verf.f32.pop %v3961
        %v4026 = verf.f32.pop %v3962
        %v4027 = vadd.f32 %v3963, 1.0
        %v4028 = vadd.f32 %v3964, 1.0
        %v4029 = vadd.f32 %v3965, 1.0
        %v4030 = vadd.f32 %v3966, 1.0
        %v4031 = vadd.f32 %v3967, 1.0
        %v4032 = vadd.f32 %v3968, 1.0
        %v4033 = vadd.f32 %v3969, 1.0
        %v4034 = vadd.f32 %v3970, 1.0
        %v4035 = vadd.f32 %v3971, 1.0
        %v4036 = vadd.f32 %v3972, 1.0
        %v4037 = vadd.f32 %v3973, 1.0
        %v4038 = vadd.f32 %v3974, 1.0
        %v4039 = vadd.f32 %v3975, 1.0
        %v4040 = vadd.f32 %v3976, 1.0
        %v4041 = vadd.f32 %v3977, 1.0
        %v4042 = vadd.f32 %v3978, 1.0
        %v4043 = vadd.f32 %v3979, 1.0
        %v4044 = vadd.f32 %v3980, 1.0
        %v4045 = vadd.f32 %v3981, 1.0
        %v4046 = vadd.f32 %v3982, 1.0
        %v4047 = vadd.f32 %v3983, 1.0
        %v4048 = vadd.f32 %v3984, 1.0
        %v4049 = vadd.f32 %v3985, 1.0
        %v4050 = vadd.f32 %v3986, 1.0
        %v4051 = vadd.f32 %v3987, 1.0
        %v4052 = vadd.f32 %v3988, 1.0
        %v4053 = vadd.f32 %v3989, 1.0
        %v4054 = vadd.f32 %v3990, 1.0
        %v4055 = vadd.f32 %v3991, 1.0
        %v4056 = vadd.f32 %v3992, 1.0
        %v4057 = vadd.f32 %v3993, 1.0
        %v4058 = vadd.f32 %v3994, 1.0
        %v4059 = vadd.f32 %v3995, 1.0
        %v4060 = vadd.f32 %v3996, 1.0
        %v4061 = vadd.f32 %v3997, 1.0
        %v4062 = vadd.f32 %v3998, 1.0
        %v4063 = vadd.f32 %v3999, 1.0
        %v4064 = vadd.f32 %v4000, 1.0
        %v4065 = vadd.f32 %v4001, 1.0
        %v4066 = vadd.f32 %v4002, 1.0
        %v4067 = vadd.f32 %v4003, 1.0
        %v4068 = vadd.f32 %v4004, 1.0
        %v4069 = vadd.f32 %v4005, 1.0
        %v4070 = vadd.f32 %v4006, 1.0
        %v4071 = vadd.f32 %v4007, 1.0
        %v4072 = vadd.f32 %v4008, 1.0
        %v4073 = vadd.f32 %v4009, 1.0
        %v4074 = vadd.f32 %v4010, 1.0
        %v4075 = vadd.f32 %v4011, 1.0
        %v4076 = vadd.f32 %v4012, 1.0
        %v4077 = vadd.f32 %v4013, 1.0
        %v4078 = vadd.f32 %v4014, 1.0
        %v4079 = vadd.f32 %v4015, 1.0
        %v4080 = vadd.f32 %v4016, 1.0
        %v4081 = vadd.f32 %v4017, 1.0
        %v4082 = vadd.f32 %v4018, 1.0
        %v4083 = vadd.f32 %v4019, 1.0
        %v4084 = vadd.f32 %v4020, 1.0
        %v4085 = vadd.f32 %v4021, 1.0
        %v4086 = vadd.f32 %v4022, 1.0
        %v4087 = vadd.f32 %v4023, 1.0
        %v4088 = vadd.f32 %v4024, 1.0
        %v4089 = vadd.f32 %v4025, 1.0
        %v4090 = vadd.f32 %v4026, 1.0
        %v4091 = vmul.f32 %v3835, %v4027
        %v4092 = vmul.f32 %v3836, %v4028
        %v4093 = vmul.f32 %v3837, %v4029
        %v4094 = vmul.f32 %v3838, %v4030
        %v4095 = vmul.f32 %v3839, %v4031
        %v4096 = vmul.f32 %v3840, %v4032
        %v4097 = vmul.f32 %v3841, %v4033
        %v4098 = vmul.f32 %v3842, %v4034
        %v4099 = vmul.f32 %v3843, %v4035
        %v4100 = vmul.f32 %v3844, %v4036
        %v4101 = vmul.f32 %v3845, %v4037
        %v4102 = vmul.f32 %v3846, %v4038
        %v4103 = vmul.f32 %v3847, %v4039
        %v4104 = vmul.f32 %v3848, %v4040
        %v4105 = vmul.f32 %v3849, %v4041
        %v4106 = vmul.f32 %v3850, %v4042
        %v4107 = vmul.f32 %v3851, %v4043
        %v4108 = vmul.f32 %v3852, %v4044
        %v4109 = vmul.f32 %v3853, %v4045
        %v4110 = vmul.f32 %v3854, %v4046
        %v4111 = vmul.f32 %v3855, %v4047
        %v4112 = vmul.f32 %v3856, %v4048
        %v4113 = vmul.f32 %v3857, %v4049
        %v4114 = vmul.f32 %v3858, %v4050
        %v4115 = vmul.f32 %v3859, %v4051
        %v4116 = vmul.f32 %v3860, %v4052
        %v4117 = vmul.f32 %v3861, %v4053
        %v4118 = vmul.f32 %v3862, %v4054
        %v4119 = vmul.f32 %v3863, %v4055
        %v4120 = vmul.f32 %v3864, %v4056
        %v4121 = vmul.f32 %v3865, %v4057
        %v4122 = vmul.f32 %v3866, %v4058
        %v4123 = vmul.f32 %v3867, %v4059
        %v4124 = vmul.f32 %v3868, %v4060
        %v4125 = vmul.f32 %v3869, %v4061
        %v4126 = vmul.f32 %v3870, %v4062
        %v4127 = vmul.f32 %v3871, %v4063
        %v4128 = vmul.f32 %v3872, %v4064
        %v4129 = vmul.f32 %v3873, %v4065
        %v4130 = vmul.f32 %v3874, %v4066
        %v4131 = vmul.f32 %v3875, %v4067
        %v4132 = vmul.f32 %v3876, %v4068
        %v4133 = vmul.f32 %v3877, %v4069
        %v4134 = vmul.f32 %v3878, %v4070
        %v4135 = vmul.f32 %v3879, %v4071
        %v4136 = vmul.f32 %v3880, %v4072
        %v4137 = vmul.f32 %v3881, %v4073
        %v4138 = vmul.f32 %v3882, %v4074
        %v4139 = vmul.f32 %v3883, %v4075
        %v4140 = vmul.f32 %v3884, %v4076
        %v4141 = vmul.f32 %v3885, %v4077
        %v4142 = vmul.f32 %v3886, %v4078
        %v4143 = vmul.f32 %v3887, %v4079
        %v4144 = vmul.f32 %v3888, %v4080
        %v4145 = vmul.f32 %v3889, %v4081
        %v4146 = vmul.f32 %v3890, %v4082
        %v4147 = vmul.f32 %v3891, %v4083
        %v4148 = vmul.f32 %v3892, %v4084
        %v4149 = vmul.f32 %v3893, %v4085
        %v4150 = vmul.f32 %v3894, %v4086
        %v4151 = vmul.f32 %v3895, %v4087
        %v4152 = vmul.f32 %v3896, %v4088
        %v4153 = vmul.f32 %v3897, %v4089
        %v4154 = vmul.f32 %v3898, %v4090
        %v4155 = vadd.f32 %v4091, %v4092
        %v4156 = vadd.f32 %v4155, %v4093
        %v4157 = vadd.f32 %v4156, %v4094
        %v4158 = vadd.f32 %v4157, %v4095
        %v4159 = vadd.f32 %v4158, %v4096
        %v4160 = vadd.f32 %v4159, %v4097
        %v4161 = vadd.f32 %v4160, %v4098
        %v4162 = vadd.f32 %v4161, %v4099
        %v4163 = vadd.f32 %v4162, %v4100
        %v4164 = vadd.f32 %v4163, %v4101
        %v4165 = vadd.f32 %v4164, %v4102
        %v4166 = vadd.f32 %v4165, %v4103
        %v4167 = vadd.f32 %v4166, %v4104
        %v4168 = vadd.f32 %v4167, %v4105
        %v4169 = vadd.f32 %v4168, %v4106
        %v4170 = vadd.f32 %v4169, %v4107
        %v4171 = vadd.f32 %v4170, %v4108
        %v4172 = vadd.f32 %v4171, %v4109
        %v4173 = vadd.f32 %v4172, %v4110
        %v4174 = vadd.f32 %v4173, %v4111
        %v4175 = vadd.f32 %v4174, %v4112
        %v4176 = vadd.f32 %v4175, %v4113
        %v4177 = vadd.f32 %v4176, %v4114
        %v4178 = vadd.f32 %v4177, %v4115
        %v4179 = vadd.f32 %v4178, %v4116
        %v4180 = vadd.f32 %v4179, %v4117
        %v4181 = vadd.f32 %v4180, %v4118
        %v4182 = vadd.f32 %v4181, %v4119
        %v4183 = vadd.f32 %v4182, %v4120
        %v4184 = vadd.f32 %v4183, %v4121
        %v4185 = vadd.f32 %v4184, %v4122
        %v4186 = vadd.f32 %v4185, %v4123
        %v4187 = vadd.f32 %v4186, %v4124
        %v4188 = vadd.f32 %v4187, %v4125
        %v4189 = vadd.f32 %v4188, %v4126
        %v4190 = vadd.f32 %v4189, %v4127
        %v4191 = vadd.f32 %v4190, %v4128
        %v4192 = vadd.f32 %v4191, %v4129
        %v4193 = vadd.f32 %v4192, %v4130
        %v4194 = vadd.f32 %v4193, %v4131
        %v4195 = vadd.f32 %v4194, %v4132
        %v4196 = vadd.f32 %v4195, %v4133
        %v4197 = vadd.f32 %v4196, %v4134
        %v4198 = vadd.f32 %v4197, %v4135
        %v4199 = vadd.f32 %v4198, %v4136
        %v4200 = vadd.f32 %v4199, %v4137
        %v4201 = vadd.f32 %v4200, %v4138
        %v4202 = vadd.f32 %v4201, %v4139
        %v4203 = vadd.f32 %v4202, %v4140
        %v4204 = vadd.f32 %v4203, %v4141
        %v4205 = vadd.f32 %v4204, %v4142
        %v4206 = vadd.f32 %v4205, %v4143
        %v4207 = vadd.f32 %v4206, %v4144
        %v4208 = vadd.f32 %v4207, %v4145
        %v4209 = vadd.f32 %v4208, %v4146
        %v4210 = vadd.f32 %v4209, %v4147
        %v4211 = vadd.f32 %v4210, %v4148
        %v4212 = vadd.f32 %v4211, %v4149
        %v4213 = vadd.f32 %v4212, %v4150
        %v4214 = vadd.f32 %v4213, %v4151
        %v4215 = vadd.f32 %v4214, %v4152
        %v4216 = vadd.f32 %v4215, %v4153
        %v4217 = vadd.f32 %v4216, %v4154
        %v4218 = vrot.slane %v4217, 4
        %v4219 = vadd.f32 %v4217, %v4218
        %v4220 = vrot.slane %v4219, 2
        %v4221 = vadd.f32 %v4219, %v4220
        %v4222 = vrot.slane %v4221, 1
        %v4223 = vadd.f32 %v4221, %v4222
        %v4224 = vmul.f32 %v4223, 0.001953125
        %v4225 = vsub.f32 %v4091, %v4224
        %v4226 = vsub.f32 %v4092, %v4224
        %v4227 = vsub.f32 %v4093, %v4224
        %v4228 = vsub.f32 %v4094, %v4224
        %v4229 = vsub.f32 %v4095, %v4224
        %v4230 = vsub.f32 %v4096, %v4224
        %v4231 = vsub.f32 %v4097, %v4224
        %v4232 = vsub.f32 %v4098, %v4224
        %v4233 = vsub.f32 %v4099, %v4224
        %v4234 = vsub.f32 %v4100, %v4224
        %v4235 = vsub.f32 %v4101, %v4224
        %v4236 = vsub.f32 %v4102, %v4224
        %v4237 = vsub.f32 %v4103, %v4224
        %v4238 = vsub.f32 %v4104, %v4224
        %v4239 = vsub.f32 %v4105, %v4224
        %v4240 = vsub.f32 %v4106, %v4224
        %v4241 = vsub.f32 %v4107, %v4224
        %v4242 = vsub.f32 %v4108, %v4224
        %v4243 = vsub.f32 %v4109, %v4224
        %v4244 = vsub.f32 %v4110, %v4224
        %v4245 = vsub.f32 %v4111, %v4224
        %v4246 = vsub.f32 %v4112, %v4224
        %v4247 = vsub.f32 %v4113, %v4224
        %v4248 = vsub.f32 %v4114, %v4224
        %v4249 = vsub.f32 %v4115, %v4224
        %v4250 = vsub.f32 %v4116, %v4224
        %v4251 = vsub.f32 %v4117, %v4224
        %v4252 = vsub.f32 %v4118, %v4224
        %v4253 = vsub.f32 %v4119, %v4224
        %v4254 = vsub.f32 %v4120, %v4224
        %v4255 = vsub.f32 %v4121, %v4224
        %v4256 = vsub.f32 %v4122, %v4224
        %v4257 = vsub.f32 %v4123, %v4224
        %v4258 = vsub.f32 %v4124, %v4224
        %v4259 = vsub.f32 %v4125, %v4224
        %v4260 = vsub.f32 %v4126, %v4224
        %v4261 = vsub.f32 %v4127, %v4224
        %v4262 = vsub.f32 %v4128, %v4224
        %v4263 = vsub.f32 %v4129, %v4224
        %v4264 = vsub.f32 %v4130, %v4224
        %v4265 = vsub.f32 %v4131, %v4224
        %v4266 = vsub.f32 %v4132, %v4224
        %v4267 = vsub.f32 %v4133, %v4224
        %v4268 = vsub.f32 %v4134, %v4224
        %v4269 = vsub.f32 %v4135, %v4224
        %v4270 = vsub.f32 %v4136, %v4224
        %v4271 = vsub.f32 %v4137, %v4224
        %v4272 = vsub.f32 %v4138, %v4224
        %v4273 = vsub.f32 %v4139, %v4224
        %v4274 = vsub.f32 %v4140, %v4224
        %v4275 = vsub.f32 %v4141, %v4224
        %v4276 = vsub.f32 %v4142, %v4224
        %v4277 = vsub.f32 %v4143, %v4224
        %v4278 = vsub.f32 %v4144, %v4224
        %v4279 = vsub.f32 %v4145, %v4224
        %v4280 = vsub.f32 %v4146, %v4224
        %v4281 = vsub.f32 %v4147, %v4224
        %v4282 = vsub.f32 %v4148, %v4224
        %v4283 = vsub.f32 %v4149, %v4224
        %v4284 = vsub.f32 %v4150, %v4224
        %v4285 = vsub.f32 %v4151, %v4224
        %v4286 = vsub.f32 %v4152, %v4224
        %v4287 = vsub.f32 %v4153, %v4224
        %v4288 = vsub.f32 %v4154, %v4224
        %v4289 = vmul.f32 %v4225, %v4225
        %v4290 = vmul.f32 %v4226, %v4226
        %v4291 = vmul.f32 %v4227, %v4227
        %v4292 = vmul.f32 %v4228, %v4228
        %v4293 = vmul.f32 %v4229, %v4229
        %v4294 = vmul.f32 %v4230, %v4230
        %v4295 = vmul.f32 %v4231, %v4231
        %v4296 = vmul.f32 %v4232, %v4232
        %v4297 = vmul.f32 %v4233, %v4233
        %v4298 = vmul.f32 %v4234, %v4234
        %v4299 = vmul.f32 %v4235, %v4235
        %v4300 = vmul.f32 %v4236, %v4236
        %v4301 = vmul.f32 %v4237, %v4237
        %v4302 = vmul.f32 %v4238, %v4238
        %v4303 = vmul.f32 %v4239, %v4239
        %v4304 = vmul.f32 %v4240, %v4240
        %v4305 = vmul.f32 %v4241, %v4241
        %v4306 = vmul.f32 %v4242, %v4242
        %v4307 = vmul.f32 %v4243, %v4243
        %v4308 = vmul.f32 %v4244, %v4244
        %v4309 = vmul.f32 %v4245, %v4245
        %v4310 = vmul.f32 %v4246, %v4246
        %v4311 = vmul.f32 %v4247, %v4247
        %v4312 = vmul.f32 %v4248, %v4248
        %v4313 = vmul.f32 %v4249, %v4249
        %v4314 = vmul.f32 %v4250, %v4250
        %v4315 = vmul.f32 %v4251, %v4251
        %v4316 = vmul.f32 %v4252, %v4252
        %v4317 = vmul.f32 %v4253, %v4253
        %v4318 = vmul.f32 %v4254, %v4254
        %v4319 = vmul.f32 %v4255, %v4255
        %v4320 = vmul.f32 %v4256, %v4256
        %v4321 = vmul.f32 %v4257, %v4257
        %v4322 = vmul.f32 %v4258, %v4258
        %v4323 = vmul.f32 %v4259, %v4259
        %v4324 = vmul.f32 %v4260, %v4260
        %v4325 = vmul.f32 %v4261, %v4261
        %v4326 = vmul.f32 %v4262, %v4262
        %v4327 = vmul.f32 %v4263, %v4263
        %v4328 = vmul.f32 %v4264, %v4264
        %v4329 = vmul.f32 %v4265, %v4265
        %v4330 = vmul.f32 %v4266, %v4266
        %v4331 = vmul.f32 %v4267, %v4267
        %v4332 = vmul.f32 %v4268, %v4268
        %v4333 = vmul.f32 %v4269, %v4269
        %v4334 = vmul.f32 %v4270, %v4270
        %v4335 = vmul.f32 %v4271, %v4271
        %v4336 = vmul.f32 %v4272, %v4272
        %v4337 = vmul.f32 %v4273, %v4273
        %v4338 = vmul.f32 %v4274, %v4274
        %v4339 = vmul.f32 %v4275, %v4275
        %v4340 = vmul.f32 %v4276, %v4276
        %v4341 = vmul.f32 %v4277, %v4277
        %v4342 = vmul.f32 %v4278, %v4278
        %v4343 = vmul.f32 %v4279, %v4279
        %v4344 = vmul.f32 %v4280, %v4280
        %v4345 = vmul.f32 %v4281, %v4281
        %v4346 = vmul.f32 %v4282, %v4282
        %v4347 = vmul.f32 %v4283, %v4283
        %v4348 = vmul.f32 %v4284, %v4284
        %v4349 = vmul.f32 %v4285, %v4285
        %v4350 = vmul.f32 %v4286, %v4286
        %v4351 = vmul.f32 %v4287, %v4287
        %v4352 = vmul.f32 %v4288, %v4288
        %v4353 = vadd.f32 %v4289, %v4290
        %v4354 = vadd.f32 %v4353, %v4291
        %v4355 = vadd.f32 %v4354, %v4292
        %v4356 = vadd.f32 %v4355, %v4293
        %v4357 = vadd.f32 %v4356, %v4294
        %v4358 = vadd.f32 %v4357, %v4295
        %v4359 = vadd.f32 %v4358, %v4296
        %v4360 = vadd.f32 %v4359, %v4297
        %v4361 = vadd.f32 %v4360, %v4298
        %v4362 = vadd.f32 %v4361, %v4299
        %v4363 = vadd.f32 %v4362, %v4300
        %v4364 = vadd.f32 %v4363, %v4301
        %v4365 = vadd.f32 %v4364, %v4302
        %v4366 = vadd.f32 %v4365, %v4303
        %v4367 = vadd.f32 %v4366, %v4304
        %v4368 = vadd.f32 %v4367, %v4305
        %v4369 = vadd.f32 %v4368, %v4306
        %v4370 = vadd.f32 %v4369, %v4307
        %v4371 = vadd.f32 %v4370, %v4308
        %v4372 = vadd.f32 %v4371, %v4309
        %v4373 = vadd.f32 %v4372, %v4310
        %v4374 = vadd.f32 %v4373, %v4311
        %v4375 = vadd.f32 %v4374, %v4312
        %v4376 = vadd.f32 %v4375, %v4313
        %v4377 = vadd.f32 %v4376, %v4314
        %v4378 = vadd.f32 %v4377, %v4315
        %v4379 = vadd.f32 %v4378, %v4316
        %v4380 = vadd.f32 %v4379, %v4317
        %v4381 = vadd.f32 %v4380, %v4318
        %v4382 = vadd.f32 %v4381, %v4319
        %v4383 = vadd.f32 %v4382, %v4320
        %v4384 = vadd.f32 %v4383, %v4321
        %v4385 = vadd.f32 %v4384, %v4322
        %v4386 = vadd.f32 %v4385, %v4323
        %v4387 = vadd.f32 %v4386, %v4324
        %v4388 = vadd.f32 %v4387, %v4325
        %v4389 = vadd.f32 %v4388, %v4326
        %v4390 = vadd.f32 %v4389, %v4327
        %v4391 = vadd.f32 %v4390, %v4328
        %v4392 = vadd.f32 %v4391, %v4329
        %v4393 = vadd.f32 %v4392, %v4330
        %v4394 = vadd.f32 %v4393, %v4331
        %v4395 = vadd.f32 %v4394, %v4332
        %v4396 = vadd.f32 %v4395, %v4333
        %v4397 = vadd.f32 %v4396, %v4334
        %v4398 = vadd.f32 %v4397, %v4335
        %v4399 = vadd.f32 %v4398, %v4336
        %v4400 = vadd.f32 %v4399, %v4337
        %v4401 = vadd.f32 %v4400, %v4338
        %v4402 = vadd.f32 %v4401, %v4339
        %v4403 = vadd.f32 %v4402, %v4340
        %v4404 = vadd.f32 %v4403, %v4341
        %v4405 = vadd.f32 %v4404, %v4342
        %v4406 = vadd.f32 %v4405, %v4343
        %v4407 = vadd.f32 %v4406, %v4344
        %v4408 = vadd.f32 %v4407, %v4345
        %v4409 = vadd.f32 %v4408, %v4346
        %v4410 = vadd.f32 %v4409, %v4347
        %v4411 = vadd.f32 %v4410, %v4348
        %v4412 = vadd.f32 %v4411, %v4349
        %v4413 = vadd.f32 %v4412, %v4350
        %v4414 = vadd.f32 %v4413, %v4351
        %v4415 = vadd.f32 %v4414, %v4352
        %v4416 = vrot.slane %v4415, 4
        %v4417 = vadd.f32 %v4415, %v4416
        %v4418 = vrot.slane %v4417, 2
        %v4419 = vadd.f32 %v4417, %v4418
        %v4420 = vrot.slane %v4419, 1
        %v4421 = vadd.f32 %v4419, %v4420
        %v4422 = vmul.f32 %v4421, 0.001953125
        %v4423 = vadd.f32 %v4422, 1e-05
        %v4424 = vrsqrt.pop %v4423
        %v4425 = vmul.f32 %v4225, %v4424
        %v4426 = vmul.f32 %v4226, %v4424
        %v4427 = vmul.f32 %v4227, %v4424
        %v4428 = vmul.f32 %v4228, %v4424
        %v4429 = vmul.f32 %v4229, %v4424
        %v4430 = vmul.f32 %v4230, %v4424
        %v4431 = vmul.f32 %v4231, %v4424
        %v4432 = vmul.f32 %v4232, %v4424
        %v4433 = vmul.f32 %v4233, %v4424
        %v4434 = vmul.f32 %v4234, %v4424
        %v4435 = vmul.f32 %v4235, %v4424
        %v4436 = vmul.f32 %v4236, %v4424
        %v4437 = vmul.f32 %v4237, %v4424
        %v4438 = vmul.f32 %v4238, %v4424
        %v4439 = vmul.f32 %v4239, %v4424
        %v4440 = vmul.f32 %v4240, %v4424
        %v4441 = vmul.f32 %v4241, %v4424
        %v4442 = vmul.f32 %v4242, %v4424
        %v4443 = vmul.f32 %v4243, %v4424
        %v4444 = vmul.f32 %v4244, %v4424
        %v4445 = vmul.f32 %v4245, %v4424
        %v4446 = vmul.f32 %v4246, %v4424
        %v4447 = vmul.f32 %v4247, %v4424
        %v4448 = vmul.f32 %v4248, %v4424
        %v4449 = vmul.f32 %v4249, %v4424
        %v4450 = vmul.f32 %v4250, %v4424
        %v4451 = vmul.f32 %v4251, %v4424
        %v4452 = vmul.f32 %v4252, %v4424
        %v4453 = vmul.f32 %v4253, %v4424
        %v4454 = vmul.f32 %v4254, %v4424
        %v4455 = vmul.f32 %v4255, %v4424
        %v4456 = vmul.f32 %v4256, %v4424
        %v4457 = vmul.f32 %v4257, %v4424
        %v4458 = vmul.f32 %v4258, %v4424
        %v4459 = vmul.f32 %v4259, %v4424
        %v4460 = vmul.f32 %v4260, %v4424
        %v4461 = vmul.f32 %v4261, %v4424
        %v4462 = vmul.f32 %v4262, %v4424
        %v4463 = vmul.f32 %v4263, %v4424
        %v4464 = vmul.f32 %v4264, %v4424
        %v4465 = vmul.f32 %v4265, %v4424
        %v4466 = vmul.f32 %v4266, %v4424
        %v4467 = vmul.f32 %v4267, %v4424
        %v4468 = vmul.f32 %v4268, %v4424
        %v4469 = vmul.f32 %v4269, %v4424
        %v4470 = vmul.f32 %v4270, %v4424
        %v4471 = vmul.f32 %v4271, %v4424
        %v4472 = vmul.f32 %v4272, %v4424
        %v4473 = vmul.f32 %v4273, %v4424
        %v4474 = vmul.f32 %v4274, %v4424
        %v4475 = vmul.f32 %v4275, %v4424
        %v4476 = vmul.f32 %v4276, %v4424
        %v4477 = vmul.f32 %v4277, %v4424
        %v4478 = vmul.f32 %v4278, %v4424
        %v4479 = vmul.f32 %v4279, %v4424
        %v4480 = vmul.f32 %v4280, %v4424
        %v4481 = vmul.f32 %v4281, %v4424
        %v4482 = vmul.f32 %v4282, %v4424
        %v4483 = vmul.f32 %v4283, %v4424
        %v4484 = vmul.f32 %v4284, %v4424
        %v4485 = vmul.f32 %v4285, %v4424
        %v4486 = vmul.f32 %v4286, %v4424
        %v4487 = vmul.f32 %v4287, %v4424
        %v4488 = vmul.f32 %v4288, %v4424
        %v4490 = vlaneseq
        %v4491 = vshrl.u32 %v4490, 7
        %v4492 = vsub.s32 0, %v4491
        %v4493 = vrot.slane %v828, %v4492
        %v4495 = vmul.f32 %v4425, %v4493
        %v4496 = vmul.f32 %v4426, %v4493
        %v4497 = vmul.f32 %v4427, %v4493
        %v4498 = vmul.f32 %v4428, %v4493
        %v4499 = vmul.f32 %v4429, %v4493
        %v4500 = vmul.f32 %v4430, %v4493
        %v4501 = vmul.f32 %v4431, %v4493
        %v4502 = vmul.f32 %v4432, %v4493
        %v4503 = vmul.f32 %v4433, %v4493
        %v4504 = vmul.f32 %v4434, %v4493
        %v4505 = vmul.f32 %v4435, %v4493
        %v4506 = vmul.f32 %v4436, %v4493
        %v4507 = vmul.f32 %v4437, %v4493
        %v4508 = vmul.f32 %v4438, %v4493
        %v4509 = vmul.f32 %v4439, %v4493
        %v4510 = vmul.f32 %v4440, %v4493
        %v4511 = vmul.f32 %v4441, %v4493
        %v4512 = vmul.f32 %v4442, %v4493
        %v4513 = vmul.f32 %v4443, %v4493
        %v4514 = vmul.f32 %v4444, %v4493
        %v4515 = vmul.f32 %v4445, %v4493
        %v4516 = vmul.f32 %v4446, %v4493
        %v4517 = vmul.f32 %v4447, %v4493
        %v4518 = vmul.f32 %v4448, %v4493
        %v4519 = vmul.f32 %v4449, %v4493
        %v4520 = vmul.f32 %v4450, %v4493
        %v4521 = vmul.f32 %v4451, %v4493
        %v4522 = vmul.f32 %v4452, %v4493
        %v4523 = vmul.f32 %v4453, %v4493
        %v4524 = vmul.f32 %v4454, %v4493
        %v4525 = vmul.f32 %v4455, %v4493
        %v4526 = vmul.f32 %v4456, %v4493
        %v4527 = vmul.f32 %v4457, %v4493
        %v4528 = vmul.f32 %v4458, %v4493
        %v4529 = vmul.f32 %v4459, %v4493
        %v4530 = vmul.f32 %v4460, %v4493
        %v4531 = vmul.f32 %v4461, %v4493
        %v4532 = vmul.f32 %v4462, %v4493
        %v4533 = vmul.f32 %v4463, %v4493
        %v4534 = vmul.f32 %v4464, %v4493
        %v4535 = vmul.f32 %v4465, %v4493
        %v4536 = vmul.f32 %v4466, %v4493
        %v4537 = vmul.f32 %v4467, %v4493
        %v4538 = vmul.f32 %v4468, %v4493
        %v4539 = vmul.f32 %v4469, %v4493
        %v4540 = vmul.f32 %v4470, %v4493
        %v4541 = vmul.f32 %v4471, %v4493
        %v4542 = vmul.f32 %v4472, %v4493
        %v4543 = vmul.f32 %v4473, %v4493
        %v4544 = vmul.f32 %v4474, %v4493
        %v4545 = vmul.f32 %v4475, %v4493
        %v4546 = vmul.f32 %v4476, %v4493
        %v4547 = vmul.f32 %v4477, %v4493
        %v4548 = vmul.f32 %v4478, %v4493
        %v4549 = vmul.f32 %v4479, %v4493
        %v4550 = vmul.f32 %v4480, %v4493
        %v4551 = vmul.f32 %v4481, %v4493
        %v4552 = vmul.f32 %v4482, %v4493
        %v4553 = vmul.f32 %v4483, %v4493
        %v4554 = vmul.f32 %v4484, %v4493
        %v4555 = vmul.f32 %v4485, %v4493
        %v4556 = vmul.f32 %v4486, %v4493
        %v4557 = vmul.f32 %v4487, %v4493
        %v4558 = vmul.f32 %v4488, %v4493
        %v4560 = vlaneseq
        %v4561 = vshrl.u32 %v4560, 7
        %v4562 = vsub.s32 0, %v4561
        %v4563 = vrot.slane %v829, %v4562
        %v4565 = vadd.f32 %v4495, %v4563
        %v4566 = vadd.f32 %v4496, %v4563
        %v4567 = vadd.f32 %v4497, %v4563
        %v4568 = vadd.f32 %v4498, %v4563
        %v4569 = vadd.f32 %v4499, %v4563
        %v4570 = vadd.f32 %v4500, %v4563
        %v4571 = vadd.f32 %v4501, %v4563
        %v4572 = vadd.f32 %v4502, %v4563
        %v4573 = vadd.f32 %v4503, %v4563
        %v4574 = vadd.f32 %v4504, %v4563
        %v4575 = vadd.f32 %v4505, %v4563
        %v4576 = vadd.f32 %v4506, %v4563
        %v4577 = vadd.f32 %v4507, %v4563
        %v4578 = vadd.f32 %v4508, %v4563
        %v4579 = vadd.f32 %v4509, %v4563
        %v4580 = vadd.f32 %v4510, %v4563
        %v4581 = vadd.f32 %v4511, %v4563
        %v4582 = vadd.f32 %v4512, %v4563
        %v4583 = vadd.f32 %v4513, %v4563
        %v4584 = vadd.f32 %v4514, %v4563
        %v4585 = vadd.f32 %v4515, %v4563
        %v4586 = vadd.f32 %v4516, %v4563
        %v4587 = vadd.f32 %v4517, %v4563
        %v4588 = vadd.f32 %v4518, %v4563
        %v4589 = vadd.f32 %v4519, %v4563
        %v4590 = vadd.f32 %v4520, %v4563
        %v4591 = vadd.f32 %v4521, %v4563
        %v4592 = vadd.f32 %v4522, %v4563
        %v4593 = vadd.f32 %v4523, %v4563
        %v4594 = vadd.f32 %v4524, %v4563
        %v4595 = vadd.f32 %v4525, %v4563
        %v4596 = vadd.f32 %v4526, %v4563
        %v4597 = vadd.f32 %v4527, %v4563
        %v4598 = vadd.f32 %v4528, %v4563
        %v4599 = vadd.f32 %v4529, %v4563
        %v4600 = vadd.f32 %v4530, %v4563
        %v4601 = vadd.f32 %v4531, %v4563
        %v4602 = vadd.f32 %v4532, %v4563
        %v4603 = vadd.f32 %v4533, %v4563
        %v4604 = vadd.f32 %v4534, %v4563
        %v4605 = vadd.f32 %v4535, %v4563
        %v4606 = vadd.f32 %v4536, %v4563
        %v4607 = vadd.f32 %v4537, %v4563
        %v4608 = vadd.f32 %v4538, %v4563
        %v4609 = vadd.f32 %v4539, %v4563
        %v4610 = vadd.f32 %v4540, %v4563
        %v4611 = vadd.f32 %v4541, %v4563
        %v4612 = vadd.f32 %v4542, %v4563
        %v4613 = vadd.f32 %v4543, %v4563
        %v4614 = vadd.f32 %v4544, %v4563
        %v4615 = vadd.f32 %v4545, %v4563
        %v4616 = vadd.f32 %v4546, %v4563
        %v4617 = vadd.f32 %v4547, %v4563
        %v4618 = vadd.f32 %v4548, %v4563
        %v4619 = vadd.f32 %v4549, %v4563
        %v4620 = vadd.f32 %v4550, %v4563
        %v4621 = vadd.f32 %v4551, %v4563
        %v4622 = vadd.f32 %v4552, %v4563
        %v4623 = vadd.f32 %v4553, %v4563
        %v4624 = vadd.f32 %v4554, %v4563
        %v4625 = vadd.f32 %v4555, %v4563
        %v4626 = vadd.f32 %v4556, %v4563
        %v4627 = vadd.f32 %v4557, %v4563
        %v4628 = vadd.f32 %v4558, %v4563
        %p4629 = scmp.lt.s32.totalorder %s34, 1
        // Predicated region
        $region97: #{convmixer_block.1} parent=55 // pred_check
          %p4630 = pneg %p4629
        $region98: #{convmixer_block.1} parent=55 // pred_check_branch
          %4632 = sbr.rel (%p4630) target = $region100
        $region99: #{convmixer_block.1} parent=55 // pred_region
          %4633 = vst [vmem:[%s1354 + $0x1] sm:$0xff] %v4565
          %4634 = vst [vmem:[%s1354 + $0x9] sm:$0xff] %v4566
          %4635 = vst [vmem:[%s1354 + $0x19] sm:$0xff] %v4567
          %4636 = vst [vmem:[%s1354 + $0x21] sm:$0xff] %v4568
          %4637 = vst [vmem:[%s1354 + $0x31] sm:$0xff] %v4569
          %4638 = vst [vmem:[%s1354 + $0x39] sm:$0xff] %v4570
          %4639 = vst [vmem:[%s1354 + $0x49] sm:$0xff] %v4571
          %4640 = vst [vmem:[%s1354 + $0x51] sm:$0xff] %v4572
          %4641 = vst [vmem:[%s1354 + $0x61] sm:$0xff] %v4573
          %4642 = vst [vmem:[%s1354 + $0x69] sm:$0xff] %v4574
          %4643 = vst [vmem:[%s1354 + $0x79] sm:$0xff] %v4575
          %4644 = vst [vmem:[%s1354 + $0x81] sm:$0xff] %v4576
          %4645 = vst [vmem:[%s1354 + $0x91] sm:$0xff] %v4577
          %4646 = vst [vmem:[%s1354 + $0x99] sm:$0xff] %v4578
          %4647 = vst [vmem:[%s1354 + $0xa9] sm:$0xff] %v4579
          %4648 = vst [vmem:[%s1354 + $0xb1] sm:$0xff] %v4580
          %4649 = vst [vmem:[%s1354 + $0xc1] sm:$0xff] %v4581
          %4650 = vst [vmem:[%s1354 + $0xc9] sm:$0xff] %v4582
          %4651 = vst [vmem:[%s1354 + $0xd9] sm:$0xff] %v4583
          %4652 = vst [vmem:[%s1354 + $0xe1] sm:$0xff] %v4584
          %4653 = vst [vmem:[%s1354 + $0xf1] sm:$0xff] %v4585
          %4654 = vst [vmem:[%s1354 + $0xf9] sm:$0xff] %v4586
          %4655 = vst [vmem:[%s1354 + $0x109] sm:$0xff] %v4587
          %4656 = vst [vmem:[%s1354 + $0x111] sm:$0xff] %v4588
          %4657 = vst [vmem:[%s1354 + $0x121] sm:$0xff] %v4589
          %4658 = vst [vmem:[%s1354 + $0x129] sm:$0xff] %v4590
          %4659 = vst [vmem:[%s1354 + $0x139] sm:$0xff] %v4591
          %4660 = vst [vmem:[%s1354 + $0x141] sm:$0xff] %v4592
          %4661 = vst [vmem:[%s1354 + $0x151] sm:$0xff] %v4593
          %4662 = vst [vmem:[%s1354 + $0x159] sm:$0xff] %v4594
          %4663 = vst [vmem:[%s1354 + $0x169] sm:$0xff] %v4595
          %4664 = vst [vmem:[%s1354 + $0x171] sm:$0xff] %v4596
          %4665 = vst [vmem:[%s1354 + $0x1b1] sm:$0xff] %v4597
          %4666 = vst [vmem:[%s1354 + $0x1b9] sm:$0xff] %v4598
          %4667 = vst [vmem:[%s1354 + $0x1c9] sm:$0xff] %v4599
          %4668 = vst [vmem:[%s1354 + $0x1d1] sm:$0xff] %v4600
          %4669 = vst [vmem:[%s1354 + $0x1e1] sm:$0xff] %v4601
          %4670 = vst [vmem:[%s1354 + $0x1e9] sm:$0xff] %v4602
          %4671 = vst [vmem:[%s1354 + $0x1f9] sm:$0xff] %v4603
          %4672 = vst [vmem:[%s1354 + $0x201] sm:$0xff] %v4604
          %4673 = vst [vmem:[%s1354 + $0x211] sm:$0xff] %v4605
          %4674 = vst [vmem:[%s1354 + $0x219] sm:$0xff] %v4606
          %4675 = vst [vmem:[%s1354 + $0x229] sm:$0xff] %v4607
          %4676 = vst [vmem:[%s1354 + $0x231] sm:$0xff] %v4608
          %4677 = vst [vmem:[%s1354 + $0x241] sm:$0xff] %v4609
          %4678 = vst [vmem:[%s1354 + $0x249] sm:$0xff] %v4610
          %4679 = vst [vmem:[%s1354 + $0x259] sm:$0xff] %v4611
          %4680 = vst [vmem:[%s1354 + $0x261] sm:$0xff] %v4612
          %4681 = vst [vmem:[%s1354 + $0x271] sm:$0xff] %v4613
          %4682 = vst [vmem:[%s1354 + $0x279] sm:$0xff] %v4614
          %4683 = vst [vmem:[%s1354 + $0x289] sm:$0xff] %v4615
          %4684 = vst [vmem:[%s1354 + $0x291] sm:$0xff] %v4616
          %4685 = vst [vmem:[%s1354 + $0x2a1] sm:$0xff] %v4617
          %4686 = vst [vmem:[%s1354 + $0x2a9] sm:$0xff] %v4618
          %4687 = vst [vmem:[%s1354 + $0x2b9] sm:$0xff] %v4619
          %4688 = vst [vmem:[%s1354 + $0x2c1] sm:$0xff] %v4620
          %4689 = vst [vmem:[%s1354 + $0x2d1] sm:$0xff] %v4621
          %4690 = vst [vmem:[%s1354 + $0x2d9] sm:$0xff] %v4622
          %4691 = vst [vmem:[%s1354 + $0x2e9] sm:$0xff] %v4623
          %4692 = vst [vmem:[%s1354 + $0x2f1] sm:$0xff] %v4624
          %4693 = vst [vmem:[%s1354 + $0x301] sm:$0xff] %v4625
          %4694 = vst [vmem:[%s1354 + $0x309] sm:$0xff] %v4626
          %4695 = vst [vmem:[%s1354 + $0x319] sm:$0xff] %v4627
          %4696 = vst [vmem:[%s1354 + $0x321] sm:$0xff] %v4628
        $region100: #{convmixer_block.1} parent=55 // pred_fallthru
          _
        %p4697 = scmp.eq.s32.totalorder %s34, 1
        // Predicated region
        $region101: #{convmixer_block.1} parent=55 // pred_check
          %p4698 = pneg %p4697
        $region102: #{convmixer_block.1} parent=55 // pred_check_branch
          %4700 = sbr.rel (%p4698) target = $region104
        $region103: #{convmixer_block.1} parent=55 // pred_region
          %4701 = vst [vmem:[#allocation18] sm:$0xff] %v4565
          %4702 = vst [vmem:[#allocation18 + $0x8] sm:$0xff] %v4566
          %4703 = vst [vmem:[#allocation18 + $0x10] sm:$0xff] %v4567
          %4704 = vst [vmem:[#allocation18 + $0x18] sm:$0xff] %v4568
          %4705 = vst [vmem:[#allocation18 + $0x20] sm:$0xff] %v4569
          %4706 = vst [vmem:[#allocation18 + $0x28] sm:$0xff] %v4570
          %4707 = vst [vmem:[#allocation18 + $0x30] sm:$0xff] %v4571
          %4708 = vst [vmem:[#allocation18 + $0x38] sm:$0xff] %v4572
          %4709 = vst [vmem:[#allocation18 + $0x40] sm:$0xff] %v4573
          %4710 = vst [vmem:[#allocation18 + $0x48] sm:$0xff] %v4574
          %4711 = vst [vmem:[#allocation18 + $0x50] sm:$0xff] %v4575
          %4712 = vst [vmem:[#allocation18 + $0x58] sm:$0xff] %v4576
          %4713 = vst [vmem:[#allocation18 + $0x60] sm:$0xff] %v4577
          %4714 = vst [vmem:[#allocation18 + $0x68] sm:$0xff] %v4578
          %4715 = vst [vmem:[#allocation18 + $0x70] sm:$0xff] %v4579
          %4716 = vst [vmem:[#allocation18 + $0x78] sm:$0xff] %v4580
          %4717 = vst [vmem:[#allocation18 + $0x80] sm:$0xff] %v4581
          %4718 = vst [vmem:[#allocation18 + $0x88] sm:$0xff] %v4582
          %4719 = vst [vmem:[#allocation18 + $0x90] sm:$0xff] %v4583
          %4720 = vst [vmem:[#allocation18 + $0x98] sm:$0xff] %v4584
          %4721 = vst [vmem:[#allocation18 + $0xa0] sm:$0xff] %v4585
          %4722 = vst [vmem:[#allocation18 + $0xa8] sm:$0xff] %v4586
          %4723 = vst [vmem:[#allocation18 + $0xb0] sm:$0xff] %v4587
          %4724 = vst [vmem:[#allocation18 + $0xb8] sm:$0xff] %v4588
          %4725 = vst [vmem:[#allocation18 + $0xc0] sm:$0xff] %v4589
          %4726 = vst [vmem:[#allocation18 + $0xc8] sm:$0xff] %v4590
          %4727 = vst [vmem:[#allocation18 + $0xd0] sm:$0xff] %v4591
          %4728 = vst [vmem:[#allocation18 + $0xd8] sm:$0xff] %v4592
          %4729 = vst [vmem:[#allocation18 + $0xe0] sm:$0xff] %v4593
          %4730 = vst [vmem:[#allocation18 + $0xe8] sm:$0xff] %v4594
          %4731 = vst [vmem:[#allocation18 + $0xf0] sm:$0xff] %v4595
          %4732 = vst [vmem:[#allocation18 + $0xf8] sm:$0xff] %v4596
          %4733 = vst [vmem:[#allocation18 + $0x100] sm:$0xff] %v4597
          %4734 = vst [vmem:[#allocation18 + $0x108] sm:$0xff] %v4598
          %4735 = vst [vmem:[#allocation18 + $0x110] sm:$0xff] %v4599
          %4736 = vst [vmem:[#allocation18 + $0x118] sm:$0xff] %v4600
          %4737 = vst [vmem:[#allocation18 + $0x120] sm:$0xff] %v4601
          %4738 = vst [vmem:[#allocation18 + $0x128] sm:$0xff] %v4602
          %4739 = vst [vmem:[#allocation18 + $0x130] sm:$0xff] %v4603
          %4740 = vst [vmem:[#allocation18 + $0x138] sm:$0xff] %v4604
          %4741 = vst [vmem:[#allocation18 + $0x140] sm:$0xff] %v4605
          %4742 = vst [vmem:[#allocation18 + $0x148] sm:$0xff] %v4606
          %4743 = vst [vmem:[#allocation18 + $0x150] sm:$0xff] %v4607
          %4744 = vst [vmem:[#allocation18 + $0x158] sm:$0xff] %v4608
          %4745 = vst [vmem:[#allocation18 + $0x160] sm:$0xff] %v4609
          %4746 = vst [vmem:[#allocation18 + $0x168] sm:$0xff] %v4610
          %4747 = vst [vmem:[#allocation18 + $0x170] sm:$0xff] %v4611
          %4748 = vst [vmem:[#allocation18 + $0x178] sm:$0xff] %v4612
          %4749 = vst [vmem:[#allocation18 + $0x180] sm:$0xff] %v4613
          %4750 = vst [vmem:[#allocation18 + $0x188] sm:$0xff] %v4614
          %4751 = vst [vmem:[#allocation18 + $0x190] sm:$0xff] %v4615
          %4752 = vst [vmem:[#allocation18 + $0x198] sm:$0xff] %v4616
          %4753 = vst [vmem:[#allocation18 + $0x1a0] sm:$0xff] %v4617
          %4754 = vst [vmem:[#allocation18 + $0x1a8] sm:$0xff] %v4618
          %4755 = vst [vmem:[#allocation18 + $0x1b0] sm:$0xff] %v4619
          %4756 = vst [vmem:[#allocation18 + $0x1b8] sm:$0xff] %v4620
          %4757 = vst [vmem:[#allocation18 + $0x1c0] sm:$0xff] %v4621
          %4758 = vst [vmem:[#allocation18 + $0x1c8] sm:$0xff] %v4622
          %4759 = vst [vmem:[#allocation18 + $0x1d0] sm:$0xff] %v4623
          %4760 = vst [vmem:[#allocation18 + $0x1d8] sm:$0xff] %v4624
          %4761 = vst [vmem:[#allocation18 + $0x1e0] sm:$0xff] %v4625
          %4762 = vst [vmem:[#allocation18 + $0x1e8] sm:$0xff] %v4626
          %4763 = vst [vmem:[#allocation18 + $0x1f0] sm:$0xff] %v4627
          %4764 = vst [vmem:[#allocation18 + $0x1f8] sm:$0xff] %v4628
        $region104: #{convmixer_block.1} parent=55 // pred_fallthru
          _
        // Predicated region
        $region105: #{convmixer_block.1} parent=55 // pred_check
          %p4765 = pneg %p276
        $region106: #{convmixer_block.1} parent=55 // pred_check_branch
          %4767 = sbr.rel (%p4765) target = $region108
        $region107: #{convmixer_block.1} parent=55 // pred_region
          %s4769 = ssub.s32 8192, 8192
          %4770 = vsyncadd [#allocation5], %s4769
          %s4771 = sshll.u32 [#allocation18], 4
          %s4772 = int_to_ptr.vmem [resolvable:$true] %s4771
          %4777 = dma.vmem_to_hbm [thread:$0]  %s4772, 8192, %s9, [#allocation5], 128, 128, 8
        $region108: #{convmixer_block.1} parent=55 // pred_fallthru
          _
        // Predicated region
        $region109: #{convmixer_block.1} parent=55 // pred_check
          %p4778 = pneg %p276
        $region110: #{convmixer_block.1} parent=55 // pred_check_branch
          %4780 = sbr.rel (%p4778) target = $region112
        $region111: #{convmixer_block.1} parent=55 // pred_region
          %4781 = dma.done [#allocation5], 8192
        $region112: #{convmixer_block.1} parent=55 // pred_fallthru
          _
      $region56: #{convmixer_block.1} parent=5 // pred_fallthru
        _
      %p4782 = scmp.le.s32.totalorder 2, %s29
      // Predicated region
      $region113: #{convmixer_block.1} parent=5 // pred_check
        %p4783 = pneg %p4782
      $region114: #{convmixer_block.1} parent=5 // pred_check_branch
        %4785 = sbr.rel (%p4783) target = $region116
      $region115: #{convmixer_block.1} parent=5 // pred_region
        %s4786 = ssub.s32 %s29, 2
      $region116: #{convmixer_block.1} parent=5 // pred_fallthru
        _
    $region6: #{convmixer_block.1} parent=1 // loop_footer
      %s33 = sadd.s32 1, %s29
    $region7: #{convmixer_block.1} parent=1 // loop_footer_branch
      %28 = sbr.rel target = $region3
    $region8: #{convmixer_block.1} parent=1 // loop_exit
      _
    %4787 = vsyncpa [#allocation4], 1
    %s4788 = scalar_lea.sflag [#allocation4], 1
    %4789 = vsyncpa %s4788, 1
    %4790 = vsyncpa [#allocation7], 1
    %s4791 = scalar_lea.sflag [#allocation7], 1
    %4792 = vsyncpa %s4791, 1
    %4793 = vsyncpa [#allocation10], 1
    %s4794 = scalar_lea.sflag [#allocation10], 1
    %4795 = vsyncpa %s4794, 1
    %4796 = vsyncpa [#allocation13], 1
    %s4797 = scalar_lea.sflag [#allocation13], 1
    %4798 = vsyncpa %s4797, 1
    %4799 = vsyncpa [#allocation16], 1
    %s4800 = scalar_lea.sflag [#allocation16], 1
    %4801 = vsyncpa %s4800, 1
    %4802 = vsyncpa [#allocation5], 1
    %s4803 = scalar_lea.sflag [#allocation5], 1
    %4804 = vsyncpa %s4803, 1

</llo_original>
